<compile_context>
chip_gen: v7x
topology: tpu7x:2x2x1
jax: 0.10.0
libtpu: 0.0.40
codegen_flags: <defaults>
</compile_context>

<pallas_src>
import functools

import numpy as np
import jax
import jax.numpy as jnp
from jax import lax
from jax.experimental import pallas as pl
from jax.experimental.pallas import tpu as pltpu


def _trident_kernel(*refs, dilations, H, W, TB, C_p, Q, shared):
    """All three TridentBlock branches for TB batch elements (batch folded into lanes).

    refs layout (shared=True):  x, w1, w2s, b1, b2, o0, o1, o2, ypad, stk
    refs layout (shared=False): x0, x1, x2, w1, w2s, b1, b2, o0, o1, o2, ypad, stk

      x*   : (C1, N)        input, N = TB*H*W, f32
      w1   : (C_p, C1)      1x1 conv weight, BN1 scale folded, bf16
      w2s  : (C2, 9*C_p)    3x3 conv taps stacked along K (tap-major), BN2 scale folded, bf16
      b1   : (C_p, 1)       BN1 shift, f32
      b2   : (C2, 1)        BN2 shift, f32
      o*   : (C2, N)        outputs (one per dilation), f32
      ypad : (C_p, N + 2Q)  bf16 scratch holding y with margins for the shifted windows
      stk  : (9*C_p, N)     bf16 K-stacked conv2 operand
    """
    HW = H * W
    N = TB * HW
    if shared:
        x_refs = (refs[0], refs[0], refs[0])
        w1_ref, w2s_ref, b1_ref, b2_ref = refs[1:5]
        o_refs = refs[5:8]
        ypad_ref, stk_ref = refs[8:10]
    else:
        x_refs = refs[0:3]
        w1_ref, w2s_ref, b1_ref, b2_ref = refs[3:7]
        o_refs = refs[7:10]
        ypad_ref, stk_ref = refs[10:12]

    # Zero only the two small margin stripes (cheap, megacore-safe). The centre is always
    # fully rewritten and the masks below make the margins logically dead anyway.
    ypad_ref[:, :Q] = jnp.zeros((C_p, Q), jnp.bfloat16)
    ypad_ref[:, Q + N:] = jnp.zeros((C_p, Q), jnp.bfloat16)

    # Per-lane image coordinates, built once per grid step (VPU-only, no integer divide):
    # lane = b*H*W + h*W + w  ->  wpos = w, hw = h*W.
    lane = lax.broadcasted_iota(jnp.int32, (1, N), 1)
    wpos = lax.rem(lane, W)
    hw = lax.rem(lane, HW) - wpos

    w1 = w1_ref[...]
    w2s = w2s_ref[...]
    b1 = b1_ref[...]
    b2 = b2_ref[...]

    for br, d in enumerate(dilations):
        x_ref = x_refs[br]

        # conv1x1 (+ folded BN1 scale) + BN1 shift + SiLU. Shared input => compute once.
        if (not shared) or br == 0:
            y = jnp.dot(w1, x_ref[...].astype(jnp.bfloat16),
                        preferred_element_type=jnp.float32)              # (C_p, N) f32
            y = y + b1
            y = y * jax.nn.sigmoid(y)
            ypad_ref[:, Q:Q + N] = y.astype(jnp.bfloat16)                # aligned store

        # Build the K-stacked conv2 operand: 9 shifted, edge-masked copies of y.
        # Masks (not halo zeros) kill both out-of-image taps and cross-image bleed, so no
        # full-scratch re-zero is needed and each window is touched exactly once.
        for kh in range(3):
            dh = (kh - 1) * d
            if dh < 0:
                h_ok = hw >= (-dh) * W
            elif dh > 0:
                h_ok = hw < (H - dh) * W
            else:
                h_ok = None
            for kw in range(3):
                dw = (kw - 1) * d
                off = dh * W + dw
                win = ypad_ref[:, Q + off:Q + off + N]                   # (C_p, N) bf16
                if dw < 0:
                    w_ok = wpos >= (-dw)
                elif dw > 0:
                    w_ok = wpos < (W - dw)
                else:
                    w_ok = None
                if h_ok is None:
                    ok = w_ok
                elif w_ok is None:
                    ok = h_ok
                else:
                    ok = jnp.logical_and(h_ok, w_ok)
                if ok is not None:
                    win = jnp.where(ok, win, jnp.zeros_like(win))
                tap = kh * 3 + kw
                stk_ref[tap * C_p:(tap + 1) * C_p, :] = win              # aligned sublane slot

        # 3x3 dilated conv as ONE deep matmul (K = 9*C_p) with f32 accumulation,
        # then BN2 shift + residual + SiLU in f32.
        z = jnp.dot(w2s, stk_ref[...], preferred_element_type=jnp.float32)   # (C2, N)
        out = z + b2 + x_ref[...]
        out = out * jax.nn.sigmoid(out)
        o_refs[br][...] = out.astype(o_refs[br].dtype)


def _fold_bn(gamma, beta, mean, var, eps=1e-5):
    scale = gamma / jnp.sqrt(var + eps)
    shift = beta - mean * scale
    return scale, shift


def _vmem_capacity_bytes():
    try:
        return int(pltpu.get_tpu_info().vmem_capacity_bytes)
    except Exception:
        return 64 << 20   # conservative default: v7x per-TensorCore VMEM


def _pick_batch_tile(B, HW, C1, C2, C_p, n_x, vmem_cap):
    """Batch elements per grid step: as large as the per-core VMEM allows, but >=4 grid
    steps on 64-MiB parts (v7x, dual TensorCore) for load balance."""
    per_image = (n_x * C1 + 3 * C2) * HW * 4 * 2 + 10 * C_p * HW * 2   # dbl-buf f32 I/O + bf16 scratch
    budget = min(max(vmem_cap // 4, 8 << 20), 24 << 20)
    tb = int(max(1, min(B, budget // max(per_image, 1))))
    if vmem_cap <= (64 << 20) and B >= 4:
        tb = min(tb, max(1, B // 4))
    # Keep blocks lane-dense: TB | B and TB*HW a multiple of 128 (or one full-lane block).
    for t in range(tb, 0, -1):
        if B % t == 0 and ((t * HW) % 128 == 0 or t == B):
            return t
    return B   # TODO(synk): pad the batch/lane axis instead of this full-extent fallback.


def trident_block_forward(x, params, c=False, padding=(1, 2, 3), dilate=(1, 2, 3)):
    """TridentBlock.forward as one fused Pallas call. Returns [x1, x2, x3]."""
    w1, w2, bn1, bn2 = params
    for p, d in zip(padding, dilate):
        assert p == d, "residual add requires 'same' conv: padding == dilation"

    shared = c is not False
    xs = [x] if shared else list(x)
    if not shared:
        assert len(xs) == 3 and all(xb.shape == xs[0].shape for xb in xs)
    n_x = len(xs)

    B, C1, H, W = xs[0].shape
    HW = H * W
    C_ = w1.shape[0]
    C2 = w2.shape[0]
    assert C1 == C2, "residual add requires c1 == c2"

    s1, t1 = bn1
    s2, t2 = bn2

    # Pad the hidden channel dim so every tap slot of the K-stacked operand starts on a
    # bf16 sublane-tile boundary (16 rows); padded channels are exact zeros end-to-end.
    C_p = -(-C_ // 16) * 16

    # Fold BN scales into the conv weights (bf16 MXU operands); keep shifts in f32.
    w1f = jnp.zeros((C_p, C1), jnp.float32).at[:C_].set(w1[:, :, 0, 0] * s1[:, None])
    w1f = w1f.astype(jnp.bfloat16)                                          # (C_p, C1)
    w2f = jnp.zeros((C2, C_p, 3, 3), jnp.float32).at[:, :C_].set(
        w2 * s2[:, None, None, None])
    w2s = jnp.transpose(w2f, (0, 2, 3, 1)).reshape(C2, 9 * C_p).astype(jnp.bfloat16)
    b1 = jnp.zeros((C_p, 1), jnp.float32).at[:C_, 0].set(t1)
    b2 = t2.reshape(C2, 1).astype(jnp.float32)

    # Channel-major with batch folded into lanes: (C, B*H*W) -> fully lane-dense blocks.
    x_flat = [jnp.transpose(xb, (1, 0, 2, 3)).reshape(C1, B * HW).astype(jnp.float32)
              for xb in xs]

    vmem_cap = _vmem_capacity_bytes()
    TB = _pick_batch_tile(B, HW, C1, C2, C_p, n_x, vmem_cap)
    N = TB * HW
    grid = (B // TB,)

    d_max = max(dilate)
    Pmax = d_max * (W + 1)                 # largest |lane offset| of any tap
    Q = -(-Pmax // 128) * 128              # lane-aligned centre offset of the shift scratch

    kernel = functools.partial(_trident_kernel, dilations=tuple(dilate),
                               H=H, W=W, TB=TB, C_p=C_p, Q=Q, shared=shared)

    x_spec = pl.BlockSpec((C1, N), lambda i: (0, i))
    in_specs = [x_spec] * n_x + [
        pl.BlockSpec((C_p, C1), lambda i: (0, 0)),          # conv1 weight (BN1-scaled, bf16)
        pl.BlockSpec((C2, 9 * C_p), lambda i: (0, 0)),       # conv2 K-stacked taps (bf16)
        pl.BlockSpec((C_p, 1), lambda i: (0, 0)),            # BN1 shift
        pl.BlockSpec((C2, 1), lambda i: (0, 0)),             # BN2 shift
    ]
    out_specs = [pl.BlockSpec((C2, N), lambda i: (0, i)) for _ in range(3)]
    out_shape = tuple(jax.ShapeDtypeStruct((C2, B * HW), jnp.float32) for _ in range(3))

    # Generation-aware VMEM budget (v7x has only 64 MiB per TensorCore).
    block_bytes = (n_x * C1 + 3 * C2) * N * 4
    weight_bytes = (C_p * C1 + C2 * 9 * C_p) * 2 + (C_p + C2) * 4
    scratch_bytes = (C_p * (N + 2 * Q) + 9 * C_p * N) * 2
    vmem_est = 2 * (block_bytes + weight_bytes) + scratch_bytes + (2 << 20)
    vmem_limit = int(min(max(32 << 20, vmem_est + (8 << 20)), int(0.75 * vmem_cap)))
    vmem_limit = max(vmem_limit, 16 << 20)

    flops = 2 * B * HW * (n_x * C1 * C_p + 3 * 9 * C_p * C2)
    transcendentals = B * HW * (n_x * C_p + 3 * C2)
    bytes_accessed = 4 * B * HW * (n_x * C1 + 3 * C2) + 2 * (C_p * C1 + 9 * C_p * C2)

    outs = pl.pallas_call(
        kernel,
        out_shape=out_shape,
        grid=grid,
        in_specs=in_specs,
        out_specs=out_specs,
        scratch_shapes=[
            pltpu.VMEM((C_p, N + 2 * Q), jnp.bfloat16),      # y + margins (shift source)
            pltpu.VMEM((9 * C_p, N), jnp.bfloat16),          # K-stacked conv2 operand
        ],
        compiler_params=pltpu.CompilerParams(
            dimension_semantics=("parallel",),
            vmem_limit_bytes=vmem_limit),
        cost_estimate=pl.CostEstimate(flops=flops,
                                      transcendentals=transcendentals,
                                      bytes_accessed=bytes_accessed),
    )(*x_flat, w1f, w2s, b1, b2)

    return [o.reshape(C2, B, HW).transpose(1, 0, 2).reshape(B, C2, H, W) for o in outs]


def trident_block_ref(x, params, c=False, padding=(1, 2, 3), dilate=(1, 2, 3)):
    """Pure-JAX reference matching the PyTorch forward (inference-mode BN)."""
    w1, w2, (s1, t1), (s2, t2) = params
    xs = [x, x, x] if c is not False else list(x)

    def branch(xb, pad, dil):
        y = lax.conv_general_dilated(
            xb, w1, window_strides=(1, 1), padding="VALID",
            dimension_numbers=("NCHW", "OIHW", "NCHW"),
            precision=lax.Precision.HIGHEST)
        y = y * s1[None, :, None, None] + t1[None, :, None, None]
        y = y * jax.nn.sigmoid(y)
        z = lax.conv_general_dilated(
            y, w2, window_strides=(1, 1), padding=((pad, pad), (pad, pad)),
            rhs_dilation=(dil, dil),
            dimension_numbers=("NCHW", "OIHW", "NCHW"),
            precision=lax.Precision.HIGHEST)
        z = z * s2[None, :, None, None] + t2[None, :, None, None]
        z = z + xb
        return z * jax.nn.sigmoid(z)

    return [branch(xs[i], padding[i], dilate[i]) for i in range(3)]


if __name__ == "__main__":
    B, C1, C2, H, W = 4, 64, 64, 16, 16
    e = 0.5
    C_ = int(C2 * e)                      # 32
    padding = (1, 2, 3)
    dilate = (1, 2, 3)

    ks = jax.random.split(jax.random.PRNGKey(0), 16)

    # TridentBlock default c=False consumes a list of three tensors.
    xs = [jax.random.normal(ks[i], (B, C1, H, W), dtype=jnp.float32) for i in range(3)]

    # Shared conv weights (kaiming-ish scale); module default bias=False -> no conv bias.
    w1 = jax.random.normal(ks[3], (C_, C1, 1, 1), dtype=jnp.float32) * (2.0 / C1) ** 0.5
    w2 = jax.random.normal(ks[4], (C2, C_, 3, 3), dtype=jnp.float32) * (2.0 / (9 * C_)) ** 0.5

    # BatchNorm (inference mode) parameters, folded to per-channel scale/shift.
    g1 = 1.0 + 0.1 * jax.random.normal(ks[5], (C_,), dtype=jnp.float32)
    be1 = 0.1 * jax.random.normal(ks[6], (C_,), dtype=jnp.float32)
    m1 = 0.1 * jax.random.normal(ks[7], (C_,), dtype=jnp.float32)
    v1 = jnp.abs(1.0 + 0.1 * jax.random.normal(ks[8], (C_,), dtype=jnp.float32))
    g2 = 1.0 + 0.1 * jax.random.normal(ks[9], (C2,), dtype=jnp.float32)
    be2 = 0.1 * jax.random.normal(ks[10], (C2,), dtype=jnp.float32)
    m2 = 0.1 * jax.random.normal(ks[11], (C2,), dtype=jnp.float32)
    v2 = jnp.abs(1.0 + 0.1 * jax.random.normal(ks[12], (C2,), dtype=jnp.float32))

    bn1 = _fold_bn(g1, be1, m1, v1)
    bn2 = _fold_bn(g2, be2, m2, v2)
    params = (w1, w2, bn1, bn2)

    # bf16 MXU operands with f32 accumulation -> tolerances loosened vs the f32 reference.
    RTOL, ATOL = 2e-2, 5e-2

    # c=False path (module default): a list of three inputs, one per branch.
    outs = jax.block_until_ready(
        trident_block_forward(xs, params, c=False, padding=padding, dilate=dilate))
    refs = trident_block_ref(xs, params, c=False, padding=padding, dilate=dilate)
    for o, r in zip(outs, refs):
        assert o.shape == (B, C2, H, W)
        np.testing.assert_allclose(np.asarray(o), np.asarray(r), rtol=RTOL, atol=ATOL)

    # c truthy path: one input shared by all branches (conv1 hoisted inside the kernel).
    outs_c = jax.block_until_ready(
        trident_block_forward(xs[0], params, c=True, padding=padding, dilate=dilate))
    refs_c = trident_block_ref(xs[0], params, c=True, padding=padding, dilate=dilate)
    for o, r in zip(outs_c, refs_c):
        assert o.shape == (B, C2, H, W)
        np.testing.assert_allclose(np.asarray(o), np.asarray(r), rtol=RTOL, atol=ATOL)

    print("KERNEL_OK")
</pallas_src>

<mosaic_0001>
module attributes {stable_mosaic.version = 11 : i64} {
  func.func @_trident_kernel(%arg0: i32, %arg1: memref<64x256xf32, #tpu.memory_space<vmem>>, %arg2: memref<64x256xf32, #tpu.memory_space<vmem>>, %arg3: memref<64x256xf32, #tpu.memory_space<vmem>>, %arg4: memref<32x64xbf16, #tpu.memory_space<vmem>>, %arg5: memref<64x288xbf16, #tpu.memory_space<vmem>>, %arg6: memref<32x1xf32, #tpu.memory_space<vmem>>, %arg7: memref<64x1xf32, #tpu.memory_space<vmem>>, %arg8: memref<64x256xf32, #tpu.memory_space<vmem>>, %arg9: memref<64x256xf32, #tpu.memory_space<vmem>>, %arg10: memref<64x256xf32, #tpu.memory_space<vmem>>, %arg11: memref<32x512xbf16, #tpu.memory_space<vmem>>, %arg12: memref<288x256xbf16, #tpu.memory_space<vmem>>) attributes {dimension_semantics = [#tpu.dimension_semantics<parallel>], iteration_bounds = array<i64: 4>, scalar_prefetch = 0 : i64, scratch_operands = 2 : i64, tpu.core_type = #tpu.core_type<tc>, window_params = [{transform_indices = @transform_0, window_bounds = array<i64: 64, 256>}, {transform_indices = @transform_1, window_bounds = array<i64: 64, 256>}, {transform_indices = @transform_2, window_bounds = array<i64: 64, 256>}, {pipeline_mode = #tpu.pipeline_mode<synchronous>, transform_indices = @transform_3, window_bounds = array<i64: 32, 64>}, {pipeline_mode = #tpu.pipeline_mode<synchronous>, transform_indices = @transform_4, window_bounds = array<i64: 64, 288>}, {pipeline_mode = #tpu.pipeline_mode<synchronous>, transform_indices = @transform_5, window_bounds = array<i64: 32, 1>}, {pipeline_mode = #tpu.pipeline_mode<synchronous>, transform_indices = @transform_6, window_bounds = array<i64: 64, 1>}, {transform_indices = @transform_7, window_bounds = array<i64: 64, 256>}, {transform_indices = @transform_8, window_bounds = array<i64: 64, 256>}, {transform_indices = @transform_9, window_bounds = array<i64: 64, 256>}]} {
    %cst = arith.constant 0.000000e+00 : bf16
    %0 = vector.broadcast %cst : bf16 to vector<32x128xbf16>
    %c0 = arith.constant 0 : index
    %c0_0 = arith.constant 0 : index
    %1 = vector.load %arg11[%c0, %c0_0] : memref<32x512xbf16, #tpu.memory_space<vmem>>, vector<32x128xbf16>
    tpu.vector_store %arg11[%c0, %c0_0], %0 {strides = array<i32>} : memref<32x512xbf16, #tpu.memory_space<vmem>>, vector<32x128xbf16>,
    %cst_1 = arith.constant 0.000000e+00 : bf16
    %2 = vector.broadcast %cst_1 : bf16 to vector<32x128xbf16>
    %c0_2 = arith.constant 0 : index
    %c384 = arith.constant 384 : index
    %3 = vector.load %arg11[%c0_2, %c384] : memref<32x512xbf16, #tpu.memory_space<vmem>>, vector<32x128xbf16>
    tpu.vector_store %arg11[%c0_2, %c384], %2 {strides = array<i32>} : memref<32x512xbf16, #tpu.memory_space<vmem>>, vector<32x128xbf16>,
    %4 = tpu.iota {dimensions = array<i32: 1>} : vector<1x256xi32>
    %c16_i32 = arith.constant 16 : i32
    %5 = vector.broadcast %c16_i32 : i32 to vector<1x256xi32>
    %6 = arith.remsi %4, %5 : vector<1x256xi32>
    %c256_i32 = arith.constant 256 : i32
    %7 = vector.broadcast %c256_i32 : i32 to vector<1x256xi32>
    %8 = arith.remsi %4, %7 : vector<1x256xi32>
    %9 = arith.subi %8, %6 : vector<1x256xi32>
    %c0_3 = arith.constant 0 : index
    %c0_4 = arith.constant 0 : index
    %10 = vector.load %arg4[%c0_3, %c0_4] : memref<32x64xbf16, #tpu.memory_space<vmem>>, vector<32x64xbf16>
    %c0_5 = arith.constant 0 : index
    %c0_6 = arith.constant 0 : index
    %11 = vector.load %arg5[%c0_5, %c0_6] : memref<64x288xbf16, #tpu.memory_space<vmem>>, vector<64x288xbf16>
    %c0_7 = arith.constant 0 : index
    %c0_8 = arith.constant 0 : index
    %12 = vector.load %arg6[%c0_7, %c0_8] : memref<32x1xf32, #tpu.memory_space<vmem>>, vector<32x1xf32>
    %c0_9 = arith.constant 0 : index
    %c0_10 = arith.constant 0 : index
    %13 = vector.load %arg7[%c0_9, %c0_10] : memref<64x1xf32, #tpu.memory_space<vmem>>, vector<64x1xf32>
    %c0_11 = arith.constant 0 : index
    %c0_12 = arith.constant 0 : index
    %14 = vector.load %arg1[%c0_11, %c0_12] : memref<64x256xf32, #tpu.memory_space<vmem>>, vector<64x256xf32>
    %15 = arith.truncf %14 : vector<64x256xf32> to vector<64x256xbf16>
    %cst_13 = arith.constant dense<0.000000e+00> : vector<32x256xf32>
    %16 = tpu.matmul %10, %15, %cst_13 {dimension_numbers = #tpu.dot_dimension_numbers<[1], [0], [0], [1], [0, 0, 1, 1], [], []>} : vector<32x64xbf16>, vector<64x256xbf16>, vector<32x256xf32> -> vector<32x256xf32>
    %17 = vector.broadcast %12 : vector<32x1xf32> to vector<32x256xf32>
    %18 = arith.addf %16, %17 : vector<32x256xf32>
    %19 = arith.negf %18 : vector<32x256xf32>
    %20 = math.exp %19 : vector<32x256xf32>
    %cst_14 = arith.constant 1.000000e+00 : f32
    %21 = vector.broadcast %cst_14 : f32 to vector<32x256xf32>
    %22 = arith.addf %21, %20 : vector<32x256xf32>
    %23 = arith.divf %21, %22 : vector<32x256xf32>
    %24 = arith.mulf %18, %23 : vector<32x256xf32>
    %25 = arith.truncf %24 : vector<32x256xf32> to vector<32x256xbf16>
    %c0_15 = arith.constant 0 : index
    %c128 = arith.constant 128 : index
    %26 = vector.load %arg11[%c0_15, %c128] : memref<32x512xbf16, #tpu.memory_space<vmem>>, vector<32x256xbf16>
    tpu.vector_store %arg11[%c0_15, %c128], %25 {strides = array<i32>} : memref<32x512xbf16, #tpu.memory_space<vmem>>, vector<32x256xbf16>,
    %c16_i32_16 = arith.constant 16 : i32
    %27 = vector.broadcast %c16_i32_16 : i32 to vector<1x256xi32>
    %28 = arith.cmpi sge, %9, %27 : vector<1x256xi32>
    %c0_17 = arith.constant 0 : index
    %c111 = arith.constant 111 : index
    %29 = vector.load %arg11[%c0_17, %c111] : memref<32x512xbf16, #tpu.memory_space<vmem>>, vector<32x256xbf16>
    %c1_i32 = arith.constant 1 : i32
    %30 = vector.broadcast %c1_i32 : i32 to vector<1x256xi32>
    %31 = arith.cmpi sge, %6, %30 : vector<1x256xi32>
    %32 = arith.andi %28, %31 : vector<1x256xi1>
    %cst_18 = arith.constant 0.000000e+00 : bf16
    %33 = vector.broadcast %cst_18 : bf16 to vector<32x256xbf16>
    %34 = vector.shape_cast %32 : vector<1x256xi1> to vector<1x256xi1>
    %35 = vector.broadcast %34 : vector<1x256xi1> to vector<32x256xi1>
    %36 = arith.select %35, %29, %33 : vector<32x256xi1>, vector<32x256xbf16>
    %c0_19 = arith.constant 0 : index
    %c0_20 = arith.constant 0 : index
    %37 = vector.load %arg12[%c0_19, %c0_20] : memref<288x256xbf16, #tpu.memory_space<vmem>>, vector<32x256xbf16>
    tpu.vector_store %arg12[%c0_19, %c0_20], %36 {strides = array<i32>} : memref<288x256xbf16, #tpu.memory_space<vmem>>, vector<32x256xbf16>,
    %c0_21 = arith.constant 0 : index
    %c112 = arith.constant 112 : index
    %38 = vector.load %arg11[%c0_21, %c112] : memref<32x512xbf16, #tpu.memory_space<vmem>>, vector<32x256xbf16>
    %cst_22 = arith.constant 0.000000e+00 : bf16
    %39 = vector.broadcast %cst_22 : bf16 to vector<32x256xbf16>
    %40 = vector.shape_cast %28 : vector<1x256xi1> to vector<1x256xi1>
    %41 = vector.broadcast %40 : vector<1x256xi1> to vector<32x256xi1>
    %42 = arith.select %41, %38, %39 : vector<32x256xi1>, vector<32x256xbf16>
    %c32 = arith.constant 32 : index
    %c0_23 = arith.constant 0 : index
    %43 = vector.load %arg12[%c32, %c0_23] : memref<288x256xbf16, #tpu.memory_space<vmem>>, vector<32x256xbf16>
    tpu.vector_store %arg12[%c32, %c0_23], %42 {strides = array<i32>} : memref<288x256xbf16, #tpu.memory_space<vmem>>, vector<32x256xbf16>,
    %c0_24 = arith.constant 0 : index
    %c113 = arith.constant 113 : index
    %44 = vector.load %arg11[%c0_24, %c113] : memref<32x512xbf16, #tpu.memory_space<vmem>>, vector<32x256xbf16>
    %c15_i32 = arith.constant 15 : i32
    %45 = vector.broadcast %c15_i32 : i32 to vector<1x256xi32>
    %46 = arith.cmpi slt, %6, %45 : vector<1x256xi32>
    %47 = arith.andi %28, %46 : vector<1x256xi1>
    %cst_25 = arith.constant 0.000000e+00 : bf16
    %48 = vector.broadcast %cst_25 : bf16 to vector<32x256xbf16>
    %49 = vector.shape_cast %47 : vector<1x256xi1> to vector<1x256xi1>
    %50 = vector.broadcast %49 : vector<1x256xi1> to vector<32x256xi1>
    %51 = arith.select %50, %44, %48 : vector<32x256xi1>, vector<32x256xbf16>
    %c64 = arith.constant 64 : index
    %c0_26 = arith.constant 0 : index
    %52 = vector.load %arg12[%c64, %c0_26] : memref<288x256xbf16, #tpu.memory_space<vmem>>, vector<32x256xbf16>
    tpu.vector_store %arg12[%c64, %c0_26], %51 {strides = array<i32>} : memref<288x256xbf16, #tpu.memory_space<vmem>>, vector<32x256xbf16>,
    %c0_27 = arith.constant 0 : index
    %c127 = arith.constant 127 : index
    %53 = vector.load %arg11[%c0_27, %c127] : memref<32x512xbf16, #tpu.memory_space<vmem>>, vector<32x256xbf16>
    %c1_i32_28 = arith.constant 1 : i32
    %54 = vector.broadcast %c1_i32_28 : i32 to vector<1x256xi32>
    %55 = arith.cmpi sge, %6, %54 : vector<1x256xi32>
    %cst_29 = arith.constant 0.000000e+00 : bf16
    %56 = vector.broadcast %cst_29 : bf16 to vector<32x256xbf16>
    %57 = vector.shape_cast %55 : vector<1x256xi1> to vector<1x256xi1>
    %58 = vector.broadcast %57 : vector<1x256xi1> to vector<32x256xi1>
    %59 = arith.select %58, %53, %56 : vector<32x256xi1>, vector<32x256xbf16>
    %c96 = arith.constant 96 : index
    %c0_30 = arith.constant 0 : index
    %60 = vector.load %arg12[%c96, %c0_30] : memref<288x256xbf16, #tpu.memory_space<vmem>>, vector<32x256xbf16>
    tpu.vector_store %arg12[%c96, %c0_30], %59 {strides = array<i32>} : memref<288x256xbf16, #tpu.memory_space<vmem>>, vector<32x256xbf16>,
    %c0_31 = arith.constant 0 : index
    %c128_32 = arith.constant 128 : index
    %61 = vector.load %arg11[%c0_31, %c128_32] : memref<32x512xbf16, #tpu.memory_space<vmem>>, vector<32x256xbf16>
    %c128_33 = arith.constant 128 : index
    %c0_34 = arith.constant 0 : index
    %62 = vector.load %arg12[%c128_33, %c0_34] : memref<288x256xbf16, #tpu.memory_space<vmem>>, vector<32x256xbf16>
    tpu.vector_store %arg12[%c128_33, %c0_34], %61 {strides = array<i32>} : memref<288x256xbf16, #tpu.memory_space<vmem>>, vector<32x256xbf16>,
    %c0_35 = arith.constant 0 : index
    %c129 = arith.constant 129 : index
    %63 = vector.load %arg11[%c0_35, %c129] : memref<32x512xbf16, #tpu.memory_space<vmem>>, vector<32x256xbf16>
    %c15_i32_36 = arith.constant 15 : i32
    %64 = vector.broadcast %c15_i32_36 : i32 to vector<1x256xi32>
    %65 = arith.cmpi slt, %6, %64 : vector<1x256xi32>
    %cst_37 = arith.constant 0.000000e+00 : bf16
    %66 = vector.broadcast %cst_37 : bf16 to vector<32x256xbf16>
    %67 = vector.shape_cast %65 : vector<1x256xi1> to vector<1x256xi1>
    %68 = vector.broadcast %67 : vector<1x256xi1> to vector<32x256xi1>
    %69 = arith.select %68, %63, %66 : vector<32x256xi1>, vector<32x256xbf16>
    %c160 = arith.constant 160 : index
    %c0_38 = arith.constant 0 : index
    %70 = vector.load %arg12[%c160, %c0_38] : memref<288x256xbf16, #tpu.memory_space<vmem>>, vector<32x256xbf16>
    tpu.vector_store %arg12[%c160, %c0_38], %69 {strides = array<i32>} : memref<288x256xbf16, #tpu.memory_space<vmem>>, vector<32x256xbf16>,
    %c240_i32 = arith.constant 240 : i32
    %71 = vector.broadcast %c240_i32 : i32 to vector<1x256xi32>
    %72 = arith.cmpi slt, %9, %71 : vector<1x256xi32>
    %c0_39 = arith.constant 0 : index
    %c143 = arith.constant 143 : index
    %73 = vector.load %arg11[%c0_39, %c143] : memref<32x512xbf16, #tpu.memory_space<vmem>>, vector<32x256xbf16>
    %c1_i32_40 = arith.constant 1 : i32
    %74 = vector.broadcast %c1_i32_40 : i32 to vector<1x256xi32>
    %75 = arith.cmpi sge, %6, %74 : vector<1x256xi32>
    %76 = arith.andi %72, %75 : vector<1x256xi1>
    %cst_41 = arith.constant 0.000000e+00 : bf16
    %77 = vector.broadcast %cst_41 : bf16 to vector<32x256xbf16>
    %78 = vector.shape_cast %76 : vector<1x256xi1> to vector<1x256xi1>
    %79 = vector.broadcast %78 : vector<1x256xi1> to vector<32x256xi1>
    %80 = arith.select %79, %73, %77 : vector<32x256xi1>, vector<32x256xbf16>
    %c192 = arith.constant 192 : index
    %c0_42 = arith.constant 0 : index
    %81 = vector.load %arg12[%c192, %c0_42] : memref<288x256xbf16, #tpu.memory_space<vmem>>, vector<32x256xbf16>
    tpu.vector_store %arg12[%c192, %c0_42], %80 {strides = array<i32>} : memref<288x256xbf16, #tpu.memory_space<vmem>>, vector<32x256xbf16>,
    %c0_43 = arith.constant 0 : index
    %c144 = arith.constant 144 : index
    %82 = vector.load %arg11[%c0_43, %c144] : memref<32x512xbf16, #tpu.memory_space<vmem>>, vector<32x256xbf16>
    %cst_44 = arith.constant 0.000000e+00 : bf16
    %83 = vector.broadcast %cst_44 : bf16 to vector<32x256xbf16>
    %84 = vector.shape_cast %72 : vector<1x256xi1> to vector<1x256xi1>
    %85 = vector.broadcast %84 : vector<1x256xi1> to vector<32x256xi1>
    %86 = arith.select %85, %82, %83 : vector<32x256xi1>, vector<32x256xbf16>
    %c224 = arith.constant 224 : index
    %c0_45 = arith.constant 0 : index
    %87 = vector.load %arg12[%c224, %c0_45] : memref<288x256xbf16, #tpu.memory_space<vmem>>, vector<32x256xbf16>
    tpu.vector_store %arg12[%c224, %c0_45], %86 {strides = array<i32>} : memref<288x256xbf16, #tpu.memory_space<vmem>>, vector<32x256xbf16>,
    %c0_46 = arith.constant 0 : index
    %c145 = arith.constant 145 : index
    %88 = vector.load %arg11[%c0_46, %c145] : memref<32x512xbf16, #tpu.memory_space<vmem>>, vector<32x256xbf16>
    %c15_i32_47 = arith.constant 15 : i32
    %89 = vector.broadcast %c15_i32_47 : i32 to vector<1x256xi32>
    %90 = arith.cmpi slt, %6, %89 : vector<1x256xi32>
    %91 = arith.andi %72, %90 : vector<1x256xi1>
    %cst_48 = arith.constant 0.000000e+00 : bf16
    %92 = vector.broadcast %cst_48 : bf16 to vector<32x256xbf16>
    %93 = vector.shape_cast %91 : vector<1x256xi1> to vector<1x256xi1>
    %94 = vector.broadcast %93 : vector<1x256xi1> to vector<32x256xi1>
    %95 = arith.select %94, %88, %92 : vector<32x256xi1>, vector<32x256xbf16>
    %c256 = arith.constant 256 : index
    %c0_49 = arith.constant 0 : index
    %96 = vector.load %arg12[%c256, %c0_49] : memref<288x256xbf16, #tpu.memory_space<vmem>>, vector<32x256xbf16>
    tpu.vector_store %arg12[%c256, %c0_49], %95 {strides = array<i32>} : memref<288x256xbf16, #tpu.memory_space<vmem>>, vector<32x256xbf16>,
    %c0_50 = arith.constant 0 : index
    %c0_51 = arith.constant 0 : index
    %97 = vector.load %arg12[%c0_50, %c0_51] : memref<288x256xbf16, #tpu.memory_space<vmem>>, vector<288x256xbf16>
    %cst_52 = arith.constant dense<0.000000e+00> : vector<64x256xf32>
    %98 = tpu.matmul %11, %97, %cst_52 {dimension_numbers = #tpu.dot_dimension_numbers<[1], [0], [0], [1], [0, 0, 1, 1], [], []>} : vector<64x288xbf16>, vector<288x256xbf16>, vector<64x256xf32> -> vector<64x256xf32>
    %99 = vector.broadcast %13 : vector<64x1xf32> to vector<64x256xf32>
    %100 = arith.addf %98, %99 : vector<64x256xf32>
    %c0_53 = arith.constant 0 : index
    %c0_54 = arith.constant 0 : index
    %101 = vector.load %arg1[%c0_53, %c0_54] : memref<64x256xf32, #tpu.memory_space<vmem>>, vector<64x256xf32>
    %102 = arith.addf %100, %101 : vector<64x256xf32>
    %103 = arith.negf %102 : vector<64x256xf32>
    %104 = math.exp %103 : vector<64x256xf32>
    %cst_55 = arith.constant 1.000000e+00 : f32
    %105 = vector.broadcast %cst_55 : f32 to vector<64x256xf32>
    %106 = arith.addf %105, %104 : vector<64x256xf32>
    %107 = arith.divf %105, %106 : vector<64x256xf32>
    %108 = arith.mulf %102, %107 : vector<64x256xf32>
    %c0_56 = arith.constant 0 : index
    %c0_57 = arith.constant 0 : index
    %109 = vector.load %arg8[%c0_56, %c0_57] : memref<64x256xf32, #tpu.memory_space<vmem>>, vector<64x256xf32>
    tpu.vector_store %arg8[%c0_56, %c0_57], %108 {strides = array<i32>} : memref<64x256xf32, #tpu.memory_space<vmem>>, vector<64x256xf32>,
    %c0_58 = arith.constant 0 : index
    %c0_59 = arith.constant 0 : index
    %110 = vector.load %arg2[%c0_58, %c0_59] : memref<64x256xf32, #tpu.memory_space<vmem>>, vector<64x256xf32>
    %111 = arith.truncf %110 : vector<64x256xf32> to vector<64x256xbf16>
    %cst_60 = arith.constant dense<0.000000e+00> : vector<32x256xf32>
    %112 = tpu.matmul %10, %111, %cst_60 {dimension_numbers = #tpu.dot_dimension_numbers<[1], [0], [0], [1], [0, 0, 1, 1], [], []>} : vector<32x64xbf16>, vector<64x256xbf16>, vector<32x256xf32> -> vector<32x256xf32>
    %113 = vector.broadcast %12 : vector<32x1xf32> to vector<32x256xf32>
    %114 = arith.addf %112, %113 : vector<32x256xf32>
    %115 = arith.negf %114 : vector<32x256xf32>
    %116 = math.exp %115 : vector<32x256xf32>
    %cst_61 = arith.constant 1.000000e+00 : f32
    %117 = vector.broadcast %cst_61 : f32 to vector<32x256xf32>
    %118 = arith.addf %117, %116 : vector<32x256xf32>
    %119 = arith.divf %117, %118 : vector<32x256xf32>
    %120 = arith.mulf %114, %119 : vector<32x256xf32>
    %121 = arith.truncf %120 : vector<32x256xf32> to vector<32x256xbf16>
    %c0_62 = arith.constant 0 : index
    %c128_63 = arith.constant 128 : index
    %122 = vector.load %arg11[%c0_62, %c128_63] : memref<32x512xbf16, #tpu.memory_space<vmem>>, vector<32x256xbf16>
    tpu.vector_store %arg11[%c0_62, %c128_63], %121 {strides = array<i32>} : memref<32x512xbf16, #tpu.memory_space<vmem>>, vector<32x256xbf16>,
    %c32_i32 = arith.constant 32 : i32
    %123 = vector.broadcast %c32_i32 : i32 to vector<1x256xi32>
    %124 = arith.cmpi sge, %9, %123 : vector<1x256xi32>
    %c0_64 = arith.constant 0 : index
    %c94 = arith.constant 94 : index
    %125 = vector.load %arg11[%c0_64, %c94] : memref<32x512xbf16, #tpu.memory_space<vmem>>, vector<32x256xbf16>
    %c2_i32 = arith.constant 2 : i32
    %126 = vector.broadcast %c2_i32 : i32 to vector<1x256xi32>
    %127 = arith.cmpi sge, %6, %126 : vector<1x256xi32>
    %128 = arith.andi %124, %127 : vector<1x256xi1>
    %cst_65 = arith.constant 0.000000e+00 : bf16
    %129 = vector.broadcast %cst_65 : bf16 to vector<32x256xbf16>
    %130 = vector.shape_cast %128 : vector<1x256xi1> to vector<1x256xi1>
    %131 = vector.broadcast %130 : vector<1x256xi1> to vector<32x256xi1>
    %132 = arith.select %131, %125, %129 : vector<32x256xi1>, vector<32x256xbf16>
    %c0_66 = arith.constant 0 : index
    %c0_67 = arith.constant 0 : index
    %133 = vector.load %arg12[%c0_66, %c0_67] : memref<288x256xbf16, #tpu.memory_space<vmem>>, vector<32x256xbf16>
    tpu.vector_store %arg12[%c0_66, %c0_67], %132 {strides = array<i32>} : memref<288x256xbf16, #tpu.memory_space<vmem>>, vector<32x256xbf16>,
    %c0_68 = arith.constant 0 : index
    %c96_69 = arith.constant 96 : index
    %134 = vector.load %arg11[%c0_68, %c96_69] : memref<32x512xbf16, #tpu.memory_space<vmem>>, vector<32x256xbf16>
    %cst_70 = arith.constant 0.000000e+00 : bf16
    %135 = vector.broadcast %cst_70 : bf16 to vector<32x256xbf16>
    %136 = vector.shape_cast %124 : vector<1x256xi1> to vector<1x256xi1>
    %137 = vector.broadcast %136 : vector<1x256xi1> to vector<32x256xi1>
    %138 = arith.select %137, %134, %135 : vector<32x256xi1>, vector<32x256xbf16>
    %c32_71 = arith.constant 32 : index
    %c0_72 = arith.constant 0 : index
    %139 = vector.load %arg12[%c32_71, %c0_72] : memref<288x256xbf16, #tpu.memory_space<vmem>>, vector<32x256xbf16>
    tpu.vector_store %arg12[%c32_71, %c0_72], %138 {strides = array<i32>} : memref<288x256xbf16, #tpu.memory_space<vmem>>, vector<32x256xbf16>,
    %c0_73 = arith.constant 0 : index
    %c98 = arith.constant 98 : index
    %140 = vector.load %arg11[%c0_73, %c98] : memref<32x512xbf16, #tpu.memory_space<vmem>>, vector<32x256xbf16>
    %c14_i32 = arith.constant 14 : i32
    %141 = vector.broadcast %c14_i32 : i32 to vector<1x256xi32>
    %142 = arith.cmpi slt, %6, %141 : vector<1x256xi32>
    %143 = arith.andi %124, %142 : vector<1x256xi1>
    %cst_74 = arith.constant 0.000000e+00 : bf16
    %144 = vector.broadcast %cst_74 : bf16 to vector<32x256xbf16>
    %145 = vector.shape_cast %143 : vector<1x256xi1> to vector<1x256xi1>
    %146 = vector.broadcast %145 : vector<1x256xi1> to vector<32x256xi1>
    %147 = arith.select %146, %140, %144 : vector<32x256xi1>, vector<32x256xbf16>
    %c64_75 = arith.constant 64 : index
    %c0_76 = arith.constant 0 : index
    %148 = vector.load %arg12[%c64_75, %c0_76] : memref<288x256xbf16, #tpu.memory_space<vmem>>, vector<32x256xbf16>
    tpu.vector_store %arg12[%c64_75, %c0_76], %147 {strides = array<i32>} : memref<288x256xbf16, #tpu.memory_space<vmem>>, vector<32x256xbf16>,
    %c0_77 = arith.constant 0 : index
    %c126 = arith.constant 126 : index
    %149 = vector.load %arg11[%c0_77, %c126] : memref<32x512xbf16, #tpu.memory_space<vmem>>, vector<32x256xbf16>
    %c2_i32_78 = arith.constant 2 : i32
    %150 = vector.broadcast %c2_i32_78 : i32 to vector<1x256xi32>
    %151 = arith.cmpi sge, %6, %150 : vector<1x256xi32>
    %cst_79 = arith.constant 0.000000e+00 : bf16
    %152 = vector.broadcast %cst_79 : bf16 to vector<32x256xbf16>
    %153 = vector.shape_cast %151 : vector<1x256xi1> to vector<1x256xi1>
    %154 = vector.broadcast %153 : vector<1x256xi1> to vector<32x256xi1>
    %155 = arith.select %154, %149, %152 : vector<32x256xi1>, vector<32x256xbf16>
    %c96_80 = arith.constant 96 : index
    %c0_81 = arith.constant 0 : index
    %156 = vector.load %arg12[%c96_80, %c0_81] : memref<288x256xbf16, #tpu.memory_space<vmem>>, vector<32x256xbf16>
    tpu.vector_store %arg12[%c96_80, %c0_81], %155 {strides = array<i32>} : memref<288x256xbf16, #tpu.memory_space<vmem>>, vector<32x256xbf16>,
    %c0_82 = arith.constant 0 : index
    %c128_83 = arith.constant 128 : index
    %157 = vector.load %arg11[%c0_82, %c128_83] : memref<32x512xbf16, #tpu.memory_space<vmem>>, vector<32x256xbf16>
    %c128_84 = arith.constant 128 : index
    %c0_85 = arith.constant 0 : index
    %158 = vector.load %arg12[%c128_84, %c0_85] : memref<288x256xbf16, #tpu.memory_space<vmem>>, vector<32x256xbf16>
    tpu.vector_store %arg12[%c128_84, %c0_85], %157 {strides = array<i32>} : memref<288x256xbf16, #tpu.memory_space<vmem>>, vector<32x256xbf16>,
    %c0_86 = arith.constant 0 : index
    %c130 = arith.constant 130 : index
    %159 = vector.load %arg11[%c0_86, %c130] : memref<32x512xbf16, #tpu.memory_space<vmem>>, vector<32x256xbf16>
    %c14_i32_87 = arith.constant 14 : i32
    %160 = vector.broadcast %c14_i32_87 : i32 to vector<1x256xi32>
    %161 = arith.cmpi slt, %6, %160 : vector<1x256xi32>
    %cst_88 = arith.constant 0.000000e+00 : bf16
    %162 = vector.broadcast %cst_88 : bf16 to vector<32x256xbf16>
    %163 = vector.shape_cast %161 : vector<1x256xi1> to vector<1x256xi1>
    %164 = vector.broadcast %163 : vector<1x256xi1> to vector<32x256xi1>
    %165 = arith.select %164, %159, %162 : vector<32x256xi1>, vector<32x256xbf16>
    %c160_89 = arith.constant 160 : index
    %c0_90 = arith.constant 0 : index
    %166 = vector.load %arg12[%c160_89, %c0_90] : memref<288x256xbf16, #tpu.memory_space<vmem>>, vector<32x256xbf16>
    tpu.vector_store %arg12[%c160_89, %c0_90], %165 {strides = array<i32>} : memref<288x256xbf16, #tpu.memory_space<vmem>>, vector<32x256xbf16>,
    %c224_i32 = arith.constant 224 : i32
    %167 = vector.broadcast %c224_i32 : i32 to vector<1x256xi32>
    %168 = arith.cmpi slt, %9, %167 : vector<1x256xi32>
    %c0_91 = arith.constant 0 : index
    %c158 = arith.constant 158 : index
    %169 = vector.load %arg11[%c0_91, %c158] : memref<32x512xbf16, #tpu.memory_space<vmem>>, vector<32x256xbf16>
    %c2_i32_92 = arith.constant 2 : i32
    %170 = vector.broadcast %c2_i32_92 : i32 to vector<1x256xi32>
    %171 = arith.cmpi sge, %6, %170 : vector<1x256xi32>
    %172 = arith.andi %168, %171 : vector<1x256xi1>
    %cst_93 = arith.constant 0.000000e+00 : bf16
    %173 = vector.broadcast %cst_93 : bf16 to vector<32x256xbf16>
    %174 = vector.shape_cast %172 : vector<1x256xi1> to vector<1x256xi1>
    %175 = vector.broadcast %174 : vector<1x256xi1> to vector<32x256xi1>
    %176 = arith.select %175, %169, %173 : vector<32x256xi1>, vector<32x256xbf16>
    %c192_94 = arith.constant 192 : index
    %c0_95 = arith.constant 0 : index
    %177 = vector.load %arg12[%c192_94, %c0_95] : memref<288x256xbf16, #tpu.memory_space<vmem>>, vector<32x256xbf16>
    tpu.vector_store %arg12[%c192_94, %c0_95], %176 {strides = array<i32>} : memref<288x256xbf16, #tpu.memory_space<vmem>>, vector<32x256xbf16>,
    %c0_96 = arith.constant 0 : index
    %c160_97 = arith.constant 160 : index
    %178 = vector.load %arg11[%c0_96, %c160_97] : memref<32x512xbf16, #tpu.memory_space<vmem>>, vector<32x256xbf16>
    %cst_98 = arith.constant 0.000000e+00 : bf16
    %179 = vector.broadcast %cst_98 : bf16 to vector<32x256xbf16>
    %180 = vector.shape_cast %168 : vector<1x256xi1> to vector<1x256xi1>
    %181 = vector.broadcast %180 : vector<1x256xi1> to vector<32x256xi1>
    %182 = arith.select %181, %178, %179 : vector<32x256xi1>, vector<32x256xbf16>
    %c224_99 = arith.constant 224 : index
    %c0_100 = arith.constant 0 : index
    %183 = vector.load %arg12[%c224_99, %c0_100] : memref<288x256xbf16, #tpu.memory_space<vmem>>, vector<32x256xbf16>
    tpu.vector_store %arg12[%c224_99, %c0_100], %182 {strides = array<i32>} : memref<288x256xbf16, #tpu.memory_space<vmem>>, vector<32x256xbf16>,
    %c0_101 = arith.constant 0 : index
    %c162 = arith.constant 162 : index
    %184 = vector.load %arg11[%c0_101, %c162] : memref<32x512xbf16, #tpu.memory_space<vmem>>, vector<32x256xbf16>
    %c14_i32_102 = arith.constant 14 : i32
    %185 = vector.broadcast %c14_i32_102 : i32 to vector<1x256xi32>
    %186 = arith.cmpi slt, %6, %185 : vector<1x256xi32>
    %187 = arith.andi %168, %186 : vector<1x256xi1>
    %cst_103 = arith.constant 0.000000e+00 : bf16
    %188 = vector.broadcast %cst_103 : bf16 to vector<32x256xbf16>
    %189 = vector.shape_cast %187 : vector<1x256xi1> to vector<1x256xi1>
    %190 = vector.broadcast %189 : vector<1x256xi1> to vector<32x256xi1>
    %191 = arith.select %190, %184, %188 : vector<32x256xi1>, vector<32x256xbf16>
    %c256_104 = arith.constant 256 : index
    %c0_105 = arith.constant 0 : index
    %192 = vector.load %arg12[%c256_104, %c0_105] : memref<288x256xbf16, #tpu.memory_space<vmem>>, vector<32x256xbf16>
    tpu.vector_store %arg12[%c256_104, %c0_105], %191 {strides = array<i32>} : memref<288x256xbf16, #tpu.memory_space<vmem>>, vector<32x256xbf16>,
    %c0_106 = arith.constant 0 : index
    %c0_107 = arith.constant 0 : index
    %193 = vector.load %arg12[%c0_106, %c0_107] : memref<288x256xbf16, #tpu.memory_space<vmem>>, vector<288x256xbf16>
    %cst_108 = arith.constant dense<0.000000e+00> : vector<64x256xf32>
    %194 = tpu.matmul %11, %193, %cst_108 {dimension_numbers = #tpu.dot_dimension_numbers<[1], [0], [0], [1], [0, 0, 1, 1], [], []>} : vector<64x288xbf16>, vector<288x256xbf16>, vector<64x256xf32> -> vector<64x256xf32>
    %195 = vector.broadcast %13 : vector<64x1xf32> to vector<64x256xf32>
    %196 = arith.addf %194, %195 : vector<64x256xf32>
    %c0_109 = arith.constant 0 : index
    %c0_110 = arith.constant 0 : index
    %197 = vector.load %arg2[%c0_109, %c0_110] : memref<64x256xf32, #tpu.memory_space<vmem>>, vector<64x256xf32>
    %198 = arith.addf %196, %197 : vector<64x256xf32>
    %199 = arith.negf %198 : vector<64x256xf32>
    %200 = math.exp %199 : vector<64x256xf32>
    %cst_111 = arith.constant 1.000000e+00 : f32
    %201 = vector.broadcast %cst_111 : f32 to vector<64x256xf32>
    %202 = arith.addf %201, %200 : vector<64x256xf32>
    %203 = arith.divf %201, %202 : vector<64x256xf32>
    %204 = arith.mulf %198, %203 : vector<64x256xf32>
    %c0_112 = arith.constant 0 : index
    %c0_113 = arith.constant 0 : index
    %205 = vector.load %arg9[%c0_112, %c0_113] : memref<64x256xf32, #tpu.memory_space<vmem>>, vector<64x256xf32>
    tpu.vector_store %arg9[%c0_112, %c0_113], %204 {strides = array<i32>} : memref<64x256xf32, #tpu.memory_space<vmem>>, vector<64x256xf32>,
    %c0_114 = arith.constant 0 : index
    %c0_115 = arith.constant 0 : index
    %206 = vector.load %arg3[%c0_114, %c0_115] : memref<64x256xf32, #tpu.memory_space<vmem>>, vector<64x256xf32>
    %207 = arith.truncf %206 : vector<64x256xf32> to vector<64x256xbf16>
    %cst_116 = arith.constant dense<0.000000e+00> : vector<32x256xf32>
    %208 = tpu.matmul %10, %207, %cst_116 {dimension_numbers = #tpu.dot_dimension_numbers<[1], [0], [0], [1], [0, 0, 1, 1], [], []>} : vector<32x64xbf16>, vector<64x256xbf16>, vector<32x256xf32> -> vector<32x256xf32>
    %209 = vector.broadcast %12 : vector<32x1xf32> to vector<32x256xf32>
    %210 = arith.addf %208, %209 : vector<32x256xf32>
    %211 = arith.negf %210 : vector<32x256xf32>
    %212 = math.exp %211 : vector<32x256xf32>
    %cst_117 = arith.constant 1.000000e+00 : f32
    %213 = vector.broadcast %cst_117 : f32 to vector<32x256xf32>
    %214 = arith.addf %213, %212 : vector<32x256xf32>
    %215 = arith.divf %213, %214 : vector<32x256xf32>
    %216 = arith.mulf %210, %215 : vector<32x256xf32>
    %217 = arith.truncf %216 : vector<32x256xf32> to vector<32x256xbf16>
    %c0_118 = arith.constant 0 : index
    %c128_119 = arith.constant 128 : index
    %218 = vector.load %arg11[%c0_118, %c128_119] : memref<32x512xbf16, #tpu.memory_space<vmem>>, vector<32x256xbf16>
    tpu.vector_store %arg11[%c0_118, %c128_119], %217 {strides = array<i32>} : memref<32x512xbf16, #tpu.memory_space<vmem>>, vector<32x256xbf16>,
    %c48_i32 = arith.constant 48 : i32
    %219 = vector.broadcast %c48_i32 : i32 to vector<1x256xi32>
    %220 = arith.cmpi sge, %9, %219 : vector<1x256xi32>
    %c0_120 = arith.constant 0 : index
    %c77 = arith.constant 77 : index
    %221 = vector.load %arg11[%c0_120, %c77] : memref<32x512xbf16, #tpu.memory_space<vmem>>, vector<32x256xbf16>
    %c3_i32 = arith.constant 3 : i32
    %222 = vector.broadcast %c3_i32 : i32 to vector<1x256xi32>
    %223 = arith.cmpi sge, %6, %222 : vector<1x256xi32>
    %224 = arith.andi %220, %223 : vector<1x256xi1>
    %cst_121 = arith.constant 0.000000e+00 : bf16
    %225 = vector.broadcast %cst_121 : bf16 to vector<32x256xbf16>
    %226 = vector.shape_cast %224 : vector<1x256xi1> to vector<1x256xi1>
    %227 = vector.broadcast %226 : vector<1x256xi1> to vector<32x256xi1>
    %228 = arith.select %227, %221, %225 : vector<32x256xi1>, vector<32x256xbf16>
    %c0_122 = arith.constant 0 : index
    %c0_123 = arith.constant 0 : index
    %229 = vector.load %arg12[%c0_122, %c0_123] : memref<288x256xbf16, #tpu.memory_space<vmem>>, vector<32x256xbf16>
    tpu.vector_store %arg12[%c0_122, %c0_123], %228 {strides = array<i32>} : memref<288x256xbf16, #tpu.memory_space<vmem>>, vector<32x256xbf16>,
    %c0_124 = arith.constant 0 : index
    %c80 = arith.constant 80 : index
    %230 = vector.load %arg11[%c0_124, %c80] : memref<32x512xbf16, #tpu.memory_space<vmem>>, vector<32x256xbf16>
    %cst_125 = arith.constant 0.000000e+00 : bf16
    %231 = vector.broadcast %cst_125 : bf16 to vector<32x256xbf16>
    %232 = vector.shape_cast %220 : vector<1x256xi1> to vector<1x256xi1>
    %233 = vector.broadcast %232 : vector<1x256xi1> to vector<32x256xi1>
    %234 = arith.select %233, %230, %231 : vector<32x256xi1>, vector<32x256xbf16>
    %c32_126 = arith.constant 32 : index
    %c0_127 = arith.constant 0 : index
    %235 = vector.load %arg12[%c32_126, %c0_127] : memref<288x256xbf16, #tpu.memory_space<vmem>>, vector<32x256xbf16>
    tpu.vector_store %arg12[%c32_126, %c0_127], %234 {strides = array<i32>} : memref<288x256xbf16, #tpu.memory_space<vmem>>, vector<32x256xbf16>,
    %c0_128 = arith.constant 0 : index
    %c83 = arith.constant 83 : index
    %236 = vector.load %arg11[%c0_128, %c83] : memref<32x512xbf16, #tpu.memory_space<vmem>>, vector<32x256xbf16>
    %c13_i32 = arith.constant 13 : i32
    %237 = vector.broadcast %c13_i32 : i32 to vector<1x256xi32>
    %238 = arith.cmpi slt, %6, %237 : vector<1x256xi32>
    %239 = arith.andi %220, %238 : vector<1x256xi1>
    %cst_129 = arith.constant 0.000000e+00 : bf16
    %240 = vector.broadcast %cst_129 : bf16 to vector<32x256xbf16>
    %241 = vector.shape_cast %239 : vector<1x256xi1> to vector<1x256xi1>
    %242 = vector.broadcast %241 : vector<1x256xi1> to vector<32x256xi1>
    %243 = arith.select %242, %236, %240 : vector<32x256xi1>, vector<32x256xbf16>
    %c64_130 = arith.constant 64 : index
    %c0_131 = arith.constant 0 : index
    %244 = vector.load %arg12[%c64_130, %c0_131] : memref<288x256xbf16, #tpu.memory_space<vmem>>, vector<32x256xbf16>
    tpu.vector_store %arg12[%c64_130, %c0_131], %243 {strides = array<i32>} : memref<288x256xbf16, #tpu.memory_space<vmem>>, vector<32x256xbf16>,
    %c0_132 = arith.constant 0 : index
    %c125 = arith.constant 125 : index
    %245 = vector.load %arg11[%c0_132, %c125] : memref<32x512xbf16, #tpu.memory_space<vmem>>, vector<32x256xbf16>
    %c3_i32_133 = arith.constant 3 : i32
    %246 = vector.broadcast %c3_i32_133 : i32 to vector<1x256xi32>
    %247 = arith.cmpi sge, %6, %246 : vector<1x256xi32>
    %cst_134 = arith.constant 0.000000e+00 : bf16
    %248 = vector.broadcast %cst_134 : bf16 to vector<32x256xbf16>
    %249 = vector.shape_cast %247 : vector<1x256xi1> to vector<1x256xi1>
    %250 = vector.broadcast %249 : vector<1x256xi1> to vector<32x256xi1>
    %251 = arith.select %250, %245, %248 : vector<32x256xi1>, vector<32x256xbf16>
    %c96_135 = arith.constant 96 : index
    %c0_136 = arith.constant 0 : index
    %252 = vector.load %arg12[%c96_135, %c0_136] : memref<288x256xbf16, #tpu.memory_space<vmem>>, vector<32x256xbf16>
    tpu.vector_store %arg12[%c96_135, %c0_136], %251 {strides = array<i32>} : memref<288x256xbf16, #tpu.memory_space<vmem>>, vector<32x256xbf16>,
    %c0_137 = arith.constant 0 : index
    %c128_138 = arith.constant 128 : index
    %253 = vector.load %arg11[%c0_137, %c128_138] : memref<32x512xbf16, #tpu.memory_space<vmem>>, vector<32x256xbf16>
    %c128_139 = arith.constant 128 : index
    %c0_140 = arith.constant 0 : index
    %254 = vector.load %arg12[%c128_139, %c0_140] : memref<288x256xbf16, #tpu.memory_space<vmem>>, vector<32x256xbf16>
    tpu.vector_store %arg12[%c128_139, %c0_140], %253 {strides = array<i32>} : memref<288x256xbf16, #tpu.memory_space<vmem>>, vector<32x256xbf16>,
    %c0_141 = arith.constant 0 : index
    %c131 = arith.constant 131 : index
    %255 = vector.load %arg11[%c0_141, %c131] : memref<32x512xbf16, #tpu.memory_space<vmem>>, vector<32x256xbf16>
    %c13_i32_142 = arith.constant 13 : i32
    %256 = vector.broadcast %c13_i32_142 : i32 to vector<1x256xi32>
    %257 = arith.cmpi slt, %6, %256 : vector<1x256xi32>
    %cst_143 = arith.constant 0.000000e+00 : bf16
    %258 = vector.broadcast %cst_143 : bf16 to vector<32x256xbf16>
    %259 = vector.shape_cast %257 : vector<1x256xi1> to vector<1x256xi1>
    %260 = vector.broadcast %259 : vector<1x256xi1> to vector<32x256xi1>
    %261 = arith.select %260, %255, %258 : vector<32x256xi1>, vector<32x256xbf16>
    %c160_144 = arith.constant 160 : index
    %c0_145 = arith.constant 0 : index
    %262 = vector.load %arg12[%c160_144, %c0_145] : memref<288x256xbf16, #tpu.memory_space<vmem>>, vector<32x256xbf16>
    tpu.vector_store %arg12[%c160_144, %c0_145], %261 {strides = array<i32>} : memref<288x256xbf16, #tpu.memory_space<vmem>>, vector<32x256xbf16>,
    %c208_i32 = arith.constant 208 : i32
    %263 = vector.broadcast %c208_i32 : i32 to vector<1x256xi32>
    %264 = arith.cmpi slt, %9, %263 : vector<1x256xi32>
    %c0_146 = arith.constant 0 : index
    %c173 = arith.constant 173 : index
    %265 = vector.load %arg11[%c0_146, %c173] : memref<32x512xbf16, #tpu.memory_space<vmem>>, vector<32x256xbf16>
    %c3_i32_147 = arith.constant 3 : i32
    %266 = vector.broadcast %c3_i32_147 : i32 to vector<1x256xi32>
    %267 = arith.cmpi sge, %6, %266 : vector<1x256xi32>
    %268 = arith.andi %264, %267 : vector<1x256xi1>
    %cst_148 = arith.constant 0.000000e+00 : bf16
    %269 = vector.broadcast %cst_148 : bf16 to vector<32x256xbf16>
    %270 = vector.shape_cast %268 : vector<1x256xi1> to vector<1x256xi1>
    %271 = vector.broadcast %270 : vector<1x256xi1> to vector<32x256xi1>
    %272 = arith.select %271, %265, %269 : vector<32x256xi1>, vector<32x256xbf16>
    %c192_149 = arith.constant 192 : index
    %c0_150 = arith.constant 0 : index
    %273 = vector.load %arg12[%c192_149, %c0_150] : memref<288x256xbf16, #tpu.memory_space<vmem>>, vector<32x256xbf16>
    tpu.vector_store %arg12[%c192_149, %c0_150], %272 {strides = array<i32>} : memref<288x256xbf16, #tpu.memory_space<vmem>>, vector<32x256xbf16>,
    %c0_151 = arith.constant 0 : index
    %c176 = arith.constant 176 : index
    %274 = vector.load %arg11[%c0_151, %c176] : memref<32x512xbf16, #tpu.memory_space<vmem>>, vector<32x256xbf16>
    %cst_152 = arith.constant 0.000000e+00 : bf16
    %275 = vector.broadcast %cst_152 : bf16 to vector<32x256xbf16>
    %276 = vector.shape_cast %264 : vector<1x256xi1> to vector<1x256xi1>
    %277 = vector.broadcast %276 : vector<1x256xi1> to vector<32x256xi1>
    %278 = arith.select %277, %274, %275 : vector<32x256xi1>, vector<32x256xbf16>
    %c224_153 = arith.constant 224 : index
    %c0_154 = arith.constant 0 : index
    %279 = vector.load %arg12[%c224_153, %c0_154] : memref<288x256xbf16, #tpu.memory_space<vmem>>, vector<32x256xbf16>
    tpu.vector_store %arg12[%c224_153, %c0_154], %278 {strides = array<i32>} : memref<288x256xbf16, #tpu.memory_space<vmem>>, vector<32x256xbf16>,
    %c0_155 = arith.constant 0 : index
    %c179 = arith.constant 179 : index
    %280 = vector.load %arg11[%c0_155, %c179] : memref<32x512xbf16, #tpu.memory_space<vmem>>, vector<32x256xbf16>
    %c13_i32_156 = arith.constant 13 : i32
    %281 = vector.broadcast %c13_i32_156 : i32 to vector<1x256xi32>
    %282 = arith.cmpi slt, %6, %281 : vector<1x256xi32>
    %283 = arith.andi %264, %282 : vector<1x256xi1>
    %cst_157 = arith.constant 0.000000e+00 : bf16
    %284 = vector.broadcast %cst_157 : bf16 to vector<32x256xbf16>
    %285 = vector.shape_cast %283 : vector<1x256xi1> to vector<1x256xi1>
    %286 = vector.broadcast %285 : vector<1x256xi1> to vector<32x256xi1>
    %287 = arith.select %286, %280, %284 : vector<32x256xi1>, vector<32x256xbf16>
    %c256_158 = arith.constant 256 : index
    %c0_159 = arith.constant 0 : index
    %288 = vector.load %arg12[%c256_158, %c0_159] : memref<288x256xbf16, #tpu.memory_space<vmem>>, vector<32x256xbf16>
    tpu.vector_store %arg12[%c256_158, %c0_159], %287 {strides = array<i32>} : memref<288x256xbf16, #tpu.memory_space<vmem>>, vector<32x256xbf16>,
    %c0_160 = arith.constant 0 : index
    %c0_161 = arith.constant 0 : index
    %289 = vector.load %arg12[%c0_160, %c0_161] : memref<288x256xbf16, #tpu.memory_space<vmem>>, vector<288x256xbf16>
    %cst_162 = arith.constant dense<0.000000e+00> : vector<64x256xf32>
    %290 = tpu.matmul %11, %289, %cst_162 {dimension_numbers = #tpu.dot_dimension_numbers<[1], [0], [0], [1], [0, 0, 1, 1], [], []>} : vector<64x288xbf16>, vector<288x256xbf16>, vector<64x256xf32> -> vector<64x256xf32>
    %291 = vector.broadcast %13 : vector<64x1xf32> to vector<64x256xf32>
    %292 = arith.addf %290, %291 : vector<64x256xf32>
    %c0_163 = arith.constant 0 : index
    %c0_164 = arith.constant 0 : index
    %293 = vector.load %arg3[%c0_163, %c0_164] : memref<64x256xf32, #tpu.memory_space<vmem>>, vector<64x256xf32>
    %294 = arith.addf %292, %293 : vector<64x256xf32>
    %295 = arith.negf %294 : vector<64x256xf32>
    %296 = math.exp %295 : vector<64x256xf32>
    %cst_165 = arith.constant 1.000000e+00 : f32
    %297 = vector.broadcast %cst_165 : f32 to vector<64x256xf32>
    %298 = arith.addf %297, %296 : vector<64x256xf32>
    %299 = arith.divf %297, %298 : vector<64x256xf32>
    %300 = arith.mulf %294, %299 : vector<64x256xf32>
    %c0_166 = arith.constant 0 : index
    %c0_167 = arith.constant 0 : index
    %301 = vector.load %arg10[%c0_166, %c0_167] : memref<64x256xf32, #tpu.memory_space<vmem>>, vector<64x256xf32>
    tpu.vector_store %arg10[%c0_166, %c0_167], %300 {strides = array<i32>} : memref<64x256xf32, #tpu.memory_space<vmem>>, vector<64x256xf32>,
    return
  }
  func.func @transform_0(%arg0: i32) -> (i32, i32) {
    %c0_i32 = arith.constant 0 : i32
    %c0_i32_0 = arith.constant 0 : i32
    return %c0_i32, %arg0 : i32, i32
  }
  func.func @transform_1(%arg0: i32) -> (i32, i32) {
    %c0_i32 = arith.constant 0 : i32
    %c0_i32_0 = arith.constant 0 : i32
    return %c0_i32, %arg0 : i32, i32
  }
  func.func @transform_2(%arg0: i32) -> (i32, i32) {
    %c0_i32 = arith.constant 0 : i32
    %c0_i32_0 = arith.constant 0 : i32
    return %c0_i32, %arg0 : i32, i32
  }
  func.func @transform_3(%arg0: i32) -> (i32, i32) {
    %c0_i32 = arith.constant 0 : i32
    %c0_i32_0 = arith.constant 0 : i32
    %c0_i32_1 = arith.constant 0 : i32
    return %c0_i32, %c0_i32_0 : i32, i32
  }
  func.func @transform_4(%arg0: i32) -> (i32, i32) {
    %c0_i32 = arith.constant 0 : i32
    %c0_i32_0 = arith.constant 0 : i32
    %c0_i32_1 = arith.constant 0 : i32
    return %c0_i32, %c0_i32_0 : i32, i32
  }
  func.func @transform_5(%arg0: i32) -> (i32, i32) {
    %c0_i32 = arith.constant 0 : i32
    %c0_i32_0 = arith.constant 0 : i32
    %c0_i32_1 = arith.constant 0 : i32
    return %c0_i32, %c0_i32_0 : i32, i32
  }
  func.func @transform_6(%arg0: i32) -> (i32, i32) {
    %c0_i32 = arith.constant 0 : i32
    %c0_i32_0 = arith.constant 0 : i32
    %c0_i32_1 = arith.constant 0 : i32
    return %c0_i32, %c0_i32_0 : i32, i32
  }
  func.func @transform_7(%arg0: i32) -> (i32, i32) {
    %c0_i32 = arith.constant 0 : i32
    %c0_i32_0 = arith.constant 0 : i32
    return %c0_i32, %arg0 : i32, i32
  }
  func.func @transform_8(%arg0: i32) -> (i32, i32) {
    %c0_i32 = arith.constant 0 : i32
    %c0_i32_0 = arith.constant 0 : i32
    return %c0_i32, %arg0 : i32, i32
  }
  func.func @transform_9(%arg0: i32) -> (i32, i32) {
    %c0_i32 = arith.constant 0 : i32
    %c0_i32_0 = arith.constant 0 : i32
    return %c0_i32, %arg0 : i32, i32
  }
}

</mosaic_0001>

<llo_original>
// kernel: tpu_custom_call.1
$region0: #{tpu_custom_call.1}
  #allocation0 [shape = 'u32[]', space=smem, size = 0x4, offset = 0x4, fixed_abs, tag = 'smem constant byte address 0x4 - core index']
  #allocation1 [shape = 'u32[144,128]{1,0:T(1,128)}', space=vmem, size = 0x12000, scoped, tag = 'internal scratch']
  #allocation2 [shape = 'bf16[32,512]{1,0:T(16,128)(2,1)}', space=vmem, size = 0x8000, scoped, tag = 'scratch operand']
  #allocation3 [shape = 'bf16[288,256]{1,0:T(16,128)(2,1)}', space=vmem, size = 0x24000, scoped, tag = 'scratch operand']
  %s0 = inlined_call_operand.hbm [shape: f32[64,1024], index: 0, kind: input, shape index: {}]
  %s1 = inlined_call_operand.hbm [shape: f32[64,1024], index: 1, kind: input, shape index: {}]
  %s2 = inlined_call_operand.hbm [shape: f32[64,1024], index: 2, kind: input, shape index: {}]
  %s3 = inlined_call_operand.vmem [shape: bf16[32,64], index: 3, kind: input, shape index: {}]
  %s4 = inlined_call_operand.vmem [shape: bf16[64,288], index: 4, kind: input, shape index: {}]
  %s5 = inlined_call_operand.vmem [shape: f32[32,1], index: 5, kind: input, shape index: {}]
  %s6 = inlined_call_operand.vmem [shape: f32[64,1], index: 6, kind: input, shape index: {}]
  %s7 = inlined_call_operand.hbm [shape: f32[64,1024], index: 7, kind: output, shape index: {0}]
  %s8 = inlined_call_operand.hbm [shape: f32[64,1024], index: 8, kind: output, shape index: {1}]
  %s9 = inlined_call_operand.hbm [shape: f32[64,1024], index: 9, kind: output, shape index: {2}]
  %10 = xla_tuple %s7, %s8, %s9
  %s11 = sld [smem:[#allocation0]]
  $region89: #{tpu_custom_call.1} parent=0
    _
  %s13 = ssub.s32 1, %s11
  %s14 = scalar_select 0, %s13, %s11
  $region1: #{tpu_custom_call.1} parent=0
    #allocation4 [shape = 'u8[131072]{0}', space=vmem, size = 0x20000, scoped, tag = 'input window, operand 0']
    #allocation5 [shape = 's32[2]{0}', space=sflag, size = 0x8, scoped, tag = 'scoped memory for tpu_custom_call.1']
    #allocation6 [shape = 's32[2]{0}', space=sflag, size = 0x8, scoped, tag = 'scoped memory for tpu_custom_call.1']
    #allocation7 [shape = 'u8[131072]{0}', space=vmem, size = 0x20000, scoped, tag = 'input window, operand 1']
    #allocation8 [shape = 's32[2]{0}', space=sflag, size = 0x8, scoped, tag = 'scoped memory for tpu_custom_call.1']
    #allocation9 [shape = 'u8[131072]{0}', space=vmem, size = 0x20000, scoped, tag = 'input window, operand 2']
    #allocation10 [shape = 'u8[131072]{0}', space=vmem, size = 0x20000, scoped, tag = 'output window, operand 0']
    #allocation11 [shape = 'u8[131072]{0}', space=vmem, size = 0x20000, scoped, tag = 'output window, operand 1']
    #allocation12 [shape = 's32[2]{0}', space=sflag, size = 0x8, scoped, tag = 'scoped memory for tpu_custom_call.1']
    #allocation13 [shape = 'u8[131072]{0}', space=vmem, size = 0x20000, scoped, tag = 'output window, operand 2']
    %15 = vsyncpa [#allocation5], 0
    %s16 = scalar_lea.sflag [#allocation5], 1
    %17 = vsyncpa %s16, 0
    %18 = vsyncpa [#allocation8], 0
    %s19 = scalar_lea.sflag [#allocation8], 1
    %20 = vsyncpa %s19, 0
    %21 = vsyncpa [#allocation6], 0
    %s22 = scalar_lea.sflag [#allocation6], 1
    %23 = vsyncpa %s22, 0
    %24 = vsyncpa [#allocation12], 0
    %s25 = scalar_lea.sflag [#allocation12], 1
    %26 = vsyncpa %s25, 0
    loop: start=0, step=1, limit=6
    $region2: #{tpu_custom_call.1} parent=1 // loop_pre_header
      _
    $region3: #{tpu_custom_call.1} parent=1 // loop_header
      %s28 = sphi 0, %s32
      %p29 = scmp.ge.s32.totalorder %s28, 6
      %s38 = sphi 0, %s40
      %s41 = sphi 0, %s38
      %s42 = sphi 0, %s41
      %s58 = sphi 0, %s42
      %s64 = sphi 0, %s66
      %s67 = sphi 0, %s64
      %s68 = sphi 0, %s67
      %s84 = sphi 0, %s68
      %s90 = sphi 0, %s92
      %s93 = sphi 0, %s90
      %s94 = sphi 0, %s93
      %s110 = sphi 0, %s94
      %s114 = sphi 0, %s114
      %s116 = sphi 0, %s114
      %s117 = sphi 0, %s116
      %s131 = sphi 0, %s117
      %s135 = sphi 0, %s135
      %s137 = sphi 0, %s135
      %s138 = sphi 0, %s137
      %s152 = sphi 0, %s138
      %s156 = sphi 0, %s156
      %s158 = sphi 0, %s156
      %s159 = sphi 0, %s158
      %s173 = sphi 0, %s159
      %s177 = sphi 0, %s177
      %s179 = sphi 0, %s177
      %s180 = sphi 0, %s179
      %s194 = sphi 0, %s180
      %s200 = sphi 0, %s202
      %s203 = sphi 0, %s200
      %s204 = sphi 0, %s203
      %s220 = sphi 0, %s204
      %s226 = sphi 0, %s228
      %s229 = sphi 0, %s226
      %s230 = sphi 0, %s229
      %s246 = sphi 0, %s230
      %s252 = sphi 0, %s254
      %s255 = sphi 0, %s252
      %s256 = sphi 0, %s255
      %s272 = sphi 0, %s256
    $region4: #{tpu_custom_call.1} parent=1 // loop_header_branch
      %31 = sbr.rel (%p29) target = $region8
    $region5: #{tpu_custom_call.1} parent=1 // loop_body
      %s33 = ssub.s32 %s28, 1
      %s34 = ssub.s32 %s28, 2
      %s35 = sadd.s32 %s28, 1
      %s36 = ssub.s32 %s28, %s35
      %p37 = scmp.eq.s32.totalorder %s36, 0
      %s39 = sadd.s32 %s38, 1
      %s40 = scalar_select %p37, %s38, %s39
      %p43 = pneg %p37
      %p44 = scmp.eq.s32.totalorder %s28, 3
      %p45 = por %p43, %p44
      %p46 = scmp.ne.s32.totalorder %s38, %s41
      %p47 = scmp.eq.s32.totalorder %s28, 0
      %p48 = por %p46, %p47
      %p49 = scmp.ne.s32.totalorder %s38, %s41
      %p50 = scmp.eq.s32.totalorder %s33, 3
      %p51 = por %p49, %p50
      %p52 = scmp.ne.s32.totalorder %s41, %s42
      %p53 = scmp.eq.s32.totalorder %s33, 0
      %p54 = por %p52, %p53
      %p55 = scmp.ne.s32.totalorder %s41, %s42
      %p56 = scmp.eq.s32.totalorder %s34, 3
      %p57 = por %p55, %p56
      %p59 = scmp.ne.s32.totalorder %s42, %s58
      %p60 = scmp.eq.s32.totalorder %s34, 0
      %p61 = por %p59, %p60
      %s62 = ssub.s32 %s28, %s35
      %p63 = scmp.eq.s32.totalorder %s62, 0
      %s65 = sadd.s32 %s64, 1
      %s66 = scalar_select %p63, %s64, %s65
      %p69 = pneg %p63
      %p70 = scmp.eq.s32.totalorder %s28, 3
      %p71 = por %p69, %p70
      %p72 = scmp.ne.s32.totalorder %s64, %s67
      %p73 = scmp.eq.s32.totalorder %s28, 0
      %p74 = por %p72, %p73
      %p75 = scmp.ne.s32.totalorder %s64, %s67
      %p76 = scmp.eq.s32.totalorder %s33, 3
      %p77 = por %p75, %p76
      %p78 = scmp.ne.s32.totalorder %s67, %s68
      %p79 = scmp.eq.s32.totalorder %s33, 0
      %p80 = por %p78, %p79
      %p81 = scmp.ne.s32.totalorder %s67, %s68
      %p82 = scmp.eq.s32.totalorder %s34, 3
      %p83 = por %p81, %p82
      %p85 = scmp.ne.s32.totalorder %s68, %s84
      %p86 = scmp.eq.s32.totalorder %s34, 0
      %p87 = por %p85, %p86
      %s88 = ssub.s32 %s28, %s35
      %p89 = scmp.eq.s32.totalorder %s88, 0
      %s91 = sadd.s32 %s90, 1
      %s92 = scalar_select %p89, %s90, %s91
      %p95 = pneg %p89
      %p96 = scmp.eq.s32.totalorder %s28, 3
      %p97 = por %p95, %p96
      %p98 = scmp.ne.s32.totalorder %s90, %s93
      %p99 = scmp.eq.s32.totalorder %s28, 0
      %p100 = por %p98, %p99
      %p101 = scmp.ne.s32.totalorder %s90, %s93
      %p102 = scmp.eq.s32.totalorder %s33, 3
      %p103 = por %p101, %p102
      %p104 = scmp.ne.s32.totalorder %s93, %s94
      %p105 = scmp.eq.s32.totalorder %s33, 0
      %p106 = por %p104, %p105
      %p107 = scmp.ne.s32.totalorder %s93, %s94
      %p108 = scmp.eq.s32.totalorder %s34, 3
      %p109 = por %p107, %p108
      %p111 = scmp.ne.s32.totalorder %s94, %s110
      %p112 = scmp.eq.s32.totalorder %s34, 0
      %p113 = por %p111, %p112
      %s115 = sadd.s32 %s114, 1
      %p118 = scmp.eq.s32.totalorder %s28, 3
      %p119 = scmp.ne.s32.totalorder %s114, %s116
      %p120 = scmp.eq.s32.totalorder %s28, 0
      %p121 = por %p119, %p120
      %p122 = scmp.ne.s32.totalorder %s114, %s116
      %p123 = scmp.eq.s32.totalorder %s33, 3
      %p124 = por %p122, %p123
      %p125 = scmp.ne.s32.totalorder %s116, %s117
      %p126 = scmp.eq.s32.totalorder %s33, 0
      %p127 = por %p125, %p126
      %p128 = scmp.ne.s32.totalorder %s116, %s117
      %p129 = scmp.eq.s32.totalorder %s34, 3
      %p130 = por %p128, %p129
      %p132 = scmp.ne.s32.totalorder %s117, %s131
      %p133 = scmp.eq.s32.totalorder %s34, 0
      %p134 = por %p132, %p133
      %s136 = sadd.s32 %s135, 1
      %p139 = scmp.eq.s32.totalorder %s28, 3
      %p140 = scmp.ne.s32.totalorder %s135, %s137
      %p141 = scmp.eq.s32.totalorder %s28, 0
      %p142 = por %p140, %p141
      %p143 = scmp.ne.s32.totalorder %s135, %s137
      %p144 = scmp.eq.s32.totalorder %s33, 3
      %p145 = por %p143, %p144
      %p146 = scmp.ne.s32.totalorder %s137, %s138
      %p147 = scmp.eq.s32.totalorder %s33, 0
      %p148 = por %p146, %p147
      %p149 = scmp.ne.s32.totalorder %s137, %s138
      %p150 = scmp.eq.s32.totalorder %s34, 3
      %p151 = por %p149, %p150
      %p153 = scmp.ne.s32.totalorder %s138, %s152
      %p154 = scmp.eq.s32.totalorder %s34, 0
      %p155 = por %p153, %p154
      %s157 = sadd.s32 %s156, 1
      %p160 = scmp.eq.s32.totalorder %s28, 3
      %p161 = scmp.ne.s32.totalorder %s156, %s158
      %p162 = scmp.eq.s32.totalorder %s28, 0
      %p163 = por %p161, %p162
      %p164 = scmp.ne.s32.totalorder %s156, %s158
      %p165 = scmp.eq.s32.totalorder %s33, 3
      %p166 = por %p164, %p165
      %p167 = scmp.ne.s32.totalorder %s158, %s159
      %p168 = scmp.eq.s32.totalorder %s33, 0
      %p169 = por %p167, %p168
      %p170 = scmp.ne.s32.totalorder %s158, %s159
      %p171 = scmp.eq.s32.totalorder %s34, 3
      %p172 = por %p170, %p171
      %p174 = scmp.ne.s32.totalorder %s159, %s173
      %p175 = scmp.eq.s32.totalorder %s34, 0
      %p176 = por %p174, %p175
      %s178 = sadd.s32 %s177, 1
      %p181 = scmp.eq.s32.totalorder %s28, 3
      %p182 = scmp.ne.s32.totalorder %s177, %s179
      %p183 = scmp.eq.s32.totalorder %s28, 0
      %p184 = por %p182, %p183
      %p185 = scmp.ne.s32.totalorder %s177, %s179
      %p186 = scmp.eq.s32.totalorder %s33, 3
      %p187 = por %p185, %p186
      %p188 = scmp.ne.s32.totalorder %s179, %s180
      %p189 = scmp.eq.s32.totalorder %s33, 0
      %p190 = por %p188, %p189
      %p191 = scmp.ne.s32.totalorder %s179, %s180
      %p192 = scmp.eq.s32.totalorder %s34, 3
      %p193 = por %p191, %p192
      %p195 = scmp.ne.s32.totalorder %s180, %s194
      %p196 = scmp.eq.s32.totalorder %s34, 0
      %p197 = por %p195, %p196
      %s198 = ssub.s32 %s28, %s35
      %p199 = scmp.eq.s32.totalorder %s198, 0
      %s201 = sadd.s32 %s200, 1
      %s202 = scalar_select %p199, %s200, %s201
      %p205 = pneg %p199
      %p206 = scmp.eq.s32.totalorder %s28, 3
      %p207 = por %p205, %p206
      %p208 = scmp.ne.s32.totalorder %s200, %s203
      %p209 = scmp.eq.s32.totalorder %s28, 0
      %p210 = por %p208, %p209
      %p211 = scmp.ne.s32.totalorder %s200, %s203
      %p212 = scmp.eq.s32.totalorder %s33, 3
      %p213 = por %p211, %p212
      %p214 = scmp.ne.s32.totalorder %s203, %s204
      %p215 = scmp.eq.s32.totalorder %s33, 0
      %p216 = por %p214, %p215
      %p217 = scmp.ne.s32.totalorder %s203, %s204
      %p218 = scmp.eq.s32.totalorder %s34, 3
      %p219 = por %p217, %p218
      %p221 = scmp.ne.s32.totalorder %s204, %s220
      %p222 = scmp.eq.s32.totalorder %s34, 0
      %p223 = por %p221, %p222
      %s224 = ssub.s32 %s28, %s35
      %p225 = scmp.eq.s32.totalorder %s224, 0
      %s227 = sadd.s32 %s226, 1
      %s228 = scalar_select %p225, %s226, %s227
      %p231 = pneg %p225
      %p232 = scmp.eq.s32.totalorder %s28, 3
      %p233 = por %p231, %p232
      %p234 = scmp.ne.s32.totalorder %s226, %s229
      %p235 = scmp.eq.s32.totalorder %s28, 0
      %p236 = por %p234, %p235
      %p237 = scmp.ne.s32.totalorder %s226, %s229
      %p238 = scmp.eq.s32.totalorder %s33, 3
      %p239 = por %p237, %p238
      %p240 = scmp.ne.s32.totalorder %s229, %s230
      %p241 = scmp.eq.s32.totalorder %s33, 0
      %p242 = por %p240, %p241
      %p243 = scmp.ne.s32.totalorder %s229, %s230
      %p244 = scmp.eq.s32.totalorder %s34, 3
      %p245 = por %p243, %p244
      %p247 = scmp.ne.s32.totalorder %s230, %s246
      %p248 = scmp.eq.s32.totalorder %s34, 0
      %p249 = por %p247, %p248
      %s250 = ssub.s32 %s28, %s35
      %p251 = scmp.eq.s32.totalorder %s250, 0
      %s253 = sadd.s32 %s252, 1
      %s254 = scalar_select %p251, %s252, %s253
      %p257 = pneg %p251
      %p258 = scmp.eq.s32.totalorder %s28, 3
      %p259 = por %p257, %p258
      %p260 = scmp.ne.s32.totalorder %s252, %s255
      %p261 = scmp.eq.s32.totalorder %s28, 0
      %p262 = por %p260, %p261
      %p263 = scmp.ne.s32.totalorder %s252, %s255
      %p264 = scmp.eq.s32.totalorder %s33, 3
      %p265 = por %p263, %p264
      %p266 = scmp.ne.s32.totalorder %s255, %s256
      %p267 = scmp.eq.s32.totalorder %s33, 0
      %p268 = por %p266, %p267
      %p269 = scmp.ne.s32.totalorder %s255, %s256
      %p270 = scmp.eq.s32.totalorder %s34, 3
      %p271 = por %p269, %p270
      %p273 = scmp.ne.s32.totalorder %s256, %s272
      %p274 = scmp.eq.s32.totalorder %s34, 0
      %p275 = por %p273, %p274
      %p276 = scmp.le.s32.totalorder 1, %s28
      %p277 = scmp.lt.s32.totalorder %s28, 5
      %p278 = pnand %p276, %p277
      %p279 = pneg %p278
      // Predicated region
      $region9: #{tpu_custom_call.1} parent=5 // pred_check
        _
      $region10: #{tpu_custom_call.1} parent=5 // pred_check_branch
        %281 = sbr.rel (%p278) target = $region12
      $region11: #{tpu_custom_call.1} parent=5 // pred_region
        %s282 = ssub.s32 %s28, 1
        // Predicated region
        $region13: #{tpu_custom_call.1} parent=11 // pred_check
          %p283 = pneg %p127
        $region14: #{tpu_custom_call.1} parent=11 // pred_check_branch
          %285 = sbr.rel (%p283) target = $region16
        $region15: #{tpu_custom_call.1} parent=11 // pred_region
          _
        $region16: #{tpu_custom_call.1} parent=11 // pred_fallthru
          _
        // Predicated region
        $region17: #{tpu_custom_call.1} parent=11 // pred_check
          %p286 = pneg %p148
        $region18: #{tpu_custom_call.1} parent=11 // pred_check_branch
          %288 = sbr.rel (%p286) target = $region20
        $region19: #{tpu_custom_call.1} parent=11 // pred_region
          _
        $region20: #{tpu_custom_call.1} parent=11 // pred_fallthru
          _
        // Predicated region
        $region21: #{tpu_custom_call.1} parent=11 // pred_check
          %p289 = pneg %p169
        $region22: #{tpu_custom_call.1} parent=11 // pred_check_branch
          %291 = sbr.rel (%p289) target = $region24
        $region23: #{tpu_custom_call.1} parent=11 // pred_region
          _
        $region24: #{tpu_custom_call.1} parent=11 // pred_fallthru
          _
        // Predicated region
        $region25: #{tpu_custom_call.1} parent=11 // pred_check
          %p292 = pneg %p190
        $region26: #{tpu_custom_call.1} parent=11 // pred_check_branch
          %294 = sbr.rel (%p292) target = $region28
        $region27: #{tpu_custom_call.1} parent=11 // pred_region
          _
        $region28: #{tpu_custom_call.1} parent=11 // pred_fallthru
          _
      $region12: #{tpu_custom_call.1} parent=5 // pred_fallthru
        _
      %p295 = scmp.lt.s32.totalorder %s28, 4
      // Predicated region
      $region29: #{tpu_custom_call.1} parent=5 // pred_check
        %p296 = pneg %p295
      $region30: #{tpu_custom_call.1} parent=5 // pred_check_branch
        %298 = sbr.rel (%p296) target = $region32
      $region31: #{tpu_custom_call.1} parent=5 // pred_region
        // Predicated region
        $region33: #{tpu_custom_call.1} parent=31 // pred_check
          %p299 = pneg %p48
        $region34: #{tpu_custom_call.1} parent=31 // pred_check_branch
          %301 = sbr.rel (%p299) target = $region36
        $region35: #{tpu_custom_call.1} parent=31 // pred_region
          %s302 = sand.u32 %s38, 1
          %s303 = scalar_lea.sflag [#allocation5], %s302
          %s304 = sand.u32 %s38, 1
          %s305 = smul.addr %s304, 128
          %s306 = scalar_lea.vmem [#allocation4], %s305
          %s307 = smul.u32 2, %s28
          %s309 = ssub.s32 2048, 2048
          %310 = vsyncadd %s303, %s309
          %s311 = smul.addr %s307, 128
          %s312 = scalar_lea.hbm %s0, %s311
          %s313 = sshll.u32 %s306, 4
          %s314 = int_to_ptr.vmem [resolvable:$true] %s313
          %319 = dma.hbm_to_vmem [thread:$0]  %s312, 2048, %s314, %s303, 1024, 256, 16
        $region36: #{tpu_custom_call.1} parent=31 // pred_fallthru
          _
        // Predicated region
        $region37: #{tpu_custom_call.1} parent=31 // pred_check
          %p320 = pneg %p74
        $region38: #{tpu_custom_call.1} parent=31 // pred_check_branch
          %322 = sbr.rel (%p320) target = $region40
        $region39: #{tpu_custom_call.1} parent=31 // pred_region
          %s323 = sand.u32 %s28, 1
          %s324 = scalar_lea.sflag [#allocation8], %s323
          %s325 = sand.u32 %s64, 1
          %s326 = smul.addr %s325, 128
          %s327 = scalar_lea.vmem [#allocation7], %s326
          %s328 = smul.u32 2, %s28
          %s330 = ssub.s32 2048, 2048
          %331 = vsyncadd %s324, %s330
          %s332 = smul.addr %s328, 128
          %s333 = scalar_lea.hbm %s1, %s332
          %s334 = sshll.u32 %s327, 4
          %s335 = int_to_ptr.vmem [resolvable:$true] %s334
          %340 = dma.hbm_to_vmem [thread:$0]  %s333, 2048, %s335, %s324, 1024, 256, 16
        $region40: #{tpu_custom_call.1} parent=31 // pred_fallthru
          _
        // Predicated region
        $region41: #{tpu_custom_call.1} parent=31 // pred_check
          %p341 = pneg %p100
        $region42: #{tpu_custom_call.1} parent=31 // pred_check_branch
          %343 = sbr.rel (%p341) target = $region44
        $region43: #{tpu_custom_call.1} parent=31 // pred_region
          %s344 = sand.u32 %s28, 1
          %s345 = scalar_lea.sflag [#allocation8], %s344
          %s346 = sand.u32 %s90, 1
          %s347 = smul.addr %s346, 128
          %s348 = scalar_lea.vmem [#allocation9], %s347
          %s349 = smul.u32 2, %s28
          %s351 = ssub.s32 2048, 2048
          %352 = vsyncadd %s345, %s351
          %s353 = smul.addr %s349, 128
          %s354 = scalar_lea.hbm %s2, %s353
          %s355 = sshll.u32 %s348, 4
          %s356 = int_to_ptr.vmem [resolvable:$true] %s355
          %361 = dma.hbm_to_vmem [thread:$0]  %s354, 2048, %s356, %s345, 1024, 256, 16
        $region44: #{tpu_custom_call.1} parent=31 // pred_fallthru
          _
      $region32: #{tpu_custom_call.1} parent=5 // pred_fallthru
        _
      %p362 = scmp.le.s32.totalorder 1, %s28
      %p363 = scmp.lt.s32.totalorder %s28, 5
      %p364 = pnand %p362, %p363
      %p365 = pneg %p364
      // Predicated region
      $region45: #{tpu_custom_call.1} parent=5 // pred_check
        _
      $region46: #{tpu_custom_call.1} parent=5 // pred_check_branch
        %367 = sbr.rel (%p364) target = $region48
      $region47: #{tpu_custom_call.1} parent=5 // pred_region
        %s368 = ssub.s32 %s28, 1
        %s369 = sand.u32 %s41, 1
        %s370 = scalar_lea.sflag [#allocation5], %s369
        %s371 = sand.u32 %s41, 1
        %s372 = smul.addr %s371, 128
        %s373 = scalar_lea.vmem [#allocation4], %s372
        // Predicated region
        $region49: #{tpu_custom_call.1} parent=47 // pred_check
          %p374 = pneg %p54
        $region50: #{tpu_custom_call.1} parent=47 // pred_check_branch
          %376 = sbr.rel (%p374) target = $region52
        $region51: #{tpu_custom_call.1} parent=47 // pred_region
          %377 = dma.done %s370, 2048
        $region52: #{tpu_custom_call.1} parent=47 // pred_fallthru
          _
        %s378 = sand.u32 %s33, 1
        %s379 = scalar_lea.sflag [#allocation8], %s378
        %s380 = sand.u32 %s67, 1
        %s381 = smul.addr %s380, 128
        %s382 = scalar_lea.vmem [#allocation7], %s381
        // Predicated region
        $region53: #{tpu_custom_call.1} parent=47 // pred_check
          %p383 = pneg %p80
        $region54: #{tpu_custom_call.1} parent=47 // pred_check_branch
          %385 = sbr.rel (%p383) target = $region56
        $region55: #{tpu_custom_call.1} parent=47 // pred_region
          %386 = dma.done %s379, 2048
        $region56: #{tpu_custom_call.1} parent=47 // pred_fallthru
          _
        %s387 = sand.u32 %s33, 1
        %s388 = scalar_lea.sflag [#allocation8], %s387
        %s389 = sand.u32 %s93, 1
        %s390 = smul.addr %s389, 128
        %s391 = scalar_lea.vmem [#allocation9], %s390
        // Predicated region
        $region57: #{tpu_custom_call.1} parent=47 // pred_check
          %p392 = pneg %p106
        $region58: #{tpu_custom_call.1} parent=47 // pred_check_branch
          %394 = sbr.rel (%p392) target = $region60
        $region59: #{tpu_custom_call.1} parent=47 // pred_region
          %395 = dma.done %s388, 2048
        $region60: #{tpu_custom_call.1} parent=47 // pred_fallthru
          _
        %s396 = sand.u32 %s41, 1
        %s397 = scalar_lea.sflag [#allocation5], %s396
        %s398 = sand.u32 %s41, 1
        %s399 = smul.addr %s398, 128
        %s400 = scalar_lea.vmem [#allocation4], %s399
        %p401 = pneg %p54
        %p402 = pneg %p51
        %s403 = sand.u32 %s33, 1
        %s404 = scalar_lea.sflag [#allocation8], %s403
        %s405 = sand.u32 %s67, 1
        %s406 = smul.addr %s405, 128
        %s407 = scalar_lea.vmem [#allocation7], %s406
        %p408 = pneg %p80
        %p409 = pneg %p77
        %s410 = sand.u32 %s33, 1
        %s411 = scalar_lea.sflag [#allocation8], %s410
        %s412 = sand.u32 %s93, 1
        %s413 = smul.addr %s412, 128
        %s414 = scalar_lea.vmem [#allocation9], %s413
        %p415 = pneg %p106
        %p416 = pneg %p103
        %p417 = pneg %p127
        %p418 = pneg %p124
        %p419 = pneg %p148
        %p420 = pneg %p145
        %p421 = pneg %p169
        %p422 = pneg %p166
        %p423 = pneg %p190
        %p424 = pneg %p187
        %p425 = pneg %p216
        %p426 = pneg %p213
        %s427 = sand.u32 %s203, 1
        %s428 = scalar_lea.sflag [#allocation6], %s427
        %s429 = sand.u32 %s203, 1
        %s430 = smul.addr %s429, 128
        %s431 = scalar_lea.vmem [#allocation10], %s430
        %p432 = pneg %p242
        %p433 = pneg %p239
        %s434 = sand.u32 %s33, 1
        %s435 = scalar_lea.sflag [#allocation12], %s434
        %s436 = sand.u32 %s229, 1
        %s437 = smul.addr %s436, 128
        %s438 = scalar_lea.vmem [#allocation11], %s437
        %p439 = pneg %p268
        %p440 = pneg %p265
        %s441 = sand.u32 %s33, 1
        %s442 = scalar_lea.sflag [#allocation12], %s441
        %s443 = sand.u32 %s255, 1
        %s444 = smul.addr %s443, 128
        %s445 = scalar_lea.vmem [#allocation13], %s444
        %s446 = smul.u32 2, %s33
        %s447 = smul.u32 2, %s33
        %s448 = smul.u32 2, %s33
        %s449 = smul.u32 2, %s33
        %s450 = smul.u32 2, %s33
        %s451 = smul.u32 2, %s33
        %455 = vst [vmem:[#allocation2] sm:$0xff] 0
        %456 = vst [vmem:[#allocation2 + $0x20] sm:$0xff] 0
        %457 = vst [vmem:[#allocation2 + $0x18] sm:$0xff] 0
        %458 = vst [vmem:[#allocation2 + $0x38] sm:$0xff] 0
        %v459 = vlaneseq
        %v460 = vand.u32 %v459, 127
        %v461 = vadd.s32 %v460, 128
        %vm462 = vcmp.lt.s32.totalorder %v460, 0
        %v463 = vsub.s32 0, %v460
        %v464 = vsel %vm462, %v463, %v460
        %v465 = vshrl.u32 %v464, 4
        %v466 = vand.u32 %v464, 15
        %v467 = vsub.s32 0, %v466
        %v468 = vsel %vm462, %v467, %v466
        %vm469 = vcmp.lt.s32.totalorder %v461, 0
        %v470 = vsub.s32 0, %v461
        %v471 = vsel %vm469, %v470, %v461
        %v472 = vshrl.u32 %v471, 4
        %v473 = vand.u32 %v471, 15
        %v474 = vsub.s32 0, %v473
        %v475 = vsel %vm469, %v474, %v473
        %vm476 = vcmp.lt.s32.totalorder %v460, 0
        %v477 = vsub.s32 0, %v460
        %v478 = vsel %vm476, %v477, %v460
        %v479 = vshrl.u32 %v478, 8
        %v480 = vand.u32 %v478, 255
        %v481 = vsub.s32 0, %v480
        %v482 = vsel %vm476, %v481, %v480
        %vm483 = vcmp.lt.s32.totalorder %v461, 0
        %v484 = vsub.s32 0, %v461
        %v485 = vsel %vm483, %v484, %v461
        %v486 = vshrl.u32 %v485, 8
        %v487 = vand.u32 %v485, 255
        %v488 = vsub.s32 0, %v487
        %v489 = vsel %vm483, %v488, %v487
        %v490 = vsub.s32 %v482, %v468
        %v491 = vsub.s32 %v489, %v475
        %v492 = vld [vmem:[%s3] sm:$0xf]
        %v493 = vld [vmem:[%s3 + $0x4] sm:$0xf]
        %v494 = vld [vmem:[%s3 + $0x8] sm:$0xf]
        %v495 = vld [vmem:[%s3 + $0xc] sm:$0xf]
        %v496 = vld [vmem:[%s4] sm:$0xff]
        %v497 = vld [vmem:[%s4 + $0x8] sm:$0xf]
        %v498 = vld [vmem:[%s4 + $0xc] sm:$0xff]
        %v499 = vld [vmem:[%s4 + $0x14] sm:$0xf]
        %v500 = vld [vmem:[%s4 + $0x18] sm:$0xff]
        %v501 = vld [vmem:[%s4 + $0x20] sm:$0xf]
        %v502 = vld [vmem:[%s4 + $0x24] sm:$0xff]
        %v503 = vld [vmem:[%s4 + $0x2c] sm:$0xf]
        %v504 = vld [vmem:[%s4 + $0x30] sm:$0xff]
        %v505 = vld [vmem:[%s4 + $0x38] sm:$0xf]
        %v506 = vld [vmem:[%s4 + $0x3c] sm:$0xff]
        %v507 = vld [vmem:[%s4 + $0x44] sm:$0xf]
        %v508 = vld [vmem:[%s4 + $0x48] sm:$0xff]
        %v509 = vld [vmem:[%s4 + $0x50] sm:$0xf]
        %v510 = vld [vmem:[%s4 + $0x54] sm:$0xff]
        %v511 = vld [vmem:[%s4 + $0x5c] sm:$0xf]
        %v512 = vld [vmem:[%s5] sm:$0xff]
        %v513 = vld [vmem:[%s5 + $0x8] sm:$0xff]
        %v514 = vld [vmem:[%s5 + $0x10] sm:$0xff]
        %v515 = vld [vmem:[%s5 + $0x18] sm:$0xff]
        %v516 = vld [vmem:[%s6] sm:$0xff]
        %v517 = vld [vmem:[%s6 + $0x8] sm:$0xff]
        %v518 = vld [vmem:[%s6 + $0x10] sm:$0xff]
        %v519 = vld [vmem:[%s6 + $0x18] sm:$0xff]
        %v520 = vld [vmem:[%s6 + $0x20] sm:$0xff]
        %v521 = vld [vmem:[%s6 + $0x28] sm:$0xff]
        %v522 = vld [vmem:[%s6 + $0x30] sm:$0xff]
        %v523 = vld [vmem:[%s6 + $0x38] sm:$0xff]
        %v524 = vld [vmem:[%s373] sm:$0xff]
        %v525 = vld [vmem:[%s373 + $0x8] sm:$0xff]
        %v526 = vld [vmem:[%s373 + $0x10] sm:$0xff]
        %v527 = vld [vmem:[%s373 + $0x18] sm:$0xff]
        %v528 = vld [vmem:[%s373 + $0x20] sm:$0xff]
        %v529 = vld [vmem:[%s373 + $0x28] sm:$0xff]
        %v530 = vld [vmem:[%s373 + $0x30] sm:$0xff]
        %v531 = vld [vmem:[%s373 + $0x38] sm:$0xff]
        %v532 = vld [vmem:[%s373 + $0x40] sm:$0xff]
        %v533 = vld [vmem:[%s373 + $0x48] sm:$0xff]
        %v534 = vld [vmem:[%s373 + $0x50] sm:$0xff]
        %v535 = vld [vmem:[%s373 + $0x58] sm:$0xff]
        %v536 = vld [vmem:[%s373 + $0x60] sm:$0xff]
        %v537 = vld [vmem:[%s373 + $0x68] sm:$0xff]
        %v538 = vld [vmem:[%s373 + $0x70] sm:$0xff]
        %v539 = vld [vmem:[%s373 + $0x78] sm:$0xff]
        %v540 = vpack.c.bf16 %v526, %v524
        %v541 = vpack.c.bf16 %v527, %v525
        %v542 = vpack.c.bf16 %v530, %v528
        %v543 = vpack.c.bf16 %v531, %v529
        %v544 = vpack.c.bf16 %v534, %v532
        %v545 = vpack.c.bf16 %v535, %v533
        %v546 = vpack.c.bf16 %v538, %v536
        %v547 = vpack.c.bf16 %v539, %v537
        %549 = vset.pattern.permute.xlu0 0
        %550 = vperm.xlu0 %549, %v512
        %v551 = vpop.permute.xlu0 %550
        %554 = vset.pattern.permute.xlu0 0
        %555 = vperm.xlu0 %554, %v513
        %v556 = vpop.permute.xlu0 %555
        %559 = vset.pattern.permute.xlu0 0
        %560 = vperm.xlu0 %559, %v514
        %v561 = vpop.permute.xlu0 %560
        %564 = vset.pattern.permute.xlu0 0
        %565 = vperm.xlu0 %564, %v515
        %v566 = vpop.permute.xlu0 %565
        %v572 = vunpack.c.l.b16 %v492
        %v573 = vunpack.c.l.b16 %v493
        %v574 = vunpack.c.l.b16 %v494
        %v575 = vunpack.c.l.b16 %v495
        %v576 = vpack.c.b16 %v573, %v572
        %v577 = vpack.c.b16 %v575, %v574
        %vm578 = vcmask 523264
        %v580 = vsel %vm578, %v576, 0
        %v583 = vsel %vm578, %v577, 0
        %585 = vmatprep.subr.bf16.mxu0 %v541
        %586 = vmatpush1.bf16.msra.mxu0 %v540
        %587 = vmatprep.subr.bf16.mxu0 %v543
        %588 = vmatpush1.bf16.msra.mxu0 %v542
        %589 = vmatprep.subr.bf16.mxu0 %v545
        %590 = vmatpush1.bf16.msra.mxu0 %v544
        %591 = vmatprep.subr.bf16.mxu0 %v547
        %592 = vmatpush1.bf16.msra.mxu0 %v546
        %593 = vmatprep.subr.bf16.mxu0 0
        %594 = vmatpush1.bf16.msra.mxu0 0
        %595 = vmatprep.subr.bf16.mxu0 0
        %596 = vmatpush1.bf16.msra.mxu0 0
        %597 = vmatprep.subr.bf16.mxu0 0
        %598 = vmatpush1.bf16.msra.mxu0 0
        %599 = vmatprep.subr.bf16.mxu0 0
        %600 = vmatpush1.bf16.msra.mxu0 0
        %601 = vmatprep.subr.bf16.mxu0 0
        %602 = vmatpush1.bf16.msra.mxu0 0
        %603 = vmatprep.subr.bf16.mxu0 0
        %604 = vmatpush1.bf16.msra.mxu0 0
        %605 = vmatprep.subr.bf16.mxu0 0
        %606 = vmatpush1.bf16.msra.mxu0 0
        %607 = vmatprep.subr.bf16.mxu0 0
        %608 = vmatpush1.bf16.msra.mxu0 0
        %609 = vmatprep.subr.bf16.mxu0 0
        %610 = vmatpush1.bf16.msra.mxu0 0
        %611 = vmatprep.subr.bf16.mxu0 0
        %612 = vmatpush1.bf16.msra.mxu0 0
        %613 = vmatprep.subr.bf16.mxu0 0
        %614 = vmatpush1.bf16.msra.mxu0 0
        %615 = vmatprep.subr.bf16.mxu0 0
        %616 = vmatpush1.bf16.msra.mxu0 0
        %617 = vmatprep.mubr.bf16.mxu0 0
        %618 = vmatmul.mubr.bf16.gmra.mrb[0].mxu0 %v580
        %v619 = vpop.f32.mrb[0].mxu0
        %v620 = vadd.f32 %v551, %v619
        %v621 = vpop.f32.mrb[0].mxu0
        %v622 = vadd.f32 %v551, %v621
        %v623 = vpop.f32.mrb[0].mxu0
        %v624 = vadd.f32 %v556, %v623
        %v625 = vpop.f32.mrb[0].mxu0
        %v626 = vadd.f32 %v556, %v625
        %627 = vmatprep.mubr.bf16.mxu0 0
        %628 = vmatmul.mubr.bf16.gmra.mrb[0].mxu0 %v583
        %v629 = vpop.f32.mrb[0].mxu0
        %v630 = vadd.f32 %v561, %v629
        %v631 = vpop.f32.mrb[0].mxu0
        %v632 = vadd.f32 %v561, %v631
        %v633 = vpop.f32.mrb[0].mxu0
        %v634 = vadd.f32 %v566, %v633
        %v635 = vpop.f32.mrb[0].mxu0
        %v636 = vadd.f32 %v566, %v635
        %637 = vdwg.mxu0
        %v638 = vxor.u32 %v620, 2147483648
        %v639 = vxor.u32 %v622, 2147483648
        %v640 = vxor.u32 %v624, 2147483648
        %v641 = vxor.u32 %v626, 2147483648
        %v642 = vxor.u32 %v630, 2147483648
        %v643 = vxor.u32 %v632, 2147483648
        %v644 = vxor.u32 %v634, 2147483648
        %v645 = vxor.u32 %v636, 2147483648
        %v646 = vmul.f32 %v638, 1.442695
        %v647 = vpow.pop %v646
        %v648 = vmul.f32 %v639, 1.442695
        %v649 = vpow.pop %v648
        %v650 = vmul.f32 %v640, 1.442695
        %v651 = vpow.pop %v650
        %v652 = vmul.f32 %v641, 1.442695
        %v653 = vpow.pop %v652
        %v654 = vmul.f32 %v642, 1.442695
        %v655 = vpow.pop %v654
        %v656 = vmul.f32 %v643, 1.442695
        %v657 = vpow.pop %v656
        %v658 = vmul.f32 %v644, 1.442695
        %v659 = vpow.pop %v658
        %v660 = vmul.f32 %v645, 1.442695
        %v661 = vpow.pop %v660
        %v662 = vadd.f32 %v647, 1.0
        %v663 = vadd.f32 %v649, 1.0
        %v664 = vadd.f32 %v651, 1.0
        %v665 = vadd.f32 %v653, 1.0
        %v666 = vadd.f32 %v655, 1.0
        %v667 = vadd.f32 %v657, 1.0
        %v668 = vadd.f32 %v659, 1.0
        %v669 = vadd.f32 %v661, 1.0
        %v670 = vrcp.pop %v662
        %v671 = vmul.f32 1.0, %v670
        %v672 = vrcp.pop %v663
        %v673 = vmul.f32 1.0, %v672
        %v674 = vrcp.pop %v664
        %v675 = vmul.f32 1.0, %v674
        %v676 = vrcp.pop %v665
        %v677 = vmul.f32 1.0, %v676
        %v678 = vrcp.pop %v666
        %v679 = vmul.f32 1.0, %v678
        %v680 = vrcp.pop %v667
        %v681 = vmul.f32 1.0, %v680
        %v682 = vrcp.pop %v668
        %v683 = vmul.f32 1.0, %v682
        %v684 = vrcp.pop %v669
        %v685 = vmul.f32 1.0, %v684
        %v686 = vmul.f32 %v620, %v671
        %v687 = vmul.f32 %v622, %v673
        %v688 = vmul.f32 %v624, %v675
        %v689 = vmul.f32 %v626, %v677
        %v690 = vmul.f32 %v630, %v679
        %v691 = vmul.f32 %v632, %v681
        %v692 = vmul.f32 %v634, %v683
        %v693 = vmul.f32 %v636, %v685
        %v694 = vpack.c.bf16 %v688, %v686
        %v695 = vpack.c.bf16 %v689, %v687
        %v696 = vpack.c.bf16 %v692, %v690
        %v697 = vpack.c.bf16 %v693, %v691
        %698 = vst [vmem:[#allocation2 + $0x8] sm:$0xff] %v694
        %699 = vst [vmem:[#allocation2 + $0x10] sm:$0xff] %v695
        %700 = vst [vmem:[#allocation2 + $0x28] sm:$0xff] %v696
        %701 = vst [vmem:[#allocation2 + $0x30] sm:$0xff] %v697
        %vm702 = vcmp.ge.s32.totalorder %v490, 16
        %vm703 = vcmp.ge.s32.totalorder %v491, 16
        %v704 = vld [vmem:[#allocation2] sm:$0xff]
        %v705 = vld [vmem:[#allocation2 + $0x8] sm:$0xff]
        %v706 = vld [vmem:[#allocation2 + $0x10] sm:$0xff]
        %v707 = vld [vmem:[#allocation2 + $0x20] sm:$0xff]
        %v708 = vld [vmem:[#allocation2 + $0x28] sm:$0xff]
        %v709 = vld [vmem:[#allocation2 + $0x30] sm:$0xff]
        %vm710 = vcmp.ge.s32.totalorder %v468, 1
        %vm711 = vcmp.ge.s32.totalorder %v475, 1
        %vm712 = vmand %vm702, %vm710
        %vm713 = vmand %vm703, %vm711
        %v714 = vsel %vm712, 1, 0
        %v715 = vsel %vm713, 1, 0
        %vm716 = vcmp.eq.s32.totalorder %v714, 1
        %vm717 = vcmp.eq.s32.totalorder %v715, 1
        %vm718 = vmpackc.low %vm717, %vm716
        %v719 = vsel %vm718, 65537, 0
        %v720 = vlaneseq
        %v721 = vshrl.u32 %v720, 7
        %v722 = vsub.s32 0, %v721
        %v723 = vrot.slane %v719, %v722
        %v724 = vlaneseq
        %v725 = vshrl.u32 %v724, 7
        %v726 = vsub.s32 4, %v725
        %v727 = vrot.slane %v719, %v726
        %728 = vrot.lane.b32.xlu0 %v723, 111
        %v729 = vpop.permute.xlu0 %728
        %730 = vrot.lane.b32.xlu0 %v727, 111
        %v731 = vpop.permute.xlu0 %730
        %vm732 = vcmask 908288
        %v733 = vsel %vm732, %v729, %v731
        %vm734 = vcmp.ne.s16.totalorder %v729, 0
        %vm735 = vcmp.ne.s16.totalorder %v733, 0
        %vm736 = vcmp.ne.s16.totalorder %v731, 0
        %v737 = vsel %vm734, %v704, 0
        %v738 = vsel %vm735, %v705, 0
        %v739 = vsel %vm736, %v706, 0
        %v740 = vsel %vm734, %v707, 0
        %v741 = vsel %vm735, %v708, 0
        %v742 = vsel %vm736, %v709, 0
        %749 = vrot.lane.b32.xlu0 %v737, 17
        %v750 = vpop.permute.xlu0 %749
        %751 = vrot.lane.b32.xlu0 %v738, 17
        %v752 = vpop.permute.xlu0 %751
        %753 = vrot.lane.b32.xlu0 %v739, 17
        %v754 = vpop.permute.xlu0 %753
        %755 = vrot.lane.b32.xlu0 %v740, 17
        %v756 = vpop.permute.xlu0 %755
        %757 = vrot.lane.b32.xlu0 %v741, 17
        %v758 = vpop.permute.xlu0 %757
        %759 = vrot.lane.b32.xlu0 %v742, 17
        %v760 = vpop.permute.xlu0 %759
        %vm761 = vcmask 138240
        %v762 = vsel %vm761, %v750, %v752
        %v763 = vsel %vm761, %v752, %v754
        %v764 = vsel %vm761, %v756, %v758
        %v765 = vsel %vm761, %v758, %v760
        %770 = vst [vmem:[#allocation3] sm:$0xff] %v762
        %771 = vst [vmem:[#allocation3 + $0x8] sm:$0xff] %v763
        %772 = vst [vmem:[#allocation3 + $0x10] sm:$0xff] %v764
        %773 = vst [vmem:[#allocation3 + $0x18] sm:$0xff] %v765
        %v774 = vld [vmem:[#allocation2] sm:$0xff]
        %v775 = vld [vmem:[#allocation2 + $0x8] sm:$0xff]
        %v776 = vld [vmem:[#allocation2 + $0x10] sm:$0xff]
        %v777 = vld [vmem:[#allocation2 + $0x20] sm:$0xff]
        %v778 = vld [vmem:[#allocation2 + $0x28] sm:$0xff]
        %v779 = vld [vmem:[#allocation2 + $0x30] sm:$0xff]
        %v780 = vsel %vm702, 1, 0
        %v781 = vsel %vm703, 1, 0
        %vm782 = vcmp.eq.s32.totalorder %v780, 1
        %vm783 = vcmp.eq.s32.totalorder %v781, 1
        %vm784 = vmpackc.low %vm783, %vm782
        %v785 = vsel %vm784, 65537, 0
        %v786 = vlaneseq
        %v787 = vshrl.u32 %v786, 7
        %v788 = vsub.s32 0, %v787
        %v789 = vrot.slane %v785, %v788
        %v790 = vlaneseq
        %v791 = vshrl.u32 %v790, 7
        %v792 = vsub.s32 4, %v791
        %v793 = vrot.slane %v785, %v792
        %794 = vrot.lane.b32.xlu0 %v789, 112
        %v795 = vpop.permute.xlu0 %794
        %796 = vrot.lane.b32.xlu0 %v793, 112
        %v797 = vpop.permute.xlu0 %796
        %vm798 = vcmask 916480
        %v799 = vsel %vm798, %v795, %v797
        %vm800 = vcmp.ne.s16.totalorder %v795, 0
        %vm801 = vcmp.ne.s16.totalorder %v799, 0
        %vm802 = vcmp.ne.s16.totalorder %v797, 0
        %v803 = vsel %vm800, %v774, 0
        %v804 = vsel %vm801, %v775, 0
        %v805 = vsel %vm802, %v776, 0
        %v806 = vsel %vm800, %v777, 0
        %v807 = vsel %vm801, %v778, 0
        %v808 = vsel %vm802, %v779, 0
        %815 = vrot.lane.b32.xlu0 %v803, 16
        %v816 = vpop.permute.xlu0 %815
        %817 = vrot.lane.b32.xlu0 %v804, 16
        %v818 = vpop.permute.xlu0 %817
        %819 = vrot.lane.b32.xlu0 %v805, 16
        %v820 = vpop.permute.xlu0 %819
        %821 = vrot.lane.b32.xlu0 %v806, 16
        %v822 = vpop.permute.xlu0 %821
        %823 = vrot.lane.b32.xlu0 %v807, 16
        %v824 = vpop.permute.xlu0 %823
        %825 = vrot.lane.b32.xlu0 %v808, 16
        %v826 = vpop.permute.xlu0 %825
        %vm827 = vcmask 130048
        %v828 = vsel %vm827, %v816, %v818
        %v829 = vsel %vm827, %v818, %v820
        %v830 = vsel %vm827, %v822, %v824
        %v831 = vsel %vm827, %v824, %v826
        %836 = vst [vmem:[#allocation3 + $0x20] sm:$0xff] %v828
        %837 = vst [vmem:[#allocation3 + $0x28] sm:$0xff] %v829
        %838 = vst [vmem:[#allocation3 + $0x30] sm:$0xff] %v830
        %839 = vst [vmem:[#allocation3 + $0x38] sm:$0xff] %v831
        %v840 = vld [vmem:[#allocation2] sm:$0xff]
        %v841 = vld [vmem:[#allocation2 + $0x8] sm:$0xff]
        %v842 = vld [vmem:[#allocation2 + $0x10] sm:$0xff]
        %v843 = vld [vmem:[#allocation2 + $0x20] sm:$0xff]
        %v844 = vld [vmem:[#allocation2 + $0x28] sm:$0xff]
        %v845 = vld [vmem:[#allocation2 + $0x30] sm:$0xff]
        %vm846 = vcmp.lt.s32.totalorder %v468, 15
        %vm847 = vcmp.lt.s32.totalorder %v475, 15
        %vm848 = vmand %vm702, %vm846
        %vm849 = vmand %vm703, %vm847
        %v850 = vsel %vm848, 1, 0
        %v851 = vsel %vm849, 1, 0
        %vm852 = vcmp.eq.s32.totalorder %v850, 1
        %vm853 = vcmp.eq.s32.totalorder %v851, 1
        %vm854 = vmpackc.low %vm853, %vm852
        %v855 = vsel %vm854, 65537, 0
        %v856 = vlaneseq
        %v857 = vshrl.u32 %v856, 7
        %v858 = vsub.s32 0, %v857
        %v859 = vrot.slane %v855, %v858
        %v860 = vlaneseq
        %v861 = vshrl.u32 %v860, 7
        %v862 = vsub.s32 4, %v861
        %v863 = vrot.slane %v855, %v862
        %864 = vrot.lane.b32.xlu0 %v859, 113
        %v865 = vpop.permute.xlu0 %864
        %866 = vrot.lane.b32.xlu0 %v863, 113
        %v867 = vpop.permute.xlu0 %866
        %vm868 = vcmask 924672
        %v869 = vsel %vm868, %v865, %v867
        %vm870 = vcmp.ne.s16.totalorder %v865, 0
        %vm871 = vcmp.ne.s16.totalorder %v869, 0
        %vm872 = vcmp.ne.s16.totalorder %v867, 0
        %v873 = vsel %vm870, %v840, 0
        %v874 = vsel %vm871, %v841, 0
        %v875 = vsel %vm872, %v842, 0
        %v876 = vsel %vm870, %v843, 0
        %v877 = vsel %vm871, %v844, 0
        %v878 = vsel %vm872, %v845, 0
        %885 = vrot.lane.b32.xlu0 %v873, 15
        %v886 = vpop.permute.xlu0 %885
        %887 = vrot.lane.b32.xlu0 %v874, 15
        %v888 = vpop.permute.xlu0 %887
        %889 = vrot.lane.b32.xlu0 %v875, 15
        %v890 = vpop.permute.xlu0 %889
        %891 = vrot.lane.b32.xlu0 %v876, 15
        %v892 = vpop.permute.xlu0 %891
        %893 = vrot.lane.b32.xlu0 %v877, 15
        %v894 = vpop.permute.xlu0 %893
        %895 = vrot.lane.b32.xlu0 %v878, 15
        %v896 = vpop.permute.xlu0 %895
        %vm897 = vcmask 121856
        %v898 = vsel %vm897, %v886, %v888
        %v899 = vsel %vm897, %v888, %v890
        %v900 = vsel %vm897, %v892, %v894
        %v901 = vsel %vm897, %v894, %v896
        %906 = vst [vmem:[#allocation3 + $0x40] sm:$0xff] %v898
        %907 = vst [vmem:[#allocation3 + $0x48] sm:$0xff] %v899
        %908 = vst [vmem:[#allocation3 + $0x50] sm:$0xff] %v900
        %909 = vst [vmem:[#allocation3 + $0x58] sm:$0xff] %v901
        %v910 = vld [vmem:[#allocation2] sm:$0xff]
        %v911 = vld [vmem:[#allocation2 + $0x8] sm:$0xff]
        %v912 = vld [vmem:[#allocation2 + $0x10] sm:$0xff]
        %v913 = vld [vmem:[#allocation2 + $0x20] sm:$0xff]
        %v914 = vld [vmem:[#allocation2 + $0x28] sm:$0xff]
        %v915 = vld [vmem:[#allocation2 + $0x30] sm:$0xff]
        %v916 = vsel %vm710, 1, 0
        %v917 = vsel %vm711, 1, 0
        %vm918 = vcmp.eq.s32.totalorder %v916, 1
        %vm919 = vcmp.eq.s32.totalorder %v917, 1
        %vm920 = vmpackc.low %vm919, %vm918
        %v921 = vsel %vm920, 65537, 0
        %v922 = vlaneseq
        %v923 = vshrl.u32 %v922, 7
        %v924 = vsub.s32 0, %v923
        %v925 = vrot.slane %v921, %v924
        %v926 = vlaneseq
        %v927 = vshrl.u32 %v926, 7
        %v928 = vsub.s32 4, %v927
        %v929 = vrot.slane %v921, %v928
        %930 = vrot.lane.b32.xlu0 %v925, 127
        %v931 = vpop.permute.xlu0 %930
        %932 = vrot.lane.b32.xlu0 %v929, 127
        %v933 = vpop.permute.xlu0 %932
        %vm934 = vcmask 1039360
        %v935 = vsel %vm934, %v931, %v933
        %vm936 = vcmp.ne.s16.totalorder %v931, 0
        %vm937 = vcmp.ne.s16.totalorder %v935, 0
        %vm938 = vcmp.ne.s16.totalorder %v933, 0
        %v939 = vsel %vm936, %v910, 0
        %v940 = vsel %vm937, %v911, 0
        %v941 = vsel %vm938, %v912, 0
        %v942 = vsel %vm936, %v913, 0
        %v943 = vsel %vm937, %v914, 0
        %v944 = vsel %vm938, %v915, 0
        %951 = vrot.lane.b32.xlu0 %v939, 1
        %v952 = vpop.permute.xlu0 %951
        %953 = vrot.lane.b32.xlu0 %v940, 1
        %v954 = vpop.permute.xlu0 %953
        %955 = vrot.lane.b32.xlu0 %v941, 1
        %v956 = vpop.permute.xlu0 %955
        %957 = vrot.lane.b32.xlu0 %v942, 1
        %v958 = vpop.permute.xlu0 %957
        %959 = vrot.lane.b32.xlu0 %v943, 1
        %v960 = vpop.permute.xlu0 %959
        %961 = vrot.lane.b32.xlu0 %v944, 1
        %v962 = vpop.permute.xlu0 %961
        %vm963 = vcmask 7168
        %v964 = vsel %vm963, %v952, %v954
        %v965 = vsel %vm963, %v954, %v956
        %v966 = vsel %vm963, %v958, %v960
        %v967 = vsel %vm963, %v960, %v962
        %972 = vst [vmem:[#allocation3 + $0x60] sm:$0xff] %v964
        %973 = vst [vmem:[#allocation3 + $0x68] sm:$0xff] %v965
        %974 = vst [vmem:[#allocation3 + $0x70] sm:$0xff] %v966
        %975 = vst [vmem:[#allocation3 + $0x78] sm:$0xff] %v967
        %v976 = vld [vmem:[#allocation2 + $0x8] sm:$0xff]
        %v977 = vld [vmem:[#allocation2 + $0x10] sm:$0xff]
        %v978 = vld [vmem:[#allocation2 + $0x28] sm:$0xff]
        %v979 = vld [vmem:[#allocation2 + $0x30] sm:$0xff]
        %980 = vst [vmem:[#allocation3 + $0x80] sm:$0xff] %v976
        %981 = vst [vmem:[#allocation3 + $0x88] sm:$0xff] %v977
        %982 = vst [vmem:[#allocation3 + $0x90] sm:$0xff] %v978
        %983 = vst [vmem:[#allocation3 + $0x98] sm:$0xff] %v979
        %v984 = vld [vmem:[#allocation2 + $0x8] sm:$0xff]
        %v985 = vld [vmem:[#allocation2 + $0x10] sm:$0xff]
        %v986 = vld [vmem:[#allocation2 + $0x18] sm:$0xff]
        %v987 = vld [vmem:[#allocation2 + $0x28] sm:$0xff]
        %v988 = vld [vmem:[#allocation2 + $0x30] sm:$0xff]
        %v989 = vld [vmem:[#allocation2 + $0x38] sm:$0xff]
        %v990 = vsel %vm846, 1, 0
        %v991 = vsel %vm847, 1, 0
        %vm992 = vcmp.eq.s32.totalorder %v990, 1
        %vm993 = vcmp.eq.s32.totalorder %v991, 1
        %vm994 = vmpackc.low %vm993, %vm992
        %v995 = vsel %vm994, 65537, 0
        %v996 = vlaneseq
        %v997 = vshrl.u32 %v996, 7
        %v998 = vsub.s32 0, %v997
        %v999 = vrot.slane %v995, %v998
        %v1000 = vlaneseq
        %v1001 = vshrl.u32 %v1000, 7
        %v1002 = vsub.s32 4, %v1001
        %v1003 = vrot.slane %v995, %v1002
        %1004 = vrot.lane.b32.xlu0 %v999, 1
        %v1005 = vpop.permute.xlu0 %1004
        %1006 = vrot.lane.b32.xlu0 %v1003, 1
        %v1007 = vpop.permute.xlu0 %1006
        %v1008 = vsel %vm963, %v1005, %v1007
        %vm1009 = vcmp.ne.s16.totalorder %v1005, 0
        %vm1010 = vcmp.ne.s16.totalorder %v1008, 0
        %vm1011 = vcmp.ne.s16.totalorder %v1007, 0
        %v1012 = vsel %vm1009, %v984, 0
        %v1013 = vsel %vm1010, %v985, 0
        %v1014 = vsel %vm1011, %v986, 0
        %v1015 = vsel %vm1009, %v987, 0
        %v1016 = vsel %vm1010, %v988, 0
        %v1017 = vsel %vm1011, %v989, 0
        %1024 = vrot.lane.b32.xlu0 %v1012, 127
        %v1025 = vpop.permute.xlu0 %1024
        %1026 = vrot.lane.b32.xlu0 %v1013, 127
        %v1027 = vpop.permute.xlu0 %1026
        %1028 = vrot.lane.b32.xlu0 %v1014, 127
        %v1029 = vpop.permute.xlu0 %1028
        %1030 = vrot.lane.b32.xlu0 %v1015, 127
        %v1031 = vpop.permute.xlu0 %1030
        %1032 = vrot.lane.b32.xlu0 %v1016, 127
        %v1033 = vpop.permute.xlu0 %1032
        %1034 = vrot.lane.b32.xlu0 %v1017, 127
        %v1035 = vpop.permute.xlu0 %1034
        %v1036 = vsel %vm934, %v1025, %v1027
        %v1037 = vsel %vm934, %v1027, %v1029
        %v1038 = vsel %vm934, %v1031, %v1033
        %v1039 = vsel %vm934, %v1033, %v1035
        %1044 = vst [vmem:[#allocation3 + $0xa0] sm:$0xff] %v1036
        %1045 = vst [vmem:[#allocation3 + $0xa8] sm:$0xff] %v1037
        %1046 = vst [vmem:[#allocation3 + $0xb0] sm:$0xff] %v1038
        %1047 = vst [vmem:[#allocation3 + $0xb8] sm:$0xff] %v1039
        %vm1048 = vcmp.lt.s32.totalorder %v490, 240
        %vm1049 = vcmp.lt.s32.totalorder %v491, 240
        %v1050 = vld [vmem:[#allocation2 + $0x8] sm:$0xff]
        %v1051 = vld [vmem:[#allocation2 + $0x10] sm:$0xff]
        %v1052 = vld [vmem:[#allocation2 + $0x18] sm:$0xff]
        %v1053 = vld [vmem:[#allocation2 + $0x28] sm:$0xff]
        %v1054 = vld [vmem:[#allocation2 + $0x30] sm:$0xff]
        %v1055 = vld [vmem:[#allocation2 + $0x38] sm:$0xff]
        %vm1056 = vmand %vm1048, %vm710
        %vm1057 = vmand %vm1049, %vm711
        %v1058 = vsel %vm1056, 1, 0
        %v1059 = vsel %vm1057, 1, 0
        %vm1060 = vcmp.eq.s32.totalorder %v1058, 1
        %vm1061 = vcmp.eq.s32.totalorder %v1059, 1
        %vm1062 = vmpackc.low %vm1061, %vm1060
        %v1063 = vsel %vm1062, 65537, 0
        %v1064 = vlaneseq
        %v1065 = vshrl.u32 %v1064, 7
        %v1066 = vsub.s32 0, %v1065
        %v1067 = vrot.slane %v1063, %v1066
        %v1068 = vlaneseq
        %v1069 = vshrl.u32 %v1068, 7
        %v1070 = vsub.s32 4, %v1069
        %v1071 = vrot.slane %v1063, %v1070
        %1072 = vrot.lane.b32.xlu0 %v1067, 15
        %v1073 = vpop.permute.xlu0 %1072
        %1074 = vrot.lane.b32.xlu0 %v1071, 15
        %v1075 = vpop.permute.xlu0 %1074
        %v1076 = vsel %vm897, %v1073, %v1075
        %vm1077 = vcmp.ne.s16.totalorder %v1073, 0
        %vm1078 = vcmp.ne.s16.totalorder %v1076, 0
        %vm1079 = vcmp.ne.s16.totalorder %v1075, 0
        %v1080 = vsel %vm1077, %v1050, 0
        %v1081 = vsel %vm1078, %v1051, 0
        %v1082 = vsel %vm1079, %v1052, 0
        %v1083 = vsel %vm1077, %v1053, 0
        %v1084 = vsel %vm1078, %v1054, 0
        %v1085 = vsel %vm1079, %v1055, 0
        %1092 = vrot.lane.b32.xlu0 %v1080, 113
        %v1093 = vpop.permute.xlu0 %1092
        %1094 = vrot.lane.b32.xlu0 %v1081, 113
        %v1095 = vpop.permute.xlu0 %1094
        %1096 = vrot.lane.b32.xlu0 %v1082, 113
        %v1097 = vpop.permute.xlu0 %1096
        %1098 = vrot.lane.b32.xlu0 %v1083, 113
        %v1099 = vpop.permute.xlu0 %1098
        %1100 = vrot.lane.b32.xlu0 %v1084, 113
        %v1101 = vpop.permute.xlu0 %1100
        %1102 = vrot.lane.b32.xlu0 %v1085, 113
        %v1103 = vpop.permute.xlu0 %1102
        %v1104 = vsel %vm868, %v1093, %v1095
        %v1105 = vsel %vm868, %v1095, %v1097
        %v1106 = vsel %vm868, %v1099, %v1101
        %v1107 = vsel %vm868, %v1101, %v1103
        %1112 = vst [vmem:[#allocation3 + $0xc0] sm:$0xff] %v1104
        %1113 = vst [vmem:[#allocation3 + $0xc8] sm:$0xff] %v1105
        %1114 = vst [vmem:[#allocation3 + $0xd0] sm:$0xff] %v1106
        %1115 = vst [vmem:[#allocation3 + $0xd8] sm:$0xff] %v1107
        %v1116 = vld [vmem:[#allocation2 + $0x8] sm:$0xff]
        %v1117 = vld [vmem:[#allocation2 + $0x10] sm:$0xff]
        %v1118 = vld [vmem:[#allocation2 + $0x18] sm:$0xff]
        %v1119 = vld [vmem:[#allocation2 + $0x28] sm:$0xff]
        %v1120 = vld [vmem:[#allocation2 + $0x30] sm:$0xff]
        %v1121 = vld [vmem:[#allocation2 + $0x38] sm:$0xff]
        %v1122 = vsel %vm1048, 1, 0
        %v1123 = vsel %vm1049, 1, 0
        %vm1124 = vcmp.eq.s32.totalorder %v1122, 1
        %vm1125 = vcmp.eq.s32.totalorder %v1123, 1
        %vm1126 = vmpackc.low %vm1125, %vm1124
        %v1127 = vsel %vm1126, 65537, 0
        %v1128 = vlaneseq
        %v1129 = vshrl.u32 %v1128, 7
        %v1130 = vsub.s32 0, %v1129
        %v1131 = vrot.slane %v1127, %v1130
        %v1132 = vlaneseq
        %v1133 = vshrl.u32 %v1132, 7
        %v1134 = vsub.s32 4, %v1133
        %v1135 = vrot.slane %v1127, %v1134
        %1136 = vrot.lane.b32.xlu0 %v1131, 16
        %v1137 = vpop.permute.xlu0 %1136
        %1138 = vrot.lane.b32.xlu0 %v1135, 16
        %v1139 = vpop.permute.xlu0 %1138
        %v1140 = vsel %vm827, %v1137, %v1139
        %vm1141 = vcmp.ne.s16.totalorder %v1137, 0
        %vm1142 = vcmp.ne.s16.totalorder %v1140, 0
        %vm1143 = vcmp.ne.s16.totalorder %v1139, 0
        %v1144 = vsel %vm1141, %v1116, 0
        %v1145 = vsel %vm1142, %v1117, 0
        %v1146 = vsel %vm1143, %v1118, 0
        %v1147 = vsel %vm1141, %v1119, 0
        %v1148 = vsel %vm1142, %v1120, 0
        %v1149 = vsel %vm1143, %v1121, 0
        %1156 = vrot.lane.b32.xlu0 %v1144, 112
        %v1157 = vpop.permute.xlu0 %1156
        %1158 = vrot.lane.b32.xlu0 %v1145, 112
        %v1159 = vpop.permute.xlu0 %1158
        %1160 = vrot.lane.b32.xlu0 %v1146, 112
        %v1161 = vpop.permute.xlu0 %1160
        %1162 = vrot.lane.b32.xlu0 %v1147, 112
        %v1163 = vpop.permute.xlu0 %1162
        %1164 = vrot.lane.b32.xlu0 %v1148, 112
        %v1165 = vpop.permute.xlu0 %1164
        %1166 = vrot.lane.b32.xlu0 %v1149, 112
        %v1167 = vpop.permute.xlu0 %1166
        %v1168 = vsel %vm798, %v1157, %v1159
        %v1169 = vsel %vm798, %v1159, %v1161
        %v1170 = vsel %vm798, %v1163, %v1165
        %v1171 = vsel %vm798, %v1165, %v1167
        %1176 = vst [vmem:[#allocation3 + $0xe0] sm:$0xff] %v1168
        %1177 = vst [vmem:[#allocation3 + $0xe8] sm:$0xff] %v1169
        %1178 = vst [vmem:[#allocation3 + $0xf0] sm:$0xff] %v1170
        %1179 = vst [vmem:[#allocation3 + $0xf8] sm:$0xff] %v1171
        %v1180 = vld [vmem:[#allocation2 + $0x8] sm:$0xff]
        %v1181 = vld [vmem:[#allocation2 + $0x10] sm:$0xff]
        %v1182 = vld [vmem:[#allocation2 + $0x18] sm:$0xff]
        %v1183 = vld [vmem:[#allocation2 + $0x28] sm:$0xff]
        %v1184 = vld [vmem:[#allocation2 + $0x30] sm:$0xff]
        %v1185 = vld [vmem:[#allocation2 + $0x38] sm:$0xff]
        %vm1186 = vmand %vm1048, %vm846
        %vm1187 = vmand %vm1049, %vm847
        %v1188 = vsel %vm1186, 1, 0
        %v1189 = vsel %vm1187, 1, 0
        %vm1190 = vcmp.eq.s32.totalorder %v1188, 1
        %vm1191 = vcmp.eq.s32.totalorder %v1189, 1
        %vm1192 = vmpackc.low %vm1191, %vm1190
        %v1193 = vsel %vm1192, 65537, 0
        %v1194 = vlaneseq
        %v1195 = vshrl.u32 %v1194, 7
        %v1196 = vsub.s32 0, %v1195
        %v1197 = vrot.slane %v1193, %v1196
        %v1198 = vlaneseq
        %v1199 = vshrl.u32 %v1198, 7
        %v1200 = vsub.s32 4, %v1199
        %v1201 = vrot.slane %v1193, %v1200
        %1202 = vrot.lane.b32.xlu0 %v1197, 17
        %v1203 = vpop.permute.xlu0 %1202
        %1204 = vrot.lane.b32.xlu0 %v1201, 17
        %v1205 = vpop.permute.xlu0 %1204
        %v1206 = vsel %vm761, %v1203, %v1205
        %vm1207 = vcmp.ne.s16.totalorder %v1203, 0
        %vm1208 = vcmp.ne.s16.totalorder %v1206, 0
        %vm1209 = vcmp.ne.s16.totalorder %v1205, 0
        %v1210 = vsel %vm1207, %v1180, 0
        %v1211 = vsel %vm1208, %v1181, 0
        %v1212 = vsel %vm1209, %v1182, 0
        %v1213 = vsel %vm1207, %v1183, 0
        %v1214 = vsel %vm1208, %v1184, 0
        %v1215 = vsel %vm1209, %v1185, 0
        %1222 = vrot.lane.b32.xlu0 %v1210, 111
        %v1223 = vpop.permute.xlu0 %1222
        %1224 = vrot.lane.b32.xlu0 %v1211, 111
        %v1225 = vpop.permute.xlu0 %1224
        %1226 = vrot.lane.b32.xlu0 %v1212, 111
        %v1227 = vpop.permute.xlu0 %1226
        %1228 = vrot.lane.b32.xlu0 %v1213, 111
        %v1229 = vpop.permute.xlu0 %1228
        %1230 = vrot.lane.b32.xlu0 %v1214, 111
        %v1231 = vpop.permute.xlu0 %1230
        %1232 = vrot.lane.b32.xlu0 %v1215, 111
        %v1233 = vpop.permute.xlu0 %1232
        %v1234 = vsel %vm732, %v1223, %v1225
        %v1235 = vsel %vm732, %v1225, %v1227
        %v1236 = vsel %vm732, %v1229, %v1231
        %v1237 = vsel %vm732, %v1231, %v1233
        %1242 = vst [vmem:[#allocation3 + $0x100] sm:$0xff] %v1234
        %1243 = vst [vmem:[#allocation3 + $0x108] sm:$0xff] %v1235
        %1244 = vst [vmem:[#allocation3 + $0x110] sm:$0xff] %v1236
        %1245 = vst [vmem:[#allocation3 + $0x118] sm:$0xff] %v1237
        %v1246 = vld [vmem:[#allocation3] sm:$0xff]
        %v1247 = vld [vmem:[#allocation3 + $0x8] sm:$0xff]
        %v1248 = vld [vmem:[#allocation3 + $0x10] sm:$0xff]
        %v1249 = vld [vmem:[#allocation3 + $0x18] sm:$0xff]
        %v1250 = vld [vmem:[#allocation3 + $0x20] sm:$0xff]
        %v1251 = vld [vmem:[#allocation3 + $0x28] sm:$0xff]
        %v1252 = vld [vmem:[#allocation3 + $0x30] sm:$0xff]
        %v1253 = vld [vmem:[#allocation3 + $0x38] sm:$0xff]
        %v1254 = vld [vmem:[#allocation3 + $0x40] sm:$0xff]
        %v1255 = vld [vmem:[#allocation3 + $0x48] sm:$0xff]
        %v1256 = vld [vmem:[#allocation3 + $0x50] sm:$0xff]
        %v1257 = vld [vmem:[#allocation3 + $0x58] sm:$0xff]
        %v1258 = vld [vmem:[#allocation3 + $0x60] sm:$0xff]
        %v1259 = vld [vmem:[#allocation3 + $0x68] sm:$0xff]
        %v1260 = vld [vmem:[#allocation3 + $0x70] sm:$0xff]
        %v1261 = vld [vmem:[#allocation3 + $0x78] sm:$0xff]
        %v1262 = vld [vmem:[#allocation3 + $0x80] sm:$0xff]
        %v1263 = vld [vmem:[#allocation3 + $0x88] sm:$0xff]
        %v1264 = vld [vmem:[#allocation3 + $0x90] sm:$0xff]
        %v1265 = vld [vmem:[#allocation3 + $0x98] sm:$0xff]
        %v1266 = vld [vmem:[#allocation3 + $0xa0] sm:$0xff]
        %v1267 = vld [vmem:[#allocation3 + $0xa8] sm:$0xff]
        %v1268 = vld [vmem:[#allocation3 + $0xb0] sm:$0xff]
        %v1269 = vld [vmem:[#allocation3 + $0xb8] sm:$0xff]
        %v1270 = vld [vmem:[#allocation3 + $0xc0] sm:$0xff]
        %v1271 = vld [vmem:[#allocation3 + $0xc8] sm:$0xff]
        %v1272 = vld [vmem:[#allocation3 + $0xd0] sm:$0xff]
        %v1273 = vld [vmem:[#allocation3 + $0xd8] sm:$0xff]
        %v1274 = vld [vmem:[#allocation3 + $0xe0] sm:$0xff]
        %v1275 = vld [vmem:[#allocation3 + $0xe8] sm:$0xff]
        %v1276 = vld [vmem:[#allocation3 + $0xf0] sm:$0xff]
        %v1277 = vld [vmem:[#allocation3 + $0xf8] sm:$0xff]
        %v1278 = vld [vmem:[#allocation3 + $0x100] sm:$0xff]
        %v1279 = vld [vmem:[#allocation3 + $0x108] sm:$0xff]
        %v1280 = vld [vmem:[#allocation3 + $0x110] sm:$0xff]
        %v1281 = vld [vmem:[#allocation3 + $0x118] sm:$0xff]
        %1283 = vset.pattern.permute.xlu0 0
        %1284 = vperm.xlu0 %1283, %v516
        %v1285 = vpop.permute.xlu0 %1284
        %1288 = vset.pattern.permute.xlu0 0
        %1289 = vperm.xlu0 %1288, %v517
        %v1290 = vpop.permute.xlu0 %1289
        %1293 = vset.pattern.permute.xlu0 0
        %1294 = vperm.xlu0 %1293, %v518
        %v1295 = vpop.permute.xlu0 %1294
        %1298 = vset.pattern.permute.xlu0 0
        %1299 = vperm.xlu0 %1298, %v519
        %v1300 = vpop.permute.xlu0 %1299
        %1303 = vset.pattern.permute.xlu0 0
        %1304 = vperm.xlu0 %1303, %v520
        %v1305 = vpop.permute.xlu0 %1304
        %1308 = vset.pattern.permute.xlu0 0
        %1309 = vperm.xlu0 %1308, %v521
        %v1310 = vpop.permute.xlu0 %1309
        %1313 = vset.pattern.permute.xlu0 0
        %1314 = vperm.xlu0 %1313, %v522
        %v1315 = vpop.permute.xlu0 %1314
        %1318 = vset.pattern.permute.xlu0 0
        %1319 = vperm.xlu0 %1318, %v523
        %v1320 = vpop.permute.xlu0 %1319
        %v1338 = vunpack.c.l.b16 %v496
        %v1339 = vunpack.c.h.b16 %v496
        %v1340 = vunpack.c.l.b16 %v497
        %v1341 = vunpack.c.l.b16 %v498
        %v1342 = vunpack.c.h.b16 %v498
        %v1343 = vunpack.c.l.b16 %v499
        %v1344 = vunpack.c.l.b16 %v500
        %v1345 = vunpack.c.h.b16 %v500
        %v1346 = vunpack.c.l.b16 %v501
        %v1347 = vunpack.c.l.b16 %v502
        %v1348 = vunpack.c.h.b16 %v502
        %v1349 = vunpack.c.l.b16 %v503
        %v1350 = vunpack.c.l.b16 %v504
        %v1351 = vunpack.c.h.b16 %v504
        %v1352 = vunpack.c.l.b16 %v505
        %v1353 = vunpack.c.l.b16 %v506
        %v1354 = vunpack.c.h.b16 %v506
        %v1355 = vunpack.c.l.b16 %v507
        %v1356 = vunpack.c.l.b16 %v508
        %v1357 = vunpack.c.h.b16 %v508
        %v1358 = vunpack.c.l.b16 %v509
        %v1359 = vunpack.c.l.b16 %v510
        %v1360 = vunpack.c.h.b16 %v510
        %v1361 = vunpack.c.l.b16 %v511
        %v1362 = vpack.c.b16 %v1341, %v1338
        %v1363 = vpack.c.b16 %v1342, %v1339
        %v1364 = vpack.c.b16 %v1343, %v1340
        %v1365 = vpack.c.b16 %v1347, %v1344
        %v1366 = vpack.c.b16 %v1348, %v1345
        %v1367 = vpack.c.b16 %v1349, %v1346
        %v1368 = vpack.c.b16 %v1353, %v1350
        %v1369 = vpack.c.b16 %v1354, %v1351
        %v1370 = vpack.c.b16 %v1355, %v1352
        %v1371 = vpack.c.b16 %v1359, %v1356
        %v1372 = vpack.c.b16 %v1360, %v1357
        %v1373 = vpack.c.b16 %v1361, %v1358
        %vm1382 = vcmask 261120
        %v1384 = vsel %vm1382, %v1364, 0
        %v1387 = vsel %vm1382, %v1367, 0
        %v1390 = vsel %vm1382, %v1370, 0
        %v1393 = vsel %vm1382, %v1373, 0
        %1395 = vmatprep.subr.bf16.mxu0 %v1247
        %1396 = vmatpush1.bf16.msra.mxu0 %v1246
        %1397 = vmatprep.subr.bf16.mxu0 %v1249
        %1398 = vmatpush1.bf16.msra.mxu0 %v1248
        %1399 = vmatprep.subr.bf16.mxu0 %v1251
        %1400 = vmatpush1.bf16.msra.mxu0 %v1250
        %1401 = vmatprep.subr.bf16.mxu0 %v1253
        %1402 = vmatpush1.bf16.msra.mxu0 %v1252
        %1403 = vmatprep.subr.bf16.mxu0 %v1255
        %1404 = vmatpush1.bf16.msra.mxu0 %v1254
        %1405 = vmatprep.subr.bf16.mxu0 %v1257
        %1406 = vmatpush1.bf16.msra.mxu0 %v1256
        %1407 = vmatprep.subr.bf16.mxu0 %v1259
        %1408 = vmatpush1.bf16.msra.mxu0 %v1258
        %1409 = vmatprep.subr.bf16.mxu0 %v1261
        %1410 = vmatpush1.bf16.msra.mxu0 %v1260
        %1411 = vmatprep.subr.bf16.mxu0 %v1263
        %1412 = vmatpush1.bf16.msra.mxu0 %v1262
        %1413 = vmatprep.subr.bf16.mxu0 %v1265
        %1414 = vmatpush1.bf16.msra.mxu0 %v1264
        %1415 = vmatprep.subr.bf16.mxu0 %v1267
        %1416 = vmatpush1.bf16.msra.mxu0 %v1266
        %1417 = vmatprep.subr.bf16.mxu0 %v1269
        %1418 = vmatpush1.bf16.msra.mxu0 %v1268
        %1419 = vmatprep.subr.bf16.mxu0 %v1271
        %1420 = vmatpush1.bf16.msra.mxu0 %v1270
        %1421 = vmatprep.subr.bf16.mxu0 %v1273
        %1422 = vmatpush1.bf16.msra.mxu0 %v1272
        %1423 = vmatprep.subr.bf16.mxu0 %v1275
        %1424 = vmatpush1.bf16.msra.mxu0 %v1274
        %1425 = vmatprep.subr.bf16.mxu0 %v1277
        %1426 = vmatpush1.bf16.msra.mxu0 %v1276
        %1427 = vmatprep.mubr.bf16.mxu0 %v1363
        %1428 = vmatmul.mubr.bf16.gmra.mrb[0].mxu0 %v1362
        %v1429 = vpop.f32.mrb[0].mxu0
        %v1430 = vadd.f32 %v1285, %v1429
        %v1431 = vpop.f32.mrb[0].mxu0
        %v1432 = vadd.f32 %v1285, %v1431
        %v1433 = vpop.f32.mrb[0].mxu0
        %v1434 = vadd.f32 %v1290, %v1433
        %v1435 = vpop.f32.mrb[0].mxu0
        %v1436 = vadd.f32 %v1290, %v1435
        %1437 = vmatprep.mubr.bf16.mxu0 %v1366
        %1438 = vmatmul.mubr.bf16.gmra.mrb[0].mxu0 %v1365
        %v1439 = vpop.f32.mrb[0].mxu0
        %v1440 = vadd.f32 %v1295, %v1439
        %v1441 = vpop.f32.mrb[0].mxu0
        %v1442 = vadd.f32 %v1295, %v1441
        %v1443 = vpop.f32.mrb[0].mxu0
        %v1444 = vadd.f32 %v1300, %v1443
        %v1445 = vpop.f32.mrb[0].mxu0
        %v1446 = vadd.f32 %v1300, %v1445
        %1447 = vmatprep.mubr.bf16.mxu0 %v1369
        %1448 = vmatmul.mubr.bf16.gmra.mrb[0].mxu0 %v1368
        %v1449 = vpop.f32.mrb[0].mxu0
        %v1450 = vadd.f32 %v1305, %v1449
        %v1451 = vpop.f32.mrb[0].mxu0
        %v1452 = vadd.f32 %v1305, %v1451
        %v1453 = vpop.f32.mrb[0].mxu0
        %v1454 = vadd.f32 %v1310, %v1453
        %v1455 = vpop.f32.mrb[0].mxu0
        %v1456 = vadd.f32 %v1310, %v1455
        %1457 = vmatprep.mubr.bf16.mxu0 %v1372
        %1458 = vmatmul.mubr.bf16.gmra.mrb[0].mxu0 %v1371
        %v1459 = vpop.f32.mrb[0].mxu0
        %v1460 = vadd.f32 %v1315, %v1459
        %v1461 = vpop.f32.mrb[0].mxu0
        %v1462 = vadd.f32 %v1315, %v1461
        %v1463 = vpop.f32.mrb[0].mxu0
        %v1464 = vadd.f32 %v1320, %v1463
        %v1465 = vpop.f32.mrb[0].mxu0
        %v1466 = vadd.f32 %v1320, %v1465
        %1467 = vdwg.mxu0
        %1468 = vmatprep.subr.bf16.mxu0 %v1279
        %1469 = vmatpush1.bf16.msra.mxu0 %v1278
        %1470 = vmatprep.subr.bf16.mxu0 %v1281
        %1471 = vmatpush1.bf16.msra.mxu0 %v1280
        %1472 = vmatprep.subr.bf16.mxu0 0
        %1473 = vmatpush1.bf16.msra.mxu0 0
        %1474 = vmatprep.subr.bf16.mxu0 0
        %1475 = vmatpush1.bf16.msra.mxu0 0
        %1476 = vmatprep.subr.bf16.mxu0 0
        %1477 = vmatpush1.bf16.msra.mxu0 0
        %1478 = vmatprep.subr.bf16.mxu0 0
        %1479 = vmatpush1.bf16.msra.mxu0 0
        %1480 = vmatprep.subr.bf16.mxu0 0
        %1481 = vmatpush1.bf16.msra.mxu0 0
        %1482 = vmatprep.subr.bf16.mxu0 0
        %1483 = vmatpush1.bf16.msra.mxu0 0
        %1484 = vmatprep.subr.bf16.mxu0 0
        %1485 = vmatpush1.bf16.msra.mxu0 0
        %1486 = vmatprep.subr.bf16.mxu0 0
        %1487 = vmatpush1.bf16.msra.mxu0 0
        %1488 = vmatprep.subr.bf16.mxu0 0
        %1489 = vmatpush1.bf16.msra.mxu0 0
        %1490 = vmatprep.subr.bf16.mxu0 0
        %1491 = vmatpush1.bf16.msra.mxu0 0
        %1492 = vmatprep.subr.bf16.mxu0 0
        %1493 = vmatpush1.bf16.msra.mxu0 0
        %1494 = vmatprep.subr.bf16.mxu0 0
        %1495 = vmatpush1.bf16.msra.mxu0 0
        %1496 = vmatprep.subr.bf16.mxu0 0
        %1497 = vmatpush1.bf16.msra.mxu0 0
        %1498 = vmatprep.subr.bf16.mxu0 0
        %1499 = vmatpush1.bf16.msra.mxu0 0
        %1500 = vmatprep.mubr.bf16.mxu0 0
        %1501 = vmatmul.mubr.bf16.gmra.mrb[0].mxu0 %v1384
        %v1502 = vpop.f32.mrb[0].mxu0
        %v1503 = vadd.f32 %v1430, %v1502
        %v1504 = vpop.f32.mrb[0].mxu0
        %v1505 = vadd.f32 %v1432, %v1504
        %v1506 = vpop.f32.mrb[0].mxu0
        %v1507 = vadd.f32 %v1434, %v1506
        %v1508 = vpop.f32.mrb[0].mxu0
        %v1509 = vadd.f32 %v1436, %v1508
        %1510 = vmatprep.mubr.bf16.mxu0 0
        %1511 = vmatmul.mubr.bf16.gmra.mrb[0].mxu0 %v1387
        %v1512 = vpop.f32.mrb[0].mxu0
        %v1513 = vadd.f32 %v1440, %v1512
        %v1514 = vpop.f32.mrb[0].mxu0
        %v1515 = vadd.f32 %v1442, %v1514
        %v1516 = vpop.f32.mrb[0].mxu0
        %v1517 = vadd.f32 %v1444, %v1516
        %v1518 = vpop.f32.mrb[0].mxu0
        %v1519 = vadd.f32 %v1446, %v1518
        %1520 = vmatprep.mubr.bf16.mxu0 0
        %1521 = vmatmul.mubr.bf16.gmra.mrb[0].mxu0 %v1390
        %v1522 = vpop.f32.mrb[0].mxu0
        %v1523 = vadd.f32 %v1450, %v1522
        %v1524 = vpop.f32.mrb[0].mxu0
        %v1525 = vadd.f32 %v1452, %v1524
        %v1526 = vpop.f32.mrb[0].mxu0
        %v1527 = vadd.f32 %v1454, %v1526
        %v1528 = vpop.f32.mrb[0].mxu0
        %v1529 = vadd.f32 %v1456, %v1528
        %1530 = vmatprep.mubr.bf16.mxu0 0
        %1531 = vmatmul.mubr.bf16.gmra.mrb[0].mxu0 %v1393
        %v1532 = vpop.f32.mrb[0].mxu0
        %v1533 = vadd.f32 %v1460, %v1532
        %v1534 = vpop.f32.mrb[0].mxu0
        %v1535 = vadd.f32 %v1462, %v1534
        %v1536 = vpop.f32.mrb[0].mxu0
        %v1537 = vadd.f32 %v1464, %v1536
        %v1538 = vpop.f32.mrb[0].mxu0
        %v1539 = vadd.f32 %v1466, %v1538
        %1540 = vdwg.mxu0
        %v1541 = vld [vmem:[%s373] sm:$0xff]
        %v1542 = vld [vmem:[%s373 + $0x8] sm:$0xff]
        %v1543 = vld [vmem:[%s373 + $0x10] sm:$0xff]
        %v1544 = vld [vmem:[%s373 + $0x18] sm:$0xff]
        %v1545 = vld [vmem:[%s373 + $0x20] sm:$0xff]
        %v1546 = vld [vmem:[%s373 + $0x28] sm:$0xff]
        %v1547 = vld [vmem:[%s373 + $0x30] sm:$0xff]
        %v1548 = vld [vmem:[%s373 + $0x38] sm:$0xff]
        %v1549 = vld [vmem:[%s373 + $0x40] sm:$0xff]
        %v1550 = vld [vmem:[%s373 + $0x48] sm:$0xff]
        %v1551 = vld [vmem:[%s373 + $0x50] sm:$0xff]
        %v1552 = vld [vmem:[%s373 + $0x58] sm:$0xff]
        %v1553 = vld [vmem:[%s373 + $0x60] sm:$0xff]
        %v1554 = vld [vmem:[%s373 + $0x68] sm:$0xff]
        %v1555 = vld [vmem:[%s373 + $0x70] sm:$0xff]
        %v1556 = vld [vmem:[%s373 + $0x78] sm:$0xff]
        %v1557 = vadd.f32 %v1503, %v1541
        %v1558 = vadd.f32 %v1505, %v1542
        %v1559 = vadd.f32 %v1507, %v1543
        %v1560 = vadd.f32 %v1509, %v1544
        %v1561 = vadd.f32 %v1513, %v1545
        %v1562 = vadd.f32 %v1515, %v1546
        %v1563 = vadd.f32 %v1517, %v1547
        %v1564 = vadd.f32 %v1519, %v1548
        %v1565 = vadd.f32 %v1523, %v1549
        %v1566 = vadd.f32 %v1525, %v1550
        %v1567 = vadd.f32 %v1527, %v1551
        %v1568 = vadd.f32 %v1529, %v1552
        %v1569 = vadd.f32 %v1533, %v1553
        %v1570 = vadd.f32 %v1535, %v1554
        %v1571 = vadd.f32 %v1537, %v1555
        %v1572 = vadd.f32 %v1539, %v1556
        %v1573 = vxor.u32 %v1557, 2147483648
        %v1574 = vxor.u32 %v1558, 2147483648
        %v1575 = vxor.u32 %v1559, 2147483648
        %v1576 = vxor.u32 %v1560, 2147483648
        %v1577 = vxor.u32 %v1561, 2147483648
        %v1578 = vxor.u32 %v1562, 2147483648
        %v1579 = vxor.u32 %v1563, 2147483648
        %v1580 = vxor.u32 %v1564, 2147483648
        %v1581 = vxor.u32 %v1565, 2147483648
        %v1582 = vxor.u32 %v1566, 2147483648
        %v1583 = vxor.u32 %v1567, 2147483648
        %v1584 = vxor.u32 %v1568, 2147483648
        %v1585 = vxor.u32 %v1569, 2147483648
        %v1586 = vxor.u32 %v1570, 2147483648
        %v1587 = vxor.u32 %v1571, 2147483648
        %v1588 = vxor.u32 %v1572, 2147483648
        %v1589 = vmul.f32 %v1573, 1.442695
        %v1590 = vpow.pop %v1589
        %v1591 = vmul.f32 %v1574, 1.442695
        %v1592 = vpow.pop %v1591
        %v1593 = vmul.f32 %v1575, 1.442695
        %v1594 = vpow.pop %v1593
        %v1595 = vmul.f32 %v1576, 1.442695
        %v1596 = vpow.pop %v1595
        %v1597 = vmul.f32 %v1577, 1.442695
        %v1598 = vpow.pop %v1597
        %v1599 = vmul.f32 %v1578, 1.442695
        %v1600 = vpow.pop %v1599
        %v1601 = vmul.f32 %v1579, 1.442695
        %v1602 = vpow.pop %v1601
        %v1603 = vmul.f32 %v1580, 1.442695
        %v1604 = vpow.pop %v1603
        %v1605 = vmul.f32 %v1581, 1.442695
        %v1606 = vpow.pop %v1605
        %v1607 = vmul.f32 %v1582, 1.442695
        %v1608 = vpow.pop %v1607
        %v1609 = vmul.f32 %v1583, 1.442695
        %v1610 = vpow.pop %v1609
        %v1611 = vmul.f32 %v1584, 1.442695
        %v1612 = vpow.pop %v1611
        %v1613 = vmul.f32 %v1585, 1.442695
        %v1614 = vpow.pop %v1613
        %v1615 = vmul.f32 %v1586, 1.442695
        %v1616 = vpow.pop %v1615
        %v1617 = vmul.f32 %v1587, 1.442695
        %v1618 = vpow.pop %v1617
        %v1619 = vmul.f32 %v1588, 1.442695
        %v1620 = vpow.pop %v1619
        %v1621 = vadd.f32 %v1590, 1.0
        %v1622 = vadd.f32 %v1592, 1.0
        %v1623 = vadd.f32 %v1594, 1.0
        %v1624 = vadd.f32 %v1596, 1.0
        %v1625 = vadd.f32 %v1598, 1.0
        %v1626 = vadd.f32 %v1600, 1.0
        %v1627 = vadd.f32 %v1602, 1.0
        %v1628 = vadd.f32 %v1604, 1.0
        %v1629 = vadd.f32 %v1606, 1.0
        %v1630 = vadd.f32 %v1608, 1.0
        %v1631 = vadd.f32 %v1610, 1.0
        %v1632 = vadd.f32 %v1612, 1.0
        %v1633 = vadd.f32 %v1614, 1.0
        %v1634 = vadd.f32 %v1616, 1.0
        %v1635 = vadd.f32 %v1618, 1.0
        %v1636 = vadd.f32 %v1620, 1.0
        %v1637 = vrcp.pop %v1621
        %v1638 = vmul.f32 1.0, %v1637
        %v1639 = vrcp.pop %v1622
        %v1640 = vmul.f32 1.0, %v1639
        %v1641 = vrcp.pop %v1623
        %v1642 = vmul.f32 1.0, %v1641
        %v1643 = vrcp.pop %v1624
        %v1644 = vmul.f32 1.0, %v1643
        %v1645 = vrcp.pop %v1625
        %v1646 = vmul.f32 1.0, %v1645
        %v1647 = vrcp.pop %v1626
        %v1648 = vmul.f32 1.0, %v1647
        %v1649 = vrcp.pop %v1627
        %v1650 = vmul.f32 1.0, %v1649
        %v1651 = vrcp.pop %v1628
        %v1652 = vmul.f32 1.0, %v1651
        %v1653 = vrcp.pop %v1629
        %v1654 = vmul.f32 1.0, %v1653
        %v1655 = vrcp.pop %v1630
        %v1656 = vmul.f32 1.0, %v1655
        %v1657 = vrcp.pop %v1631
        %v1658 = vmul.f32 1.0, %v1657
        %v1659 = vrcp.pop %v1632
        %v1660 = vmul.f32 1.0, %v1659
        %v1661 = vrcp.pop %v1633
        %v1662 = vmul.f32 1.0, %v1661
        %v1663 = vrcp.pop %v1634
        %v1664 = vmul.f32 1.0, %v1663
        %v1665 = vrcp.pop %v1635
        %v1666 = vmul.f32 1.0, %v1665
        %v1667 = vrcp.pop %v1636
        %v1668 = vmul.f32 1.0, %v1667
        %v1669 = vmul.f32 %v1557, %v1638
        %v1670 = vmul.f32 %v1558, %v1640
        %v1671 = vmul.f32 %v1559, %v1642
        %v1672 = vmul.f32 %v1560, %v1644
        %v1673 = vmul.f32 %v1561, %v1646
        %v1674 = vmul.f32 %v1562, %v1648
        %v1675 = vmul.f32 %v1563, %v1650
        %v1676 = vmul.f32 %v1564, %v1652
        %v1677 = vmul.f32 %v1565, %v1654
        %v1678 = vmul.f32 %v1566, %v1656
        %v1679 = vmul.f32 %v1567, %v1658
        %v1680 = vmul.f32 %v1568, %v1660
        %v1681 = vmul.f32 %v1569, %v1662
        %v1682 = vmul.f32 %v1570, %v1664
        %v1683 = vmul.f32 %v1571, %v1666
        %v1684 = vmul.f32 %v1572, %v1668
        %1685 = vst [vmem:[%s431] sm:$0xff] %v1669
        %1686 = vst [vmem:[%s431 + $0x8] sm:$0xff] %v1670
        %1687 = vst [vmem:[%s431 + $0x10] sm:$0xff] %v1671
        %1688 = vst [vmem:[%s431 + $0x18] sm:$0xff] %v1672
        %1689 = vst [vmem:[%s431 + $0x20] sm:$0xff] %v1673
        %1690 = vst [vmem:[%s431 + $0x28] sm:$0xff] %v1674
        %1691 = vst [vmem:[%s431 + $0x30] sm:$0xff] %v1675
        %1692 = vst [vmem:[%s431 + $0x38] sm:$0xff] %v1676
        %1693 = vst [vmem:[%s431 + $0x40] sm:$0xff] %v1677
        %1694 = vst [vmem:[%s431 + $0x48] sm:$0xff] %v1678
        %1695 = vst [vmem:[%s431 + $0x50] sm:$0xff] %v1679
        %1696 = vst [vmem:[%s431 + $0x58] sm:$0xff] %v1680
        %1697 = vst [vmem:[%s431 + $0x60] sm:$0xff] %v1681
        %1698 = vst [vmem:[%s431 + $0x68] sm:$0xff] %v1682
        %1699 = vst [vmem:[%s431 + $0x70] sm:$0xff] %v1683
        %1700 = vst [vmem:[%s431 + $0x78] sm:$0xff] %v1684
        %v1701 = vld [vmem:[%s382] sm:$0xff]
        %v1702 = vld [vmem:[%s382 + $0x8] sm:$0xff]
        %v1703 = vld [vmem:[%s382 + $0x10] sm:$0xff]
        %v1704 = vld [vmem:[%s382 + $0x18] sm:$0xff]
        %v1705 = vld [vmem:[%s382 + $0x20] sm:$0xff]
        %v1706 = vld [vmem:[%s382 + $0x28] sm:$0xff]
        %v1707 = vld [vmem:[%s382 + $0x30] sm:$0xff]
        %v1708 = vld [vmem:[%s382 + $0x38] sm:$0xff]
        %v1709 = vld [vmem:[%s382 + $0x40] sm:$0xff]
        %v1710 = vld [vmem:[%s382 + $0x48] sm:$0xff]
        %v1711 = vld [vmem:[%s382 + $0x50] sm:$0xff]
        %v1712 = vld [vmem:[%s382 + $0x58] sm:$0xff]
        %v1713 = vld [vmem:[%s382 + $0x60] sm:$0xff]
        %v1714 = vld [vmem:[%s382 + $0x68] sm:$0xff]
        %v1715 = vld [vmem:[%s382 + $0x70] sm:$0xff]
        %v1716 = vld [vmem:[%s382 + $0x78] sm:$0xff]
        %v1717 = vpack.c.bf16 %v1703, %v1701
        %v1718 = vpack.c.bf16 %v1704, %v1702
        %v1719 = vpack.c.bf16 %v1707, %v1705
        %v1720 = vpack.c.bf16 %v1708, %v1706
        %v1721 = vpack.c.bf16 %v1711, %v1709
        %v1722 = vpack.c.bf16 %v1712, %v1710
        %v1723 = vpack.c.bf16 %v1715, %v1713
        %v1724 = vpack.c.bf16 %v1716, %v1714
        %1725 = vmatprep.subr.bf16.mxu0 %v1718
        %1726 = vmatpush1.bf16.msra.mxu0 %v1717
        %1727 = vmatprep.subr.bf16.mxu0 %v1720
        %1728 = vmatpush1.bf16.msra.mxu0 %v1719
        %1729 = vmatprep.subr.bf16.mxu0 %v1722
        %1730 = vmatpush1.bf16.msra.mxu0 %v1721
        %1731 = vmatprep.subr.bf16.mxu0 %v1724
        %1732 = vmatpush1.bf16.msra.mxu0 %v1723
        %1733 = vmatprep.subr.bf16.mxu0 0
        %1734 = vmatpush1.bf16.msra.mxu0 0
        %1735 = vmatprep.subr.bf16.mxu0 0
        %1736 = vmatpush1.bf16.msra.mxu0 0
        %1737 = vmatprep.subr.bf16.mxu0 0
        %1738 = vmatpush1.bf16.msra.mxu0 0
        %1739 = vmatprep.subr.bf16.mxu0 0
        %1740 = vmatpush1.bf16.msra.mxu0 0
        %1741 = vmatprep.subr.bf16.mxu0 0
        %1742 = vmatpush1.bf16.msra.mxu0 0
        %1743 = vmatprep.subr.bf16.mxu0 0
        %1744 = vmatpush1.bf16.msra.mxu0 0
        %1745 = vmatprep.subr.bf16.mxu0 0
        %1746 = vmatpush1.bf16.msra.mxu0 0
        %1747 = vmatprep.subr.bf16.mxu0 0
        %1748 = vmatpush1.bf16.msra.mxu0 0
        %1749 = vmatprep.subr.bf16.mxu0 0
        %1750 = vmatpush1.bf16.msra.mxu0 0
        %1751 = vmatprep.subr.bf16.mxu0 0
        %1752 = vmatpush1.bf16.msra.mxu0 0
        %1753 = vmatprep.subr.bf16.mxu0 0
        %1754 = vmatpush1.bf16.msra.mxu0 0
        %1755 = vmatprep.subr.bf16.mxu0 0
        %1756 = vmatpush1.bf16.msra.mxu0 0
        %1757 = vmatprep.mubr.bf16.mxu0 0
        %1758 = vmatmul.mubr.bf16.gmra.mrb[0].mxu0 %v580
        %v1759 = vpop.f32.mrb[0].mxu0
        %v1760 = vadd.f32 %v551, %v1759
        %v1761 = vpop.f32.mrb[0].mxu0
        %v1762 = vadd.f32 %v551, %v1761
        %v1763 = vpop.f32.mrb[0].mxu0
        %v1764 = vadd.f32 %v556, %v1763
        %v1765 = vpop.f32.mrb[0].mxu0
        %v1766 = vadd.f32 %v556, %v1765
        %1767 = vmatprep.mubr.bf16.mxu0 0
        %1768 = vmatmul.mubr.bf16.gmra.mrb[0].mxu0 %v583
        %v1769 = vpop.f32.mrb[0].mxu0
        %v1770 = vadd.f32 %v561, %v1769
        %v1771 = vpop.f32.mrb[0].mxu0
        %v1772 = vadd.f32 %v561, %v1771
        %v1773 = vpop.f32.mrb[0].mxu0
        %v1774 = vadd.f32 %v566, %v1773
        %v1775 = vpop.f32.mrb[0].mxu0
        %v1776 = vadd.f32 %v566, %v1775
        %1777 = vdwg.mxu0
        %v1778 = vxor.u32 %v1760, 2147483648
        %v1779 = vxor.u32 %v1762, 2147483648
        %v1780 = vxor.u32 %v1764, 2147483648
        %v1781 = vxor.u32 %v1766, 2147483648
        %v1782 = vxor.u32 %v1770, 2147483648
        %v1783 = vxor.u32 %v1772, 2147483648
        %v1784 = vxor.u32 %v1774, 2147483648
        %v1785 = vxor.u32 %v1776, 2147483648
        %v1786 = vmul.f32 %v1778, 1.442695
        %v1787 = vpow.pop %v1786
        %v1788 = vmul.f32 %v1779, 1.442695
        %v1789 = vpow.pop %v1788
        %v1790 = vmul.f32 %v1780, 1.442695
        %v1791 = vpow.pop %v1790
        %v1792 = vmul.f32 %v1781, 1.442695
        %v1793 = vpow.pop %v1792
        %v1794 = vmul.f32 %v1782, 1.442695
        %v1795 = vpow.pop %v1794
        %v1796 = vmul.f32 %v1783, 1.442695
        %v1797 = vpow.pop %v1796
        %v1798 = vmul.f32 %v1784, 1.442695
        %v1799 = vpow.pop %v1798
        %v1800 = vmul.f32 %v1785, 1.442695
        %v1801 = vpow.pop %v1800
        %v1802 = vadd.f32 %v1787, 1.0
        %v1803 = vadd.f32 %v1789, 1.0
        %v1804 = vadd.f32 %v1791, 1.0
        %v1805 = vadd.f32 %v1793, 1.0
        %v1806 = vadd.f32 %v1795, 1.0
        %v1807 = vadd.f32 %v1797, 1.0
        %v1808 = vadd.f32 %v1799, 1.0
        %v1809 = vadd.f32 %v1801, 1.0
        %v1810 = vrcp.pop %v1802
        %v1811 = vmul.f32 1.0, %v1810
        %v1812 = vrcp.pop %v1803
        %v1813 = vmul.f32 1.0, %v1812
        %v1814 = vrcp.pop %v1804
        %v1815 = vmul.f32 1.0, %v1814
        %v1816 = vrcp.pop %v1805
        %v1817 = vmul.f32 1.0, %v1816
        %v1818 = vrcp.pop %v1806
        %v1819 = vmul.f32 1.0, %v1818
        %v1820 = vrcp.pop %v1807
        %v1821 = vmul.f32 1.0, %v1820
        %v1822 = vrcp.pop %v1808
        %v1823 = vmul.f32 1.0, %v1822
        %v1824 = vrcp.pop %v1809
        %v1825 = vmul.f32 1.0, %v1824
        %v1826 = vmul.f32 %v1760, %v1811
        %v1827 = vmul.f32 %v1762, %v1813
        %v1828 = vmul.f32 %v1764, %v1815
        %v1829 = vmul.f32 %v1766, %v1817
        %v1830 = vmul.f32 %v1770, %v1819
        %v1831 = vmul.f32 %v1772, %v1821
        %v1832 = vmul.f32 %v1774, %v1823
        %v1833 = vmul.f32 %v1776, %v1825
        %v1834 = vpack.c.bf16 %v1828, %v1826
        %v1835 = vpack.c.bf16 %v1829, %v1827
        %v1836 = vpack.c.bf16 %v1832, %v1830
        %v1837 = vpack.c.bf16 %v1833, %v1831
        %1838 = vst [vmem:[#allocation2 + $0x8] sm:$0xff] %v1834
        %1839 = vst [vmem:[#allocation2 + $0x10] sm:$0xff] %v1835
        %1840 = vst [vmem:[#allocation2 + $0x28] sm:$0xff] %v1836
        %1841 = vst [vmem:[#allocation2 + $0x30] sm:$0xff] %v1837
        %vm1842 = vcmp.ge.s32.totalorder %v490, 32
        %vm1843 = vcmp.ge.s32.totalorder %v491, 32
        %v1844 = vld [vmem:[#allocation2] sm:$0xff]
        %v1845 = vld [vmem:[#allocation2 + $0x8] sm:$0xff]
        %v1846 = vld [vmem:[#allocation2 + $0x10] sm:$0xff]
        %v1847 = vld [vmem:[#allocation2 + $0x20] sm:$0xff]
        %v1848 = vld [vmem:[#allocation2 + $0x28] sm:$0xff]
        %v1849 = vld [vmem:[#allocation2 + $0x30] sm:$0xff]
        %vm1850 = vcmp.ge.s32.totalorder %v468, 2
        %vm1851 = vcmp.ge.s32.totalorder %v475, 2
        %vm1852 = vmand %vm1842, %vm1850
        %vm1853 = vmand %vm1843, %vm1851
        %v1854 = vsel %vm1852, 1, 0
        %v1855 = vsel %vm1853, 1, 0
        %vm1856 = vcmp.eq.s32.totalorder %v1854, 1
        %vm1857 = vcmp.eq.s32.totalorder %v1855, 1
        %vm1858 = vmpackc.low %vm1857, %vm1856
        %v1859 = vsel %vm1858, 65537, 0
        %v1860 = vlaneseq
        %v1861 = vshrl.u32 %v1860, 7
        %v1862 = vsub.s32 0, %v1861
        %v1863 = vrot.slane %v1859, %v1862
        %v1864 = vlaneseq
        %v1865 = vshrl.u32 %v1864, 7
        %v1866 = vsub.s32 4, %v1865
        %v1867 = vrot.slane %v1859, %v1866
        %1868 = vrot.lane.b32.xlu0 %v1863, 94
        %v1869 = vpop.permute.xlu0 %1868
        %1870 = vrot.lane.b32.xlu0 %v1867, 94
        %v1871 = vpop.permute.xlu0 %1870
        %vm1872 = vcmask 769024
        %v1873 = vsel %vm1872, %v1869, %v1871
        %vm1874 = vcmp.ne.s16.totalorder %v1869, 0
        %vm1875 = vcmp.ne.s16.totalorder %v1873, 0
        %vm1876 = vcmp.ne.s16.totalorder %v1871, 0
        %v1877 = vsel %vm1874, %v1844, 0
        %v1878 = vsel %vm1875, %v1845, 0
        %v1879 = vsel %vm1876, %v1846, 0
        %v1880 = vsel %vm1874, %v1847, 0
        %v1881 = vsel %vm1875, %v1848, 0
        %v1882 = vsel %vm1876, %v1849, 0
        %1889 = vrot.lane.b32.xlu0 %v1877, 34
        %v1890 = vpop.permute.xlu0 %1889
        %1891 = vrot.lane.b32.xlu0 %v1878, 34
        %v1892 = vpop.permute.xlu0 %1891
        %1893 = vrot.lane.b32.xlu0 %v1879, 34
        %v1894 = vpop.permute.xlu0 %1893
        %1895 = vrot.lane.b32.xlu0 %v1880, 34
        %v1896 = vpop.permute.xlu0 %1895
        %1897 = vrot.lane.b32.xlu0 %v1881, 34
        %v1898 = vpop.permute.xlu0 %1897
        %1899 = vrot.lane.b32.xlu0 %v1882, 34
        %v1900 = vpop.permute.xlu0 %1899
        %vm1901 = vcmask 277504
        %v1902 = vsel %vm1901, %v1890, %v1892
        %v1903 = vsel %vm1901, %v1892, %v1894
        %v1904 = vsel %vm1901, %v1896, %v1898
        %v1905 = vsel %vm1901, %v1898, %v1900
        %1910 = vst [vmem:[#allocation3] sm:$0xff] %v1902
        %1911 = vst [vmem:[#allocation3 + $0x8] sm:$0xff] %v1903
        %1912 = vst [vmem:[#allocation3 + $0x10] sm:$0xff] %v1904
        %1913 = vst [vmem:[#allocation3 + $0x18] sm:$0xff] %v1905
        %v1914 = vld [vmem:[#allocation2] sm:$0xff]
        %v1915 = vld [vmem:[#allocation2 + $0x8] sm:$0xff]
        %v1916 = vld [vmem:[#allocation2 + $0x10] sm:$0xff]
        %v1917 = vld [vmem:[#allocation2 + $0x20] sm:$0xff]
        %v1918 = vld [vmem:[#allocation2 + $0x28] sm:$0xff]
        %v1919 = vld [vmem:[#allocation2 + $0x30] sm:$0xff]
        %v1920 = vsel %vm1842, 1, 0
        %v1921 = vsel %vm1843, 1, 0
        %vm1922 = vcmp.eq.s32.totalorder %v1920, 1
        %vm1923 = vcmp.eq.s32.totalorder %v1921, 1
        %vm1924 = vmpackc.low %vm1923, %vm1922
        %v1925 = vsel %vm1924, 65537, 0
        %v1926 = vlaneseq
        %v1927 = vshrl.u32 %v1926, 7
        %v1928 = vsub.s32 0, %v1927
        %v1929 = vrot.slane %v1925, %v1928
        %v1930 = vlaneseq
        %v1931 = vshrl.u32 %v1930, 7
        %v1932 = vsub.s32 4, %v1931
        %v1933 = vrot.slane %v1925, %v1932
        %1934 = vrot.lane.b32.xlu0 %v1929, 96
        %v1935 = vpop.permute.xlu0 %1934
        %1936 = vrot.lane.b32.xlu0 %v1933, 96
        %v1937 = vpop.permute.xlu0 %1936
        %vm1938 = vcmask 785408
        %v1939 = vsel %vm1938, %v1935, %v1937
        %vm1940 = vcmp.ne.s16.totalorder %v1935, 0
        %vm1941 = vcmp.ne.s16.totalorder %v1939, 0
        %vm1942 = vcmp.ne.s16.totalorder %v1937, 0
        %v1943 = vsel %vm1940, %v1914, 0
        %v1944 = vsel %vm1941, %v1915, 0
        %v1945 = vsel %vm1942, %v1916, 0
        %v1946 = vsel %vm1940, %v1917, 0
        %v1947 = vsel %vm1941, %v1918, 0
        %v1948 = vsel %vm1942, %v1919, 0
        %1955 = vrot.lane.b32.xlu0 %v1943, 32
        %v1956 = vpop.permute.xlu0 %1955
        %1957 = vrot.lane.b32.xlu0 %v1944, 32
        %v1958 = vpop.permute.xlu0 %1957
        %1959 = vrot.lane.b32.xlu0 %v1945, 32
        %v1960 = vpop.permute.xlu0 %1959
        %1961 = vrot.lane.b32.xlu0 %v1946, 32
        %v1962 = vpop.permute.xlu0 %1961
        %1963 = vrot.lane.b32.xlu0 %v1947, 32
        %v1964 = vpop.permute.xlu0 %1963
        %1965 = vrot.lane.b32.xlu0 %v1948, 32
        %v1966 = vpop.permute.xlu0 %1965
        %vm1967 = vcmask 261120
        %v1968 = vsel %vm1967, %v1956, %v1958
        %v1969 = vsel %vm1967, %v1958, %v1960
        %v1970 = vsel %vm1967, %v1962, %v1964
        %v1971 = vsel %vm1967, %v1964, %v1966
        %1976 = vst [vmem:[#allocation3 + $0x20] sm:$0xff] %v1968
        %1977 = vst [vmem:[#allocation3 + $0x28] sm:$0xff] %v1969
        %1978 = vst [vmem:[#allocation3 + $0x30] sm:$0xff] %v1970
        %1979 = vst [vmem:[#allocation3 + $0x38] sm:$0xff] %v1971
        %v1980 = vld [vmem:[#allocation2] sm:$0xff]
        %v1981 = vld [vmem:[#allocation2 + $0x8] sm:$0xff]
        %v1982 = vld [vmem:[#allocation2 + $0x10] sm:$0xff]
        %v1983 = vld [vmem:[#allocation2 + $0x20] sm:$0xff]
        %v1984 = vld [vmem:[#allocation2 + $0x28] sm:$0xff]
        %v1985 = vld [vmem:[#allocation2 + $0x30] sm:$0xff]
        %vm1986 = vcmp.lt.s32.totalorder %v468, 14
        %vm1987 = vcmp.lt.s32.totalorder %v475, 14
        %vm1988 = vmand %vm1842, %vm1986
        %vm1989 = vmand %vm1843, %vm1987
        %v1990 = vsel %vm1988, 1, 0
        %v1991 = vsel %vm1989, 1, 0
        %vm1992 = vcmp.eq.s32.totalorder %v1990, 1
        %vm1993 = vcmp.eq.s32.totalorder %v1991, 1
        %vm1994 = vmpackc.low %vm1993, %vm1992
        %v1995 = vsel %vm1994, 65537, 0
        %v1996 = vlaneseq
        %v1997 = vshrl.u32 %v1996, 7
        %v1998 = vsub.s32 0, %v1997
        %v1999 = vrot.slane %v1995, %v1998
        %v2000 = vlaneseq
        %v2001 = vshrl.u32 %v2000, 7
        %v2002 = vsub.s32 4, %v2001
        %v2003 = vrot.slane %v1995, %v2002
        %2004 = vrot.lane.b32.xlu0 %v1999, 98
        %v2005 = vpop.permute.xlu0 %2004
        %2006 = vrot.lane.b32.xlu0 %v2003, 98
        %v2007 = vpop.permute.xlu0 %2006
        %vm2008 = vcmask 801792
        %v2009 = vsel %vm2008, %v2005, %v2007
        %vm2010 = vcmp.ne.s16.totalorder %v2005, 0
        %vm2011 = vcmp.ne.s16.totalorder %v2009, 0
        %vm2012 = vcmp.ne.s16.totalorder %v2007, 0
        %v2013 = vsel %vm2010, %v1980, 0
        %v2014 = vsel %vm2011, %v1981, 0
        %v2015 = vsel %vm2012, %v1982, 0
        %v2016 = vsel %vm2010, %v1983, 0
        %v2017 = vsel %vm2011, %v1984, 0
        %v2018 = vsel %vm2012, %v1985, 0
        %2025 = vrot.lane.b32.xlu0 %v2013, 30
        %v2026 = vpop.permute.xlu0 %2025
        %2027 = vrot.lane.b32.xlu0 %v2014, 30
        %v2028 = vpop.permute.xlu0 %2027
        %2029 = vrot.lane.b32.xlu0 %v2015, 30
        %v2030 = vpop.permute.xlu0 %2029
        %2031 = vrot.lane.b32.xlu0 %v2016, 30
        %v2032 = vpop.permute.xlu0 %2031
        %2033 = vrot.lane.b32.xlu0 %v2017, 30
        %v2034 = vpop.permute.xlu0 %2033
        %2035 = vrot.lane.b32.xlu0 %v2018, 30
        %v2036 = vpop.permute.xlu0 %2035
        %vm2037 = vcmask 244736
        %v2038 = vsel %vm2037, %v2026, %v2028
        %v2039 = vsel %vm2037, %v2028, %v2030
        %v2040 = vsel %vm2037, %v2032, %v2034
        %v2041 = vsel %vm2037, %v2034, %v2036
        %2046 = vst [vmem:[#allocation3 + $0x40] sm:$0xff] %v2038
        %2047 = vst [vmem:[#allocation3 + $0x48] sm:$0xff] %v2039
        %2048 = vst [vmem:[#allocation3 + $0x50] sm:$0xff] %v2040
        %2049 = vst [vmem:[#allocation3 + $0x58] sm:$0xff] %v2041
        %v2050 = vld [vmem:[#allocation2] sm:$0xff]
        %v2051 = vld [vmem:[#allocation2 + $0x8] sm:$0xff]
        %v2052 = vld [vmem:[#allocation2 + $0x10] sm:$0xff]
        %v2053 = vld [vmem:[#allocation2 + $0x20] sm:$0xff]
        %v2054 = vld [vmem:[#allocation2 + $0x28] sm:$0xff]
        %v2055 = vld [vmem:[#allocation2 + $0x30] sm:$0xff]
        %v2056 = vsel %vm1850, 1, 0
        %v2057 = vsel %vm1851, 1, 0
        %vm2058 = vcmp.eq.s32.totalorder %v2056, 1
        %vm2059 = vcmp.eq.s32.totalorder %v2057, 1
        %vm2060 = vmpackc.low %vm2059, %vm2058
        %v2061 = vsel %vm2060, 65537, 0
        %v2062 = vlaneseq
        %v2063 = vshrl.u32 %v2062, 7
        %v2064 = vsub.s32 0, %v2063
        %v2065 = vrot.slane %v2061, %v2064
        %v2066 = vlaneseq
        %v2067 = vshrl.u32 %v2066, 7
        %v2068 = vsub.s32 4, %v2067
        %v2069 = vrot.slane %v2061, %v2068
        %2070 = vrot.lane.b32.xlu0 %v2065, 126
        %v2071 = vpop.permute.xlu0 %2070
        %2072 = vrot.lane.b32.xlu0 %v2069, 126
        %v2073 = vpop.permute.xlu0 %2072
        %vm2074 = vcmask 1031168
        %v2075 = vsel %vm2074, %v2071, %v2073
        %vm2076 = vcmp.ne.s16.totalorder %v2071, 0
        %vm2077 = vcmp.ne.s16.totalorder %v2075, 0
        %vm2078 = vcmp.ne.s16.totalorder %v2073, 0
        %v2079 = vsel %vm2076, %v2050, 0
        %v2080 = vsel %vm2077, %v2051, 0
        %v2081 = vsel %vm2078, %v2052, 0
        %v2082 = vsel %vm2076, %v2053, 0
        %v2083 = vsel %vm2077, %v2054, 0
        %v2084 = vsel %vm2078, %v2055, 0
        %2091 = vrot.lane.b32.xlu0 %v2079, 2
        %v2092 = vpop.permute.xlu0 %2091
        %2093 = vrot.lane.b32.xlu0 %v2080, 2
        %v2094 = vpop.permute.xlu0 %2093
        %2095 = vrot.lane.b32.xlu0 %v2081, 2
        %v2096 = vpop.permute.xlu0 %2095
        %2097 = vrot.lane.b32.xlu0 %v2082, 2
        %v2098 = vpop.permute.xlu0 %2097
        %2099 = vrot.lane.b32.xlu0 %v2083, 2
        %v2100 = vpop.permute.xlu0 %2099
        %2101 = vrot.lane.b32.xlu0 %v2084, 2
        %v2102 = vpop.permute.xlu0 %2101
        %vm2103 = vcmask 15360
        %v2104 = vsel %vm2103, %v2092, %v2094
        %v2105 = vsel %vm2103, %v2094, %v2096
        %v2106 = vsel %vm2103, %v2098, %v2100
        %v2107 = vsel %vm2103, %v2100, %v2102
        %2112 = vst [vmem:[#allocation3 + $0x60] sm:$0xff] %v2104
        %2113 = vst [vmem:[#allocation3 + $0x68] sm:$0xff] %v2105
        %2114 = vst [vmem:[#allocation3 + $0x70] sm:$0xff] %v2106
        %2115 = vst [vmem:[#allocation3 + $0x78] sm:$0xff] %v2107
        %v2116 = vld [vmem:[#allocation2 + $0x8] sm:$0xff]
        %v2117 = vld [vmem:[#allocation2 + $0x10] sm:$0xff]
        %v2118 = vld [vmem:[#allocation2 + $0x28] sm:$0xff]
        %v2119 = vld [vmem:[#allocation2 + $0x30] sm:$0xff]
        %2120 = vst [vmem:[#allocation3 + $0x80] sm:$0xff] %v2116
        %2121 = vst [vmem:[#allocation3 + $0x88] sm:$0xff] %v2117
        %2122 = vst [vmem:[#allocation3 + $0x90] sm:$0xff] %v2118
        %2123 = vst [vmem:[#allocation3 + $0x98] sm:$0xff] %v2119
        %v2124 = vld [vmem:[#allocation2 + $0x8] sm:$0xff]
        %v2125 = vld [vmem:[#allocation2 + $0x10] sm:$0xff]
        %v2126 = vld [vmem:[#allocation2 + $0x18] sm:$0xff]
        %v2127 = vld [vmem:[#allocation2 + $0x28] sm:$0xff]
        %v2128 = vld [vmem:[#allocation2 + $0x30] sm:$0xff]
        %v2129 = vld [vmem:[#allocation2 + $0x38] sm:$0xff]
        %v2130 = vsel %vm1986, 1, 0
        %v2131 = vsel %vm1987, 1, 0
        %vm2132 = vcmp.eq.s32.totalorder %v2130, 1
        %vm2133 = vcmp.eq.s32.totalorder %v2131, 1
        %vm2134 = vmpackc.low %vm2133, %vm2132
        %v2135 = vsel %vm2134, 65537, 0
        %v2136 = vlaneseq
        %v2137 = vshrl.u32 %v2136, 7
        %v2138 = vsub.s32 0, %v2137
        %v2139 = vrot.slane %v2135, %v2138
        %v2140 = vlaneseq
        %v2141 = vshrl.u32 %v2140, 7
        %v2142 = vsub.s32 4, %v2141
        %v2143 = vrot.slane %v2135, %v2142
        %2144 = vrot.lane.b32.xlu0 %v2139, 2
        %v2145 = vpop.permute.xlu0 %2144
        %2146 = vrot.lane.b32.xlu0 %v2143, 2
        %v2147 = vpop.permute.xlu0 %2146
        %v2148 = vsel %vm2103, %v2145, %v2147
        %vm2149 = vcmp.ne.s16.totalorder %v2145, 0
        %vm2150 = vcmp.ne.s16.totalorder %v2148, 0
        %vm2151 = vcmp.ne.s16.totalorder %v2147, 0
        %v2152 = vsel %vm2149, %v2124, 0
        %v2153 = vsel %vm2150, %v2125, 0
        %v2154 = vsel %vm2151, %v2126, 0
        %v2155 = vsel %vm2149, %v2127, 0
        %v2156 = vsel %vm2150, %v2128, 0
        %v2157 = vsel %vm2151, %v2129, 0
        %2164 = vrot.lane.b32.xlu0 %v2152, 126
        %v2165 = vpop.permute.xlu0 %2164
        %2166 = vrot.lane.b32.xlu0 %v2153, 126
        %v2167 = vpop.permute.xlu0 %2166
        %2168 = vrot.lane.b32.xlu0 %v2154, 126
        %v2169 = vpop.permute.xlu0 %2168
        %2170 = vrot.lane.b32.xlu0 %v2155, 126
        %v2171 = vpop.permute.xlu0 %2170
        %2172 = vrot.lane.b32.xlu0 %v2156, 126
        %v2173 = vpop.permute.xlu0 %2172
        %2174 = vrot.lane.b32.xlu0 %v2157, 126
        %v2175 = vpop.permute.xlu0 %2174
        %v2176 = vsel %vm2074, %v2165, %v2167
        %v2177 = vsel %vm2074, %v2167, %v2169
        %v2178 = vsel %vm2074, %v2171, %v2173
        %v2179 = vsel %vm2074, %v2173, %v2175
        %2184 = vst [vmem:[#allocation3 + $0xa0] sm:$0xff] %v2176
        %2185 = vst [vmem:[#allocation3 + $0xa8] sm:$0xff] %v2177
        %2186 = vst [vmem:[#allocation3 + $0xb0] sm:$0xff] %v2178
        %2187 = vst [vmem:[#allocation3 + $0xb8] sm:$0xff] %v2179
        %vm2188 = vcmp.lt.s32.totalorder %v490, 224
        %vm2189 = vcmp.lt.s32.totalorder %v491, 224
        %v2190 = vld [vmem:[#allocation2 + $0x8] sm:$0xff]
        %v2191 = vld [vmem:[#allocation2 + $0x10] sm:$0xff]
        %v2192 = vld [vmem:[#allocation2 + $0x18] sm:$0xff]
        %v2193 = vld [vmem:[#allocation2 + $0x28] sm:$0xff]
        %v2194 = vld [vmem:[#allocation2 + $0x30] sm:$0xff]
        %v2195 = vld [vmem:[#allocation2 + $0x38] sm:$0xff]
        %vm2196 = vmand %vm2188, %vm1850
        %vm2197 = vmand %vm2189, %vm1851
        %v2198 = vsel %vm2196, 1, 0
        %v2199 = vsel %vm2197, 1, 0
        %vm2200 = vcmp.eq.s32.totalorder %v2198, 1
        %vm2201 = vcmp.eq.s32.totalorder %v2199, 1
        %vm2202 = vmpackc.low %vm2201, %vm2200
        %v2203 = vsel %vm2202, 65537, 0
        %v2204 = vlaneseq
        %v2205 = vshrl.u32 %v2204, 7
        %v2206 = vsub.s32 0, %v2205
        %v2207 = vrot.slane %v2203, %v2206
        %v2208 = vlaneseq
        %v2209 = vshrl.u32 %v2208, 7
        %v2210 = vsub.s32 4, %v2209
        %v2211 = vrot.slane %v2203, %v2210
        %2212 = vrot.lane.b32.xlu0 %v2207, 30
        %v2213 = vpop.permute.xlu0 %2212
        %2214 = vrot.lane.b32.xlu0 %v2211, 30
        %v2215 = vpop.permute.xlu0 %2214
        %v2216 = vsel %vm2037, %v2213, %v2215
        %vm2217 = vcmp.ne.s16.totalorder %v2213, 0
        %vm2218 = vcmp.ne.s16.totalorder %v2216, 0
        %vm2219 = vcmp.ne.s16.totalorder %v2215, 0
        %v2220 = vsel %vm2217, %v2190, 0
        %v2221 = vsel %vm2218, %v2191, 0
        %v2222 = vsel %vm2219, %v2192, 0
        %v2223 = vsel %vm2217, %v2193, 0
        %v2224 = vsel %vm2218, %v2194, 0
        %v2225 = vsel %vm2219, %v2195, 0
        %2232 = vrot.lane.b32.xlu0 %v2220, 98
        %v2233 = vpop.permute.xlu0 %2232
        %2234 = vrot.lane.b32.xlu0 %v2221, 98
        %v2235 = vpop.permute.xlu0 %2234
        %2236 = vrot.lane.b32.xlu0 %v2222, 98
        %v2237 = vpop.permute.xlu0 %2236
        %2238 = vrot.lane.b32.xlu0 %v2223, 98
        %v2239 = vpop.permute.xlu0 %2238
        %2240 = vrot.lane.b32.xlu0 %v2224, 98
        %v2241 = vpop.permute.xlu0 %2240
        %2242 = vrot.lane.b32.xlu0 %v2225, 98
        %v2243 = vpop.permute.xlu0 %2242
        %v2244 = vsel %vm2008, %v2233, %v2235
        %v2245 = vsel %vm2008, %v2235, %v2237
        %v2246 = vsel %vm2008, %v2239, %v2241
        %v2247 = vsel %vm2008, %v2241, %v2243
        %2252 = vst [vmem:[#allocation3 + $0xc0] sm:$0xff] %v2244
        %2253 = vst [vmem:[#allocation3 + $0xc8] sm:$0xff] %v2245
        %2254 = vst [vmem:[#allocation3 + $0xd0] sm:$0xff] %v2246
        %2255 = vst [vmem:[#allocation3 + $0xd8] sm:$0xff] %v2247
        %v2256 = vld [vmem:[#allocation2 + $0x8] sm:$0xff]
        %v2257 = vld [vmem:[#allocation2 + $0x10] sm:$0xff]
        %v2258 = vld [vmem:[#allocation2 + $0x18] sm:$0xff]
        %v2259 = vld [vmem:[#allocation2 + $0x28] sm:$0xff]
        %v2260 = vld [vmem:[#allocation2 + $0x30] sm:$0xff]
        %v2261 = vld [vmem:[#allocation2 + $0x38] sm:$0xff]
        %v2262 = vsel %vm2188, 1, 0
        %v2263 = vsel %vm2189, 1, 0
        %vm2264 = vcmp.eq.s32.totalorder %v2262, 1
        %vm2265 = vcmp.eq.s32.totalorder %v2263, 1
        %vm2266 = vmpackc.low %vm2265, %vm2264
        %v2267 = vsel %vm2266, 65537, 0
        %v2268 = vlaneseq
        %v2269 = vshrl.u32 %v2268, 7
        %v2270 = vsub.s32 0, %v2269
        %v2271 = vrot.slane %v2267, %v2270
        %v2272 = vlaneseq
        %v2273 = vshrl.u32 %v2272, 7
        %v2274 = vsub.s32 4, %v2273
        %v2275 = vrot.slane %v2267, %v2274
        %2276 = vrot.lane.b32.xlu0 %v2271, 32
        %v2277 = vpop.permute.xlu0 %2276
        %2278 = vrot.lane.b32.xlu0 %v2275, 32
        %v2279 = vpop.permute.xlu0 %2278
        %v2280 = vsel %vm1967, %v2277, %v2279
        %vm2281 = vcmp.ne.s16.totalorder %v2277, 0
        %vm2282 = vcmp.ne.s16.totalorder %v2280, 0
        %vm2283 = vcmp.ne.s16.totalorder %v2279, 0
        %v2284 = vsel %vm2281, %v2256, 0
        %v2285 = vsel %vm2282, %v2257, 0
        %v2286 = vsel %vm2283, %v2258, 0
        %v2287 = vsel %vm2281, %v2259, 0
        %v2288 = vsel %vm2282, %v2260, 0
        %v2289 = vsel %vm2283, %v2261, 0
        %2296 = vrot.lane.b32.xlu0 %v2284, 96
        %v2297 = vpop.permute.xlu0 %2296
        %2298 = vrot.lane.b32.xlu0 %v2285, 96
        %v2299 = vpop.permute.xlu0 %2298
        %2300 = vrot.lane.b32.xlu0 %v2286, 96
        %v2301 = vpop.permute.xlu0 %2300
        %2302 = vrot.lane.b32.xlu0 %v2287, 96
        %v2303 = vpop.permute.xlu0 %2302
        %2304 = vrot.lane.b32.xlu0 %v2288, 96
        %v2305 = vpop.permute.xlu0 %2304
        %2306 = vrot.lane.b32.xlu0 %v2289, 96
        %v2307 = vpop.permute.xlu0 %2306
        %v2308 = vsel %vm1938, %v2297, %v2299
        %v2309 = vsel %vm1938, %v2299, %v2301
        %v2310 = vsel %vm1938, %v2303, %v2305
        %v2311 = vsel %vm1938, %v2305, %v2307
        %2316 = vst [vmem:[#allocation3 + $0xe0] sm:$0xff] %v2308
        %2317 = vst [vmem:[#allocation3 + $0xe8] sm:$0xff] %v2309
        %2318 = vst [vmem:[#allocation3 + $0xf0] sm:$0xff] %v2310
        %2319 = vst [vmem:[#allocation3 + $0xf8] sm:$0xff] %v2311
        %v2320 = vld [vmem:[#allocation2 + $0x8] sm:$0xff]
        %v2321 = vld [vmem:[#allocation2 + $0x10] sm:$0xff]
        %v2322 = vld [vmem:[#allocation2 + $0x18] sm:$0xff]
        %v2323 = vld [vmem:[#allocation2 + $0x28] sm:$0xff]
        %v2324 = vld [vmem:[#allocation2 + $0x30] sm:$0xff]
        %v2325 = vld [vmem:[#allocation2 + $0x38] sm:$0xff]
        %vm2326 = vmand %vm2188, %vm1986
        %vm2327 = vmand %vm2189, %vm1987
        %v2328 = vsel %vm2326, 1, 0
        %v2329 = vsel %vm2327, 1, 0
        %vm2330 = vcmp.eq.s32.totalorder %v2328, 1
        %vm2331 = vcmp.eq.s32.totalorder %v2329, 1
        %vm2332 = vmpackc.low %vm2331, %vm2330
        %v2333 = vsel %vm2332, 65537, 0
        %v2334 = vlaneseq
        %v2335 = vshrl.u32 %v2334, 7
        %v2336 = vsub.s32 0, %v2335
        %v2337 = vrot.slane %v2333, %v2336
        %v2338 = vlaneseq
        %v2339 = vshrl.u32 %v2338, 7
        %v2340 = vsub.s32 4, %v2339
        %v2341 = vrot.slane %v2333, %v2340
        %2342 = vrot.lane.b32.xlu0 %v2337, 34
        %v2343 = vpop.permute.xlu0 %2342
        %2344 = vrot.lane.b32.xlu0 %v2341, 34
        %v2345 = vpop.permute.xlu0 %2344
        %v2346 = vsel %vm1901, %v2343, %v2345
        %vm2347 = vcmp.ne.s16.totalorder %v2343, 0
        %vm2348 = vcmp.ne.s16.totalorder %v2346, 0
        %vm2349 = vcmp.ne.s16.totalorder %v2345, 0
        %v2350 = vsel %vm2347, %v2320, 0
        %v2351 = vsel %vm2348, %v2321, 0
        %v2352 = vsel %vm2349, %v2322, 0
        %v2353 = vsel %vm2347, %v2323, 0
        %v2354 = vsel %vm2348, %v2324, 0
        %v2355 = vsel %vm2349, %v2325, 0
        %2362 = vrot.lane.b32.xlu0 %v2350, 94
        %v2363 = vpop.permute.xlu0 %2362
        %2364 = vrot.lane.b32.xlu0 %v2351, 94
        %v2365 = vpop.permute.xlu0 %2364
        %2366 = vrot.lane.b32.xlu0 %v2352, 94
        %v2367 = vpop.permute.xlu0 %2366
        %2368 = vrot.lane.b32.xlu0 %v2353, 94
        %v2369 = vpop.permute.xlu0 %2368
        %2370 = vrot.lane.b32.xlu0 %v2354, 94
        %v2371 = vpop.permute.xlu0 %2370
        %2372 = vrot.lane.b32.xlu0 %v2355, 94
        %v2373 = vpop.permute.xlu0 %2372
        %v2374 = vsel %vm1872, %v2363, %v2365
        %v2375 = vsel %vm1872, %v2365, %v2367
        %v2376 = vsel %vm1872, %v2369, %v2371
        %v2377 = vsel %vm1872, %v2371, %v2373
        %2382 = vst [vmem:[#allocation3 + $0x100] sm:$0xff] %v2374
        %2383 = vst [vmem:[#allocation3 + $0x108] sm:$0xff] %v2375
        %2384 = vst [vmem:[#allocation3 + $0x110] sm:$0xff] %v2376
        %2385 = vst [vmem:[#allocation3 + $0x118] sm:$0xff] %v2377
        %v2386 = vld [vmem:[#allocation3] sm:$0xff]
        %v2387 = vld [vmem:[#allocation3 + $0x8] sm:$0xff]
        %v2388 = vld [vmem:[#allocation3 + $0x10] sm:$0xff]
        %v2389 = vld [vmem:[#allocation3 + $0x18] sm:$0xff]
        %v2390 = vld [vmem:[#allocation3 + $0x20] sm:$0xff]
        %v2391 = vld [vmem:[#allocation3 + $0x28] sm:$0xff]
        %v2392 = vld [vmem:[#allocation3 + $0x30] sm:$0xff]
        %v2393 = vld [vmem:[#allocation3 + $0x38] sm:$0xff]
        %v2394 = vld [vmem:[#allocation3 + $0x40] sm:$0xff]
        %v2395 = vld [vmem:[#allocation3 + $0x48] sm:$0xff]
        %v2396 = vld [vmem:[#allocation3 + $0x50] sm:$0xff]
        %v2397 = vld [vmem:[#allocation3 + $0x58] sm:$0xff]
        %v2398 = vld [vmem:[#allocation3 + $0x60] sm:$0xff]
        %v2399 = vld [vmem:[#allocation3 + $0x68] sm:$0xff]
        %v2400 = vld [vmem:[#allocation3 + $0x70] sm:$0xff]
        %v2401 = vld [vmem:[#allocation3 + $0x78] sm:$0xff]
        %v2402 = vld [vmem:[#allocation3 + $0x80] sm:$0xff]
        %v2403 = vld [vmem:[#allocation3 + $0x88] sm:$0xff]
        %v2404 = vld [vmem:[#allocation3 + $0x90] sm:$0xff]
        %v2405 = vld [vmem:[#allocation3 + $0x98] sm:$0xff]
        %v2406 = vld [vmem:[#allocation3 + $0xa0] sm:$0xff]
        %v2407 = vld [vmem:[#allocation3 + $0xa8] sm:$0xff]
        %v2408 = vld [vmem:[#allocation3 + $0xb0] sm:$0xff]
        %v2409 = vld [vmem:[#allocation3 + $0xb8] sm:$0xff]
        %v2410 = vld [vmem:[#allocation3 + $0xc0] sm:$0xff]
        %v2411 = vld [vmem:[#allocation3 + $0xc8] sm:$0xff]
        %v2412 = vld [vmem:[#allocation3 + $0xd0] sm:$0xff]
        %v2413 = vld [vmem:[#allocation3 + $0xd8] sm:$0xff]
        %v2414 = vld [vmem:[#allocation3 + $0xe0] sm:$0xff]
        %v2415 = vld [vmem:[#allocation3 + $0xe8] sm:$0xff]
        %v2416 = vld [vmem:[#allocation3 + $0xf0] sm:$0xff]
        %v2417 = vld [vmem:[#allocation3 + $0xf8] sm:$0xff]
        %v2418 = vld [vmem:[#allocation3 + $0x100] sm:$0xff]
        %v2419 = vld [vmem:[#allocation3 + $0x108] sm:$0xff]
        %v2420 = vld [vmem:[#allocation3 + $0x110] sm:$0xff]
        %v2421 = vld [vmem:[#allocation3 + $0x118] sm:$0xff]
        %2422 = vmatprep.subr.bf16.mxu0 %v2387
        %2423 = vmatpush1.bf16.msra.mxu0 %v2386
        %2424 = vmatprep.subr.bf16.mxu0 %v2389
        %2425 = vmatpush1.bf16.msra.mxu0 %v2388
        %2426 = vmatprep.subr.bf16.mxu0 %v2391
        %2427 = vmatpush1.bf16.msra.mxu0 %v2390
        %2428 = vmatprep.subr.bf16.mxu0 %v2393
        %2429 = vmatpush1.bf16.msra.mxu0 %v2392
        %2430 = vmatprep.subr.bf16.mxu0 %v2395
        %2431 = vmatpush1.bf16.msra.mxu0 %v2394
        %2432 = vmatprep.subr.bf16.mxu0 %v2397
        %2433 = vmatpush1.bf16.msra.mxu0 %v2396
        %2434 = vmatprep.subr.bf16.mxu0 %v2399
        %2435 = vmatpush1.bf16.msra.mxu0 %v2398
        %2436 = vmatprep.subr.bf16.mxu0 %v2401
        %2437 = vmatpush1.bf16.msra.mxu0 %v2400
        %2438 = vmatprep.subr.bf16.mxu0 %v2403
        %2439 = vmatpush1.bf16.msra.mxu0 %v2402
        %2440 = vmatprep.subr.bf16.mxu0 %v2405
        %2441 = vmatpush1.bf16.msra.mxu0 %v2404
        %2442 = vmatprep.subr.bf16.mxu0 %v2407
        %2443 = vmatpush1.bf16.msra.mxu0 %v2406
        %2444 = vmatprep.subr.bf16.mxu0 %v2409
        %2445 = vmatpush1.bf16.msra.mxu0 %v2408
        %2446 = vmatprep.subr.bf16.mxu0 %v2411
        %2447 = vmatpush1.bf16.msra.mxu0 %v2410
        %2448 = vmatprep.subr.bf16.mxu0 %v2413
        %2449 = vmatpush1.bf16.msra.mxu0 %v2412
        %2450 = vmatprep.subr.bf16.mxu0 %v2415
        %2451 = vmatpush1.bf16.msra.mxu0 %v2414
        %2452 = vmatprep.subr.bf16.mxu0 %v2417
        %2453 = vmatpush1.bf16.msra.mxu0 %v2416
        %2454 = vmatprep.mubr.bf16.mxu0 %v1363
        %2455 = vmatmul.mubr.bf16.gmra.mrb[0].mxu0 %v1362
        %v2456 = vpop.f32.mrb[0].mxu0
        %v2457 = vadd.f32 %v1285, %v2456
        %v2458 = vpop.f32.mrb[0].mxu0
        %v2459 = vadd.f32 %v1285, %v2458
        %v2460 = vpop.f32.mrb[0].mxu0
        %v2461 = vadd.f32 %v1290, %v2460
        %v2462 = vpop.f32.mrb[0].mxu0
        %v2463 = vadd.f32 %v1290, %v2462
        %2464 = vmatprep.mubr.bf16.mxu0 %v1366
        %2465 = vmatmul.mubr.bf16.gmra.mrb[0].mxu0 %v1365
        %v2466 = vpop.f32.mrb[0].mxu0
        %v2467 = vadd.f32 %v1295, %v2466
        %v2468 = vpop.f32.mrb[0].mxu0
        %v2469 = vadd.f32 %v1295, %v2468
        %v2470 = vpop.f32.mrb[0].mxu0
        %v2471 = vadd.f32 %v1300, %v2470
        %v2472 = vpop.f32.mrb[0].mxu0
        %v2473 = vadd.f32 %v1300, %v2472
        %2474 = vmatprep.mubr.bf16.mxu0 %v1369
        %2475 = vmatmul.mubr.bf16.gmra.mrb[0].mxu0 %v1368
        %v2476 = vpop.f32.mrb[0].mxu0
        %v2477 = vadd.f32 %v1305, %v2476
        %v2478 = vpop.f32.mrb[0].mxu0
        %v2479 = vadd.f32 %v1305, %v2478
        %v2480 = vpop.f32.mrb[0].mxu0
        %v2481 = vadd.f32 %v1310, %v2480
        %v2482 = vpop.f32.mrb[0].mxu0
        %v2483 = vadd.f32 %v1310, %v2482
        %2484 = vmatprep.mubr.bf16.mxu0 %v1372
        %2485 = vmatmul.mubr.bf16.gmra.mrb[0].mxu0 %v1371
        %v2486 = vpop.f32.mrb[0].mxu0
        %v2487 = vadd.f32 %v1315, %v2486
        %v2488 = vpop.f32.mrb[0].mxu0
        %v2489 = vadd.f32 %v1315, %v2488
        %v2490 = vpop.f32.mrb[0].mxu0
        %v2491 = vadd.f32 %v1320, %v2490
        %v2492 = vpop.f32.mrb[0].mxu0
        %v2493 = vadd.f32 %v1320, %v2492
        %2494 = vdwg.mxu0
        %2495 = vmatprep.subr.bf16.mxu0 %v2419
        %2496 = vmatpush1.bf16.msra.mxu0 %v2418
        %2497 = vmatprep.subr.bf16.mxu0 %v2421
        %2498 = vmatpush1.bf16.msra.mxu0 %v2420
        %2499 = vmatprep.subr.bf16.mxu0 0
        %2500 = vmatpush1.bf16.msra.mxu0 0
        %2501 = vmatprep.subr.bf16.mxu0 0
        %2502 = vmatpush1.bf16.msra.mxu0 0
        %2503 = vmatprep.subr.bf16.mxu0 0
        %2504 = vmatpush1.bf16.msra.mxu0 0
        %2505 = vmatprep.subr.bf16.mxu0 0
        %2506 = vmatpush1.bf16.msra.mxu0 0
        %2507 = vmatprep.subr.bf16.mxu0 0
        %2508 = vmatpush1.bf16.msra.mxu0 0
        %2509 = vmatprep.subr.bf16.mxu0 0
        %2510 = vmatpush1.bf16.msra.mxu0 0
        %2511 = vmatprep.subr.bf16.mxu0 0
        %2512 = vmatpush1.bf16.msra.mxu0 0
        %2513 = vmatprep.subr.bf16.mxu0 0
        %2514 = vmatpush1.bf16.msra.mxu0 0
        %2515 = vmatprep.subr.bf16.mxu0 0
        %2516 = vmatpush1.bf16.msra.mxu0 0
        %2517 = vmatprep.subr.bf16.mxu0 0
        %2518 = vmatpush1.bf16.msra.mxu0 0
        %2519 = vmatprep.subr.bf16.mxu0 0
        %2520 = vmatpush1.bf16.msra.mxu0 0
        %2521 = vmatprep.subr.bf16.mxu0 0
        %2522 = vmatpush1.bf16.msra.mxu0 0
        %2523 = vmatprep.subr.bf16.mxu0 0
        %2524 = vmatpush1.bf16.msra.mxu0 0
        %2525 = vmatprep.subr.bf16.mxu0 0
        %2526 = vmatpush1.bf16.msra.mxu0 0
        %2527 = vmatprep.mubr.bf16.mxu0 0
        %2528 = vmatmul.mubr.bf16.gmra.mrb[0].mxu0 %v1384
        %v2529 = vpop.f32.mrb[0].mxu0
        %v2530 = vadd.f32 %v2457, %v2529
        %v2531 = vpop.f32.mrb[0].mxu0
        %v2532 = vadd.f32 %v2459, %v2531
        %v2533 = vpop.f32.mrb[0].mxu0
        %v2534 = vadd.f32 %v2461, %v2533
        %v2535 = vpop.f32.mrb[0].mxu0
        %v2536 = vadd.f32 %v2463, %v2535
        %2537 = vmatprep.mubr.bf16.mxu0 0
        %2538 = vmatmul.mubr.bf16.gmra.mrb[0].mxu0 %v1387
        %v2539 = vpop.f32.mrb[0].mxu0
        %v2540 = vadd.f32 %v2467, %v2539
        %v2541 = vpop.f32.mrb[0].mxu0
        %v2542 = vadd.f32 %v2469, %v2541
        %v2543 = vpop.f32.mrb[0].mxu0
        %v2544 = vadd.f32 %v2471, %v2543
        %v2545 = vpop.f32.mrb[0].mxu0
        %v2546 = vadd.f32 %v2473, %v2545
        %2547 = vmatprep.mubr.bf16.mxu0 0
        %2548 = vmatmul.mubr.bf16.gmra.mrb[0].mxu0 %v1390
        %v2549 = vpop.f32.mrb[0].mxu0
        %v2550 = vadd.f32 %v2477, %v2549
        %v2551 = vpop.f32.mrb[0].mxu0
        %v2552 = vadd.f32 %v2479, %v2551
        %v2553 = vpop.f32.mrb[0].mxu0
        %v2554 = vadd.f32 %v2481, %v2553
        %v2555 = vpop.f32.mrb[0].mxu0
        %v2556 = vadd.f32 %v2483, %v2555
        %2557 = vmatprep.mubr.bf16.mxu0 0
        %2558 = vmatmul.mubr.bf16.gmra.mrb[0].mxu0 %v1393
        %v2559 = vpop.f32.mrb[0].mxu0
        %v2560 = vadd.f32 %v2487, %v2559
        %v2561 = vpop.f32.mrb[0].mxu0
        %v2562 = vadd.f32 %v2489, %v2561
        %v2563 = vpop.f32.mrb[0].mxu0
        %v2564 = vadd.f32 %v2491, %v2563
        %v2565 = vpop.f32.mrb[0].mxu0
        %v2566 = vadd.f32 %v2493, %v2565
        %2567 = vdwg.mxu0
        %v2568 = vld [vmem:[%s382] sm:$0xff]
        %v2569 = vld [vmem:[%s382 + $0x8] sm:$0xff]
        %v2570 = vld [vmem:[%s382 + $0x10] sm:$0xff]
        %v2571 = vld [vmem:[%s382 + $0x18] sm:$0xff]
        %v2572 = vld [vmem:[%s382 + $0x20] sm:$0xff]
        %v2573 = vld [vmem:[%s382 + $0x28] sm:$0xff]
        %v2574 = vld [vmem:[%s382 + $0x30] sm:$0xff]
        %v2575 = vld [vmem:[%s382 + $0x38] sm:$0xff]
        %v2576 = vld [vmem:[%s382 + $0x40] sm:$0xff]
        %v2577 = vld [vmem:[%s382 + $0x48] sm:$0xff]
        %v2578 = vld [vmem:[%s382 + $0x50] sm:$0xff]
        %v2579 = vld [vmem:[%s382 + $0x58] sm:$0xff]
        %v2580 = vld [vmem:[%s382 + $0x60] sm:$0xff]
        %v2581 = vld [vmem:[%s382 + $0x68] sm:$0xff]
        %v2582 = vld [vmem:[%s382 + $0x70] sm:$0xff]
        %v2583 = vld [vmem:[%s382 + $0x78] sm:$0xff]
        %v2584 = vadd.f32 %v2530, %v2568
        %v2585 = vadd.f32 %v2532, %v2569
        %v2586 = vadd.f32 %v2534, %v2570
        %v2587 = vadd.f32 %v2536, %v2571
        %v2588 = vadd.f32 %v2540, %v2572
        %v2589 = vadd.f32 %v2542, %v2573
        %v2590 = vadd.f32 %v2544, %v2574
        %v2591 = vadd.f32 %v2546, %v2575
        %v2592 = vadd.f32 %v2550, %v2576
        %v2593 = vadd.f32 %v2552, %v2577
        %v2594 = vadd.f32 %v2554, %v2578
        %v2595 = vadd.f32 %v2556, %v2579
        %v2596 = vadd.f32 %v2560, %v2580
        %v2597 = vadd.f32 %v2562, %v2581
        %v2598 = vadd.f32 %v2564, %v2582
        %v2599 = vadd.f32 %v2566, %v2583
        %v2600 = vxor.u32 %v2584, 2147483648
        %v2601 = vxor.u32 %v2585, 2147483648
        %v2602 = vxor.u32 %v2586, 2147483648
        %v2603 = vxor.u32 %v2587, 2147483648
        %v2604 = vxor.u32 %v2588, 2147483648
        %v2605 = vxor.u32 %v2589, 2147483648
        %v2606 = vxor.u32 %v2590, 2147483648
        %v2607 = vxor.u32 %v2591, 2147483648
        %v2608 = vxor.u32 %v2592, 2147483648
        %v2609 = vxor.u32 %v2593, 2147483648
        %v2610 = vxor.u32 %v2594, 2147483648
        %v2611 = vxor.u32 %v2595, 2147483648
        %v2612 = vxor.u32 %v2596, 2147483648
        %v2613 = vxor.u32 %v2597, 2147483648
        %v2614 = vxor.u32 %v2598, 2147483648
        %v2615 = vxor.u32 %v2599, 2147483648
        %v2616 = vmul.f32 %v2600, 1.442695
        %v2617 = vpow.pop %v2616
        %v2618 = vmul.f32 %v2601, 1.442695
        %v2619 = vpow.pop %v2618
        %v2620 = vmul.f32 %v2602, 1.442695
        %v2621 = vpow.pop %v2620
        %v2622 = vmul.f32 %v2603, 1.442695
        %v2623 = vpow.pop %v2622
        %v2624 = vmul.f32 %v2604, 1.442695
        %v2625 = vpow.pop %v2624
        %v2626 = vmul.f32 %v2605, 1.442695
        %v2627 = vpow.pop %v2626
        %v2628 = vmul.f32 %v2606, 1.442695
        %v2629 = vpow.pop %v2628
        %v2630 = vmul.f32 %v2607, 1.442695
        %v2631 = vpow.pop %v2630
        %v2632 = vmul.f32 %v2608, 1.442695
        %v2633 = vpow.pop %v2632
        %v2634 = vmul.f32 %v2609, 1.442695
        %v2635 = vpow.pop %v2634
        %v2636 = vmul.f32 %v2610, 1.442695
        %v2637 = vpow.pop %v2636
        %v2638 = vmul.f32 %v2611, 1.442695
        %v2639 = vpow.pop %v2638
        %v2640 = vmul.f32 %v2612, 1.442695
        %v2641 = vpow.pop %v2640
        %v2642 = vmul.f32 %v2613, 1.442695
        %v2643 = vpow.pop %v2642
        %v2644 = vmul.f32 %v2614, 1.442695
        %v2645 = vpow.pop %v2644
        %v2646 = vmul.f32 %v2615, 1.442695
        %v2647 = vpow.pop %v2646
        %v2648 = vadd.f32 %v2617, 1.0
        %v2649 = vadd.f32 %v2619, 1.0
        %v2650 = vadd.f32 %v2621, 1.0
        %v2651 = vadd.f32 %v2623, 1.0
        %v2652 = vadd.f32 %v2625, 1.0
        %v2653 = vadd.f32 %v2627, 1.0
        %v2654 = vadd.f32 %v2629, 1.0
        %v2655 = vadd.f32 %v2631, 1.0
        %v2656 = vadd.f32 %v2633, 1.0
        %v2657 = vadd.f32 %v2635, 1.0
        %v2658 = vadd.f32 %v2637, 1.0
        %v2659 = vadd.f32 %v2639, 1.0
        %v2660 = vadd.f32 %v2641, 1.0
        %v2661 = vadd.f32 %v2643, 1.0
        %v2662 = vadd.f32 %v2645, 1.0
        %v2663 = vadd.f32 %v2647, 1.0
        %v2664 = vrcp.pop %v2648
        %v2665 = vmul.f32 1.0, %v2664
        %v2666 = vrcp.pop %v2649
        %v2667 = vmul.f32 1.0, %v2666
        %v2668 = vrcp.pop %v2650
        %v2669 = vmul.f32 1.0, %v2668
        %v2670 = vrcp.pop %v2651
        %v2671 = vmul.f32 1.0, %v2670
        %v2672 = vrcp.pop %v2652
        %v2673 = vmul.f32 1.0, %v2672
        %v2674 = vrcp.pop %v2653
        %v2675 = vmul.f32 1.0, %v2674
        %v2676 = vrcp.pop %v2654
        %v2677 = vmul.f32 1.0, %v2676
        %v2678 = vrcp.pop %v2655
        %v2679 = vmul.f32 1.0, %v2678
        %v2680 = vrcp.pop %v2656
        %v2681 = vmul.f32 1.0, %v2680
        %v2682 = vrcp.pop %v2657
        %v2683 = vmul.f32 1.0, %v2682
        %v2684 = vrcp.pop %v2658
        %v2685 = vmul.f32 1.0, %v2684
        %v2686 = vrcp.pop %v2659
        %v2687 = vmul.f32 1.0, %v2686
        %v2688 = vrcp.pop %v2660
        %v2689 = vmul.f32 1.0, %v2688
        %v2690 = vrcp.pop %v2661
        %v2691 = vmul.f32 1.0, %v2690
        %v2692 = vrcp.pop %v2662
        %v2693 = vmul.f32 1.0, %v2692
        %v2694 = vrcp.pop %v2663
        %v2695 = vmul.f32 1.0, %v2694
        %v2696 = vmul.f32 %v2584, %v2665
        %v2697 = vmul.f32 %v2585, %v2667
        %v2698 = vmul.f32 %v2586, %v2669
        %v2699 = vmul.f32 %v2587, %v2671
        %v2700 = vmul.f32 %v2588, %v2673
        %v2701 = vmul.f32 %v2589, %v2675
        %v2702 = vmul.f32 %v2590, %v2677
        %v2703 = vmul.f32 %v2591, %v2679
        %v2704 = vmul.f32 %v2592, %v2681
        %v2705 = vmul.f32 %v2593, %v2683
        %v2706 = vmul.f32 %v2594, %v2685
        %v2707 = vmul.f32 %v2595, %v2687
        %v2708 = vmul.f32 %v2596, %v2689
        %v2709 = vmul.f32 %v2597, %v2691
        %v2710 = vmul.f32 %v2598, %v2693
        %v2711 = vmul.f32 %v2599, %v2695
        %2712 = vst [vmem:[%s438] sm:$0xff] %v2696
        %2713 = vst [vmem:[%s438 + $0x8] sm:$0xff] %v2697
        %2714 = vst [vmem:[%s438 + $0x10] sm:$0xff] %v2698
        %2715 = vst [vmem:[%s438 + $0x18] sm:$0xff] %v2699
        %2716 = vst [vmem:[%s438 + $0x20] sm:$0xff] %v2700
        %2717 = vst [vmem:[%s438 + $0x28] sm:$0xff] %v2701
        %2718 = vst [vmem:[%s438 + $0x30] sm:$0xff] %v2702
        %2719 = vst [vmem:[%s438 + $0x38] sm:$0xff] %v2703
        %2720 = vst [vmem:[%s438 + $0x40] sm:$0xff] %v2704
        %2721 = vst [vmem:[%s438 + $0x48] sm:$0xff] %v2705
        %2722 = vst [vmem:[%s438 + $0x50] sm:$0xff] %v2706
        %2723 = vst [vmem:[%s438 + $0x58] sm:$0xff] %v2707
        %2724 = vst [vmem:[%s438 + $0x60] sm:$0xff] %v2708
        %2725 = vst [vmem:[%s438 + $0x68] sm:$0xff] %v2709
        %2726 = vst [vmem:[%s438 + $0x70] sm:$0xff] %v2710
        %2727 = vst [vmem:[%s438 + $0x78] sm:$0xff] %v2711
        %v2728 = vld [vmem:[%s391] sm:$0xff]
        %v2729 = vld [vmem:[%s391 + $0x8] sm:$0xff]
        %v2730 = vld [vmem:[%s391 + $0x10] sm:$0xff]
        %v2731 = vld [vmem:[%s391 + $0x18] sm:$0xff]
        %v2732 = vld [vmem:[%s391 + $0x20] sm:$0xff]
        %v2733 = vld [vmem:[%s391 + $0x28] sm:$0xff]
        %v2734 = vld [vmem:[%s391 + $0x30] sm:$0xff]
        %v2735 = vld [vmem:[%s391 + $0x38] sm:$0xff]
        %v2736 = vld [vmem:[%s391 + $0x40] sm:$0xff]
        %v2737 = vld [vmem:[%s391 + $0x48] sm:$0xff]
        %v2738 = vld [vmem:[%s391 + $0x50] sm:$0xff]
        %v2739 = vld [vmem:[%s391 + $0x58] sm:$0xff]
        %v2740 = vld [vmem:[%s391 + $0x60] sm:$0xff]
        %v2741 = vld [vmem:[%s391 + $0x68] sm:$0xff]
        %v2742 = vld [vmem:[%s391 + $0x70] sm:$0xff]
        %v2743 = vld [vmem:[%s391 + $0x78] sm:$0xff]
        %v2744 = vpack.c.bf16 %v2730, %v2728
        %v2745 = vpack.c.bf16 %v2731, %v2729
        %v2746 = vpack.c.bf16 %v2734, %v2732
        %v2747 = vpack.c.bf16 %v2735, %v2733
        %v2748 = vpack.c.bf16 %v2738, %v2736
        %v2749 = vpack.c.bf16 %v2739, %v2737
        %v2750 = vpack.c.bf16 %v2742, %v2740
        %v2751 = vpack.c.bf16 %v2743, %v2741
        %2752 = vmatprep.subr.bf16.mxu0 %v2745
        %2753 = vmatpush1.bf16.msra.mxu0 %v2744
        %2754 = vmatprep.subr.bf16.mxu0 %v2747
        %2755 = vmatpush1.bf16.msra.mxu0 %v2746
        %2756 = vmatprep.subr.bf16.mxu0 %v2749
        %2757 = vmatpush1.bf16.msra.mxu0 %v2748
        %2758 = vmatprep.subr.bf16.mxu0 %v2751
        %2759 = vmatpush1.bf16.msra.mxu0 %v2750
        %2760 = vmatprep.subr.bf16.mxu0 0
        %2761 = vmatpush1.bf16.msra.mxu0 0
        %2762 = vmatprep.subr.bf16.mxu0 0
        %2763 = vmatpush1.bf16.msra.mxu0 0
        %2764 = vmatprep.subr.bf16.mxu0 0
        %2765 = vmatpush1.bf16.msra.mxu0 0
        %2766 = vmatprep.subr.bf16.mxu0 0
        %2767 = vmatpush1.bf16.msra.mxu0 0
        %2768 = vmatprep.subr.bf16.mxu0 0
        %2769 = vmatpush1.bf16.msra.mxu0 0
        %2770 = vmatprep.subr.bf16.mxu0 0
        %2771 = vmatpush1.bf16.msra.mxu0 0
        %2772 = vmatprep.subr.bf16.mxu0 0
        %2773 = vmatpush1.bf16.msra.mxu0 0
        %2774 = vmatprep.subr.bf16.mxu0 0
        %2775 = vmatpush1.bf16.msra.mxu0 0
        %2776 = vmatprep.subr.bf16.mxu0 0
        %2777 = vmatpush1.bf16.msra.mxu0 0
        %2778 = vmatprep.subr.bf16.mxu0 0
        %2779 = vmatpush1.bf16.msra.mxu0 0
        %2780 = vmatprep.subr.bf16.mxu0 0
        %2781 = vmatpush1.bf16.msra.mxu0 0
        %2782 = vmatprep.subr.bf16.mxu0 0
        %2783 = vmatpush1.bf16.msra.mxu0 0
        %2784 = vmatprep.mubr.bf16.mxu0 0
        %2785 = vmatmul.mubr.bf16.gmra.mrb[0].mxu0 %v580
        %v2786 = vpop.f32.mrb[0].mxu0
        %v2787 = vadd.f32 %v551, %v2786
        %v2788 = vpop.f32.mrb[0].mxu0
        %v2789 = vadd.f32 %v551, %v2788
        %v2790 = vpop.f32.mrb[0].mxu0
        %v2791 = vadd.f32 %v556, %v2790
        %v2792 = vpop.f32.mrb[0].mxu0
        %v2793 = vadd.f32 %v556, %v2792
        %2794 = vmatprep.mubr.bf16.mxu0 0
        %2795 = vmatmul.mubr.bf16.gmra.mrb[0].mxu0 %v583
        %v2796 = vpop.f32.mrb[0].mxu0
        %v2797 = vadd.f32 %v561, %v2796
        %v2798 = vpop.f32.mrb[0].mxu0
        %v2799 = vadd.f32 %v561, %v2798
        %v2800 = vpop.f32.mrb[0].mxu0
        %v2801 = vadd.f32 %v566, %v2800
        %v2802 = vpop.f32.mrb[0].mxu0
        %v2803 = vadd.f32 %v566, %v2802
        %2804 = vdwg.mxu0
        %v2805 = vxor.u32 %v2787, 2147483648
        %v2806 = vxor.u32 %v2789, 2147483648
        %v2807 = vxor.u32 %v2791, 2147483648
        %v2808 = vxor.u32 %v2793, 2147483648
        %v2809 = vxor.u32 %v2797, 2147483648
        %v2810 = vxor.u32 %v2799, 2147483648
        %v2811 = vxor.u32 %v2801, 2147483648
        %v2812 = vxor.u32 %v2803, 2147483648
        %v2813 = vmul.f32 %v2805, 1.442695
        %v2814 = vpow.pop %v2813
        %v2815 = vmul.f32 %v2806, 1.442695
        %v2816 = vpow.pop %v2815
        %v2817 = vmul.f32 %v2807, 1.442695
        %v2818 = vpow.pop %v2817
        %v2819 = vmul.f32 %v2808, 1.442695
        %v2820 = vpow.pop %v2819
        %v2821 = vmul.f32 %v2809, 1.442695
        %v2822 = vpow.pop %v2821
        %v2823 = vmul.f32 %v2810, 1.442695
        %v2824 = vpow.pop %v2823
        %v2825 = vmul.f32 %v2811, 1.442695
        %v2826 = vpow.pop %v2825
        %v2827 = vmul.f32 %v2812, 1.442695
        %v2828 = vpow.pop %v2827
        %v2829 = vadd.f32 %v2814, 1.0
        %v2830 = vadd.f32 %v2816, 1.0
        %v2831 = vadd.f32 %v2818, 1.0
        %v2832 = vadd.f32 %v2820, 1.0
        %v2833 = vadd.f32 %v2822, 1.0
        %v2834 = vadd.f32 %v2824, 1.0
        %v2835 = vadd.f32 %v2826, 1.0
        %v2836 = vadd.f32 %v2828, 1.0
        %v2837 = vrcp.pop %v2829
        %v2838 = vmul.f32 1.0, %v2837
        %v2839 = vrcp.pop %v2830
        %v2840 = vmul.f32 1.0, %v2839
        %v2841 = vrcp.pop %v2831
        %v2842 = vmul.f32 1.0, %v2841
        %v2843 = vrcp.pop %v2832
        %v2844 = vmul.f32 1.0, %v2843
        %v2845 = vrcp.pop %v2833
        %v2846 = vmul.f32 1.0, %v2845
        %v2847 = vrcp.pop %v2834
        %v2848 = vmul.f32 1.0, %v2847
        %v2849 = vrcp.pop %v2835
        %v2850 = vmul.f32 1.0, %v2849
        %v2851 = vrcp.pop %v2836
        %v2852 = vmul.f32 1.0, %v2851
        %v2853 = vmul.f32 %v2787, %v2838
        %v2854 = vmul.f32 %v2789, %v2840
        %v2855 = vmul.f32 %v2791, %v2842
        %v2856 = vmul.f32 %v2793, %v2844
        %v2857 = vmul.f32 %v2797, %v2846
        %v2858 = vmul.f32 %v2799, %v2848
        %v2859 = vmul.f32 %v2801, %v2850
        %v2860 = vmul.f32 %v2803, %v2852
        %v2861 = vpack.c.bf16 %v2855, %v2853
        %v2862 = vpack.c.bf16 %v2856, %v2854
        %v2863 = vpack.c.bf16 %v2859, %v2857
        %v2864 = vpack.c.bf16 %v2860, %v2858
        %2865 = vst [vmem:[#allocation2 + $0x8] sm:$0xff] %v2861
        %2866 = vst [vmem:[#allocation2 + $0x10] sm:$0xff] %v2862
        %2867 = vst [vmem:[#allocation2 + $0x28] sm:$0xff] %v2863
        %2868 = vst [vmem:[#allocation2 + $0x30] sm:$0xff] %v2864
        %vm2869 = vcmp.ge.s32.totalorder %v490, 48
        %vm2870 = vcmp.ge.s32.totalorder %v491, 48
        %v2871 = vld [vmem:[#allocation2] sm:$0xff]
        %v2872 = vld [vmem:[#allocation2 + $0x8] sm:$0xff]
        %v2873 = vld [vmem:[#allocation2 + $0x10] sm:$0xff]
        %v2874 = vld [vmem:[#allocation2 + $0x20] sm:$0xff]
        %v2875 = vld [vmem:[#allocation2 + $0x28] sm:$0xff]
        %v2876 = vld [vmem:[#allocation2 + $0x30] sm:$0xff]
        %vm2877 = vcmp.ge.s32.totalorder %v468, 3
        %vm2878 = vcmp.ge.s32.totalorder %v475, 3
        %vm2879 = vmand %vm2869, %vm2877
        %vm2880 = vmand %vm2870, %vm2878
        %v2881 = vsel %vm2879, 1, 0
        %v2882 = vsel %vm2880, 1, 0
        %vm2883 = vcmp.eq.s32.totalorder %v2881, 1
        %vm2884 = vcmp.eq.s32.totalorder %v2882, 1
        %vm2885 = vmpackc.low %vm2884, %vm2883
        %v2886 = vsel %vm2885, 65537, 0
        %v2887 = vlaneseq
        %v2888 = vshrl.u32 %v2887, 7
        %v2889 = vsub.s32 0, %v2888
        %v2890 = vrot.slane %v2886, %v2889
        %v2891 = vlaneseq
        %v2892 = vshrl.u32 %v2891, 7
        %v2893 = vsub.s32 4, %v2892
        %v2894 = vrot.slane %v2886, %v2893
        %2895 = vrot.lane.b32.xlu0 %v2890, 77
        %v2896 = vpop.permute.xlu0 %2895
        %2897 = vrot.lane.b32.xlu0 %v2894, 77
        %v2898 = vpop.permute.xlu0 %2897
        %vm2899 = vcmask 629760
        %v2900 = vsel %vm2899, %v2896, %v2898
        %vm2901 = vcmp.ne.s16.totalorder %v2896, 0
        %vm2902 = vcmp.ne.s16.totalorder %v2900, 0
        %vm2903 = vcmp.ne.s16.totalorder %v2898, 0
        %v2904 = vsel %vm2901, %v2871, 0
        %v2905 = vsel %vm2902, %v2872, 0
        %v2906 = vsel %vm2903, %v2873, 0
        %v2907 = vsel %vm2901, %v2874, 0
        %v2908 = vsel %vm2902, %v2875, 0
        %v2909 = vsel %vm2903, %v2876, 0
        %2916 = vrot.lane.b32.xlu0 %v2904, 51
        %v2917 = vpop.permute.xlu0 %2916
        %2918 = vrot.lane.b32.xlu0 %v2905, 51
        %v2919 = vpop.permute.xlu0 %2918
        %2920 = vrot.lane.b32.xlu0 %v2906, 51
        %v2921 = vpop.permute.xlu0 %2920
        %2922 = vrot.lane.b32.xlu0 %v2907, 51
        %v2923 = vpop.permute.xlu0 %2922
        %2924 = vrot.lane.b32.xlu0 %v2908, 51
        %v2925 = vpop.permute.xlu0 %2924
        %2926 = vrot.lane.b32.xlu0 %v2909, 51
        %v2927 = vpop.permute.xlu0 %2926
        %vm2928 = vcmask 416768
        %v2929 = vsel %vm2928, %v2917, %v2919
        %v2930 = vsel %vm2928, %v2919, %v2921
        %v2931 = vsel %vm2928, %v2923, %v2925
        %v2932 = vsel %vm2928, %v2925, %v2927
        %2937 = vst [vmem:[#allocation3] sm:$0xff] %v2929
        %2938 = vst [vmem:[#allocation3 + $0x8] sm:$0xff] %v2930
        %2939 = vst [vmem:[#allocation3 + $0x10] sm:$0xff] %v2931
        %2940 = vst [vmem:[#allocation3 + $0x18] sm:$0xff] %v2932
        %v2941 = vld [vmem:[#allocation2] sm:$0xff]
        %v2942 = vld [vmem:[#allocation2 + $0x8] sm:$0xff]
        %v2943 = vld [vmem:[#allocation2 + $0x10] sm:$0xff]
        %v2944 = vld [vmem:[#allocation2 + $0x20] sm:$0xff]
        %v2945 = vld [vmem:[#allocation2 + $0x28] sm:$0xff]
        %v2946 = vld [vmem:[#allocation2 + $0x30] sm:$0xff]
        %v2947 = vsel %vm2869, 1, 0
        %v2948 = vsel %vm2870, 1, 0
        %vm2949 = vcmp.eq.s32.totalorder %v2947, 1
        %vm2950 = vcmp.eq.s32.totalorder %v2948, 1
        %vm2951 = vmpackc.low %vm2950, %vm2949
        %v2952 = vsel %vm2951, 65537, 0
        %v2953 = vlaneseq
        %v2954 = vshrl.u32 %v2953, 7
        %v2955 = vsub.s32 0, %v2954
        %v2956 = vrot.slane %v2952, %v2955
        %v2957 = vlaneseq
        %v2958 = vshrl.u32 %v2957, 7
        %v2959 = vsub.s32 4, %v2958
        %v2960 = vrot.slane %v2952, %v2959
        %2961 = vrot.lane.b32.xlu0 %v2956, 80
        %v2962 = vpop.permute.xlu0 %2961
        %2963 = vrot.lane.b32.xlu0 %v2960, 80
        %v2964 = vpop.permute.xlu0 %2963
        %vm2965 = vcmask 654336
        %v2966 = vsel %vm2965, %v2962, %v2964
        %vm2967 = vcmp.ne.s16.totalorder %v2962, 0
        %vm2968 = vcmp.ne.s16.totalorder %v2966, 0
        %vm2969 = vcmp.ne.s16.totalorder %v2964, 0
        %v2970 = vsel %vm2967, %v2941, 0
        %v2971 = vsel %vm2968, %v2942, 0
        %v2972 = vsel %vm2969, %v2943, 0
        %v2973 = vsel %vm2967, %v2944, 0
        %v2974 = vsel %vm2968, %v2945, 0
        %v2975 = vsel %vm2969, %v2946, 0
        %2982 = vrot.lane.b32.xlu0 %v2970, 48
        %v2983 = vpop.permute.xlu0 %2982
        %2984 = vrot.lane.b32.xlu0 %v2971, 48
        %v2985 = vpop.permute.xlu0 %2984
        %2986 = vrot.lane.b32.xlu0 %v2972, 48
        %v2987 = vpop.permute.xlu0 %2986
        %2988 = vrot.lane.b32.xlu0 %v2973, 48
        %v2989 = vpop.permute.xlu0 %2988
        %2990 = vrot.lane.b32.xlu0 %v2974, 48
        %v2991 = vpop.permute.xlu0 %2990
        %2992 = vrot.lane.b32.xlu0 %v2975, 48
        %v2993 = vpop.permute.xlu0 %2992
        %vm2994 = vcmask 392192
        %v2995 = vsel %vm2994, %v2983, %v2985
        %v2996 = vsel %vm2994, %v2985, %v2987
        %v2997 = vsel %vm2994, %v2989, %v2991
        %v2998 = vsel %vm2994, %v2991, %v2993
        %3003 = vst [vmem:[#allocation3 + $0x20] sm:$0xff] %v2995
        %3004 = vst [vmem:[#allocation3 + $0x28] sm:$0xff] %v2996
        %3005 = vst [vmem:[#allocation3 + $0x30] sm:$0xff] %v2997
        %3006 = vst [vmem:[#allocation3 + $0x38] sm:$0xff] %v2998
        %v3007 = vld [vmem:[#allocation2] sm:$0xff]
        %v3008 = vld [vmem:[#allocation2 + $0x8] sm:$0xff]
        %v3009 = vld [vmem:[#allocation2 + $0x10] sm:$0xff]
        %v3010 = vld [vmem:[#allocation2 + $0x20] sm:$0xff]
        %v3011 = vld [vmem:[#allocation2 + $0x28] sm:$0xff]
        %v3012 = vld [vmem:[#allocation2 + $0x30] sm:$0xff]
        %vm3013 = vcmp.lt.s32.totalorder %v468, 13
        %vm3014 = vcmp.lt.s32.totalorder %v475, 13
        %vm3015 = vmand %vm2869, %vm3013
        %vm3016 = vmand %vm2870, %vm3014
        %v3017 = vsel %vm3015, 1, 0
        %v3018 = vsel %vm3016, 1, 0
        %vm3019 = vcmp.eq.s32.totalorder %v3017, 1
        %vm3020 = vcmp.eq.s32.totalorder %v3018, 1
        %vm3021 = vmpackc.low %vm3020, %vm3019
        %v3022 = vsel %vm3021, 65537, 0
        %v3023 = vlaneseq
        %v3024 = vshrl.u32 %v3023, 7
        %v3025 = vsub.s32 0, %v3024
        %v3026 = vrot.slane %v3022, %v3025
        %v3027 = vlaneseq
        %v3028 = vshrl.u32 %v3027, 7
        %v3029 = vsub.s32 4, %v3028
        %v3030 = vrot.slane %v3022, %v3029
        %3031 = vrot.lane.b32.xlu0 %v3026, 83
        %v3032 = vpop.permute.xlu0 %3031
        %3033 = vrot.lane.b32.xlu0 %v3030, 83
        %v3034 = vpop.permute.xlu0 %3033
        %vm3035 = vcmask 678912
        %v3036 = vsel %vm3035, %v3032, %v3034
        %vm3037 = vcmp.ne.s16.totalorder %v3032, 0
        %vm3038 = vcmp.ne.s16.totalorder %v3036, 0
        %vm3039 = vcmp.ne.s16.totalorder %v3034, 0
        %v3040 = vsel %vm3037, %v3007, 0
        %v3041 = vsel %vm3038, %v3008, 0
        %v3042 = vsel %vm3039, %v3009, 0
        %v3043 = vsel %vm3037, %v3010, 0
        %v3044 = vsel %vm3038, %v3011, 0
        %v3045 = vsel %vm3039, %v3012, 0
        %3052 = vrot.lane.b32.xlu0 %v3040, 45
        %v3053 = vpop.permute.xlu0 %3052
        %3054 = vrot.lane.b32.xlu0 %v3041, 45
        %v3055 = vpop.permute.xlu0 %3054
        %3056 = vrot.lane.b32.xlu0 %v3042, 45
        %v3057 = vpop.permute.xlu0 %3056
        %3058 = vrot.lane.b32.xlu0 %v3043, 45
        %v3059 = vpop.permute.xlu0 %3058
        %3060 = vrot.lane.b32.xlu0 %v3044, 45
        %v3061 = vpop.permute.xlu0 %3060
        %3062 = vrot.lane.b32.xlu0 %v3045, 45
        %v3063 = vpop.permute.xlu0 %3062
        %vm3064 = vcmask 367616
        %v3065 = vsel %vm3064, %v3053, %v3055
        %v3066 = vsel %vm3064, %v3055, %v3057
        %v3067 = vsel %vm3064, %v3059, %v3061
        %v3068 = vsel %vm3064, %v3061, %v3063
        %3073 = vst [vmem:[#allocation3 + $0x40] sm:$0xff] %v3065
        %3074 = vst [vmem:[#allocation3 + $0x48] sm:$0xff] %v3066
        %3075 = vst [vmem:[#allocation3 + $0x50] sm:$0xff] %v3067
        %3076 = vst [vmem:[#allocation3 + $0x58] sm:$0xff] %v3068
        %v3077 = vld [vmem:[#allocation2] sm:$0xff]
        %v3078 = vld [vmem:[#allocation2 + $0x8] sm:$0xff]
        %v3079 = vld [vmem:[#allocation2 + $0x10] sm:$0xff]
        %v3080 = vld [vmem:[#allocation2 + $0x20] sm:$0xff]
        %v3081 = vld [vmem:[#allocation2 + $0x28] sm:$0xff]
        %v3082 = vld [vmem:[#allocation2 + $0x30] sm:$0xff]
        %v3083 = vsel %vm2877, 1, 0
        %v3084 = vsel %vm2878, 1, 0
        %vm3085 = vcmp.eq.s32.totalorder %v3083, 1
        %vm3086 = vcmp.eq.s32.totalorder %v3084, 1
        %vm3087 = vmpackc.low %vm3086, %vm3085
        %v3088 = vsel %vm3087, 65537, 0
        %v3089 = vlaneseq
        %v3090 = vshrl.u32 %v3089, 7
        %v3091 = vsub.s32 0, %v3090
        %v3092 = vrot.slane %v3088, %v3091
        %v3093 = vlaneseq
        %v3094 = vshrl.u32 %v3093, 7
        %v3095 = vsub.s32 4, %v3094
        %v3096 = vrot.slane %v3088, %v3095
        %3097 = vrot.lane.b32.xlu0 %v3092, 125
        %v3098 = vpop.permute.xlu0 %3097
        %3099 = vrot.lane.b32.xlu0 %v3096, 125
        %v3100 = vpop.permute.xlu0 %3099
        %vm3101 = vcmask 1022976
        %v3102 = vsel %vm3101, %v3098, %v3100
        %vm3103 = vcmp.ne.s16.totalorder %v3098, 0
        %vm3104 = vcmp.ne.s16.totalorder %v3102, 0
        %vm3105 = vcmp.ne.s16.totalorder %v3100, 0
        %v3106 = vsel %vm3103, %v3077, 0
        %v3107 = vsel %vm3104, %v3078, 0
        %v3108 = vsel %vm3105, %v3079, 0
        %v3109 = vsel %vm3103, %v3080, 0
        %v3110 = vsel %vm3104, %v3081, 0
        %v3111 = vsel %vm3105, %v3082, 0
        %3118 = vrot.lane.b32.xlu0 %v3106, 3
        %v3119 = vpop.permute.xlu0 %3118
        %3120 = vrot.lane.b32.xlu0 %v3107, 3
        %v3121 = vpop.permute.xlu0 %3120
        %3122 = vrot.lane.b32.xlu0 %v3108, 3
        %v3123 = vpop.permute.xlu0 %3122
        %3124 = vrot.lane.b32.xlu0 %v3109, 3
        %v3125 = vpop.permute.xlu0 %3124
        %3126 = vrot.lane.b32.xlu0 %v3110, 3
        %v3127 = vpop.permute.xlu0 %3126
        %3128 = vrot.lane.b32.xlu0 %v3111, 3
        %v3129 = vpop.permute.xlu0 %3128
        %vm3130 = vcmask 23552
        %v3131 = vsel %vm3130, %v3119, %v3121
        %v3132 = vsel %vm3130, %v3121, %v3123
        %v3133 = vsel %vm3130, %v3125, %v3127
        %v3134 = vsel %vm3130, %v3127, %v3129
        %3139 = vst [vmem:[#allocation3 + $0x60] sm:$0xff] %v3131
        %3140 = vst [vmem:[#allocation3 + $0x68] sm:$0xff] %v3132
        %3141 = vst [vmem:[#allocation3 + $0x70] sm:$0xff] %v3133
        %3142 = vst [vmem:[#allocation3 + $0x78] sm:$0xff] %v3134
        %v3143 = vld [vmem:[#allocation2 + $0x8] sm:$0xff]
        %v3144 = vld [vmem:[#allocation2 + $0x10] sm:$0xff]
        %v3145 = vld [vmem:[#allocation2 + $0x28] sm:$0xff]
        %v3146 = vld [vmem:[#allocation2 + $0x30] sm:$0xff]
        %3147 = vst [vmem:[#allocation3 + $0x80] sm:$0xff] %v3143
        %3148 = vst [vmem:[#allocation3 + $0x88] sm:$0xff] %v3144
        %3149 = vst [vmem:[#allocation3 + $0x90] sm:$0xff] %v3145
        %3150 = vst [vmem:[#allocation3 + $0x98] sm:$0xff] %v3146
        %v3151 = vld [vmem:[#allocation2 + $0x8] sm:$0xff]
        %v3152 = vld [vmem:[#allocation2 + $0x10] sm:$0xff]
        %v3153 = vld [vmem:[#allocation2 + $0x18] sm:$0xff]
        %v3154 = vld [vmem:[#allocation2 + $0x28] sm:$0xff]
        %v3155 = vld [vmem:[#allocation2 + $0x30] sm:$0xff]
        %v3156 = vld [vmem:[#allocation2 + $0x38] sm:$0xff]
        %v3157 = vsel %vm3013, 1, 0
        %v3158 = vsel %vm3014, 1, 0
        %vm3159 = vcmp.eq.s32.totalorder %v3157, 1
        %vm3160 = vcmp.eq.s32.totalorder %v3158, 1
        %vm3161 = vmpackc.low %vm3160, %vm3159
        %v3162 = vsel %vm3161, 65537, 0
        %v3163 = vlaneseq
        %v3164 = vshrl.u32 %v3163, 7
        %v3165 = vsub.s32 0, %v3164
        %v3166 = vrot.slane %v3162, %v3165
        %v3167 = vlaneseq
        %v3168 = vshrl.u32 %v3167, 7
        %v3169 = vsub.s32 4, %v3168
        %v3170 = vrot.slane %v3162, %v3169
        %3171 = vrot.lane.b32.xlu0 %v3166, 3
        %v3172 = vpop.permute.xlu0 %3171
        %3173 = vrot.lane.b32.xlu0 %v3170, 3
        %v3174 = vpop.permute.xlu0 %3173
        %v3175 = vsel %vm3130, %v3172, %v3174
        %vm3176 = vcmp.ne.s16.totalorder %v3172, 0
        %vm3177 = vcmp.ne.s16.totalorder %v3175, 0
        %vm3178 = vcmp.ne.s16.totalorder %v3174, 0
        %v3179 = vsel %vm3176, %v3151, 0
        %v3180 = vsel %vm3177, %v3152, 0
        %v3181 = vsel %vm3178, %v3153, 0
        %v3182 = vsel %vm3176, %v3154, 0
        %v3183 = vsel %vm3177, %v3155, 0
        %v3184 = vsel %vm3178, %v3156, 0
        %3191 = vrot.lane.b32.xlu0 %v3179, 125
        %v3192 = vpop.permute.xlu0 %3191
        %3193 = vrot.lane.b32.xlu0 %v3180, 125
        %v3194 = vpop.permute.xlu0 %3193
        %3195 = vrot.lane.b32.xlu0 %v3181, 125
        %v3196 = vpop.permute.xlu0 %3195
        %3197 = vrot.lane.b32.xlu0 %v3182, 125
        %v3198 = vpop.permute.xlu0 %3197
        %3199 = vrot.lane.b32.xlu0 %v3183, 125
        %v3200 = vpop.permute.xlu0 %3199
        %3201 = vrot.lane.b32.xlu0 %v3184, 125
        %v3202 = vpop.permute.xlu0 %3201
        %v3203 = vsel %vm3101, %v3192, %v3194
        %v3204 = vsel %vm3101, %v3194, %v3196
        %v3205 = vsel %vm3101, %v3198, %v3200
        %v3206 = vsel %vm3101, %v3200, %v3202
        %3211 = vst [vmem:[#allocation3 + $0xa0] sm:$0xff] %v3203
        %3212 = vst [vmem:[#allocation3 + $0xa8] sm:$0xff] %v3204
        %3213 = vst [vmem:[#allocation3 + $0xb0] sm:$0xff] %v3205
        %3214 = vst [vmem:[#allocation3 + $0xb8] sm:$0xff] %v3206
        %vm3215 = vcmp.lt.s32.totalorder %v490, 208
        %vm3216 = vcmp.lt.s32.totalorder %v491, 208
        %v3217 = vld [vmem:[#allocation2 + $0x8] sm:$0xff]
        %v3218 = vld [vmem:[#allocation2 + $0x10] sm:$0xff]
        %v3219 = vld [vmem:[#allocation2 + $0x18] sm:$0xff]
        %v3220 = vld [vmem:[#allocation2 + $0x28] sm:$0xff]
        %v3221 = vld [vmem:[#allocation2 + $0x30] sm:$0xff]
        %v3222 = vld [vmem:[#allocation2 + $0x38] sm:$0xff]
        %vm3223 = vmand %vm3215, %vm2877
        %vm3224 = vmand %vm3216, %vm2878
        %v3225 = vsel %vm3223, 1, 0
        %v3226 = vsel %vm3224, 1, 0
        %vm3227 = vcmp.eq.s32.totalorder %v3225, 1
        %vm3228 = vcmp.eq.s32.totalorder %v3226, 1
        %vm3229 = vmpackc.low %vm3228, %vm3227
        %v3230 = vsel %vm3229, 65537, 0
        %v3231 = vlaneseq
        %v3232 = vshrl.u32 %v3231, 7
        %v3233 = vsub.s32 0, %v3232
        %v3234 = vrot.slane %v3230, %v3233
        %v3235 = vlaneseq
        %v3236 = vshrl.u32 %v3235, 7
        %v3237 = vsub.s32 4, %v3236
        %v3238 = vrot.slane %v3230, %v3237
        %3239 = vrot.lane.b32.xlu0 %v3234, 45
        %v3240 = vpop.permute.xlu0 %3239
        %3241 = vrot.lane.b32.xlu0 %v3238, 45
        %v3242 = vpop.permute.xlu0 %3241
        %v3243 = vsel %vm3064, %v3240, %v3242
        %vm3244 = vcmp.ne.s16.totalorder %v3240, 0
        %vm3245 = vcmp.ne.s16.totalorder %v3243, 0
        %vm3246 = vcmp.ne.s16.totalorder %v3242, 0
        %v3247 = vsel %vm3244, %v3217, 0
        %v3248 = vsel %vm3245, %v3218, 0
        %v3249 = vsel %vm3246, %v3219, 0
        %v3250 = vsel %vm3244, %v3220, 0
        %v3251 = vsel %vm3245, %v3221, 0
        %v3252 = vsel %vm3246, %v3222, 0
        %3259 = vrot.lane.b32.xlu0 %v3247, 83
        %v3260 = vpop.permute.xlu0 %3259
        %3261 = vrot.lane.b32.xlu0 %v3248, 83
        %v3262 = vpop.permute.xlu0 %3261
        %3263 = vrot.lane.b32.xlu0 %v3249, 83
        %v3264 = vpop.permute.xlu0 %3263
        %3265 = vrot.lane.b32.xlu0 %v3250, 83
        %v3266 = vpop.permute.xlu0 %3265
        %3267 = vrot.lane.b32.xlu0 %v3251, 83
        %v3268 = vpop.permute.xlu0 %3267
        %3269 = vrot.lane.b32.xlu0 %v3252, 83
        %v3270 = vpop.permute.xlu0 %3269
        %v3271 = vsel %vm3035, %v3260, %v3262
        %v3272 = vsel %vm3035, %v3262, %v3264
        %v3273 = vsel %vm3035, %v3266, %v3268
        %v3274 = vsel %vm3035, %v3268, %v3270
        %3279 = vst [vmem:[#allocation3 + $0xc0] sm:$0xff] %v3271
        %3280 = vst [vmem:[#allocation3 + $0xc8] sm:$0xff] %v3272
        %3281 = vst [vmem:[#allocation3 + $0xd0] sm:$0xff] %v3273
        %3282 = vst [vmem:[#allocation3 + $0xd8] sm:$0xff] %v3274
        %v3283 = vld [vmem:[#allocation2 + $0x8] sm:$0xff]
        %v3284 = vld [vmem:[#allocation2 + $0x10] sm:$0xff]
        %v3285 = vld [vmem:[#allocation2 + $0x18] sm:$0xff]
        %v3286 = vld [vmem:[#allocation2 + $0x28] sm:$0xff]
        %v3287 = vld [vmem:[#allocation2 + $0x30] sm:$0xff]
        %v3288 = vld [vmem:[#allocation2 + $0x38] sm:$0xff]
        %v3289 = vsel %vm3215, 1, 0
        %v3290 = vsel %vm3216, 1, 0
        %vm3291 = vcmp.eq.s32.totalorder %v3289, 1
        %vm3292 = vcmp.eq.s32.totalorder %v3290, 1
        %vm3293 = vmpackc.low %vm3292, %vm3291
        %v3294 = vsel %vm3293, 65537, 0
        %v3295 = vlaneseq
        %v3296 = vshrl.u32 %v3295, 7
        %v3297 = vsub.s32 0, %v3296
        %v3298 = vrot.slane %v3294, %v3297
        %v3299 = vlaneseq
        %v3300 = vshrl.u32 %v3299, 7
        %v3301 = vsub.s32 4, %v3300
        %v3302 = vrot.slane %v3294, %v3301
        %3303 = vrot.lane.b32.xlu0 %v3298, 48
        %v3304 = vpop.permute.xlu0 %3303
        %3305 = vrot.lane.b32.xlu0 %v3302, 48
        %v3306 = vpop.permute.xlu0 %3305
        %v3307 = vsel %vm2994, %v3304, %v3306
        %vm3308 = vcmp.ne.s16.totalorder %v3304, 0
        %vm3309 = vcmp.ne.s16.totalorder %v3307, 0
        %vm3310 = vcmp.ne.s16.totalorder %v3306, 0
        %v3311 = vsel %vm3308, %v3283, 0
        %v3312 = vsel %vm3309, %v3284, 0
        %v3313 = vsel %vm3310, %v3285, 0
        %v3314 = vsel %vm3308, %v3286, 0
        %v3315 = vsel %vm3309, %v3287, 0
        %v3316 = vsel %vm3310, %v3288, 0
        %3323 = vrot.lane.b32.xlu0 %v3311, 80
        %v3324 = vpop.permute.xlu0 %3323
        %3325 = vrot.lane.b32.xlu0 %v3312, 80
        %v3326 = vpop.permute.xlu0 %3325
        %3327 = vrot.lane.b32.xlu0 %v3313, 80
        %v3328 = vpop.permute.xlu0 %3327
        %3329 = vrot.lane.b32.xlu0 %v3314, 80
        %v3330 = vpop.permute.xlu0 %3329
        %3331 = vrot.lane.b32.xlu0 %v3315, 80
        %v3332 = vpop.permute.xlu0 %3331
        %3333 = vrot.lane.b32.xlu0 %v3316, 80
        %v3334 = vpop.permute.xlu0 %3333
        %v3335 = vsel %vm2965, %v3324, %v3326
        %v3336 = vsel %vm2965, %v3326, %v3328
        %v3337 = vsel %vm2965, %v3330, %v3332
        %v3338 = vsel %vm2965, %v3332, %v3334
        %3343 = vst [vmem:[#allocation3 + $0xe0] sm:$0xff] %v3335
        %3344 = vst [vmem:[#allocation3 + $0xe8] sm:$0xff] %v3336
        %3345 = vst [vmem:[#allocation3 + $0xf0] sm:$0xff] %v3337
        %3346 = vst [vmem:[#allocation3 + $0xf8] sm:$0xff] %v3338
        %v3347 = vld [vmem:[#allocation2 + $0x8] sm:$0xff]
        %v3348 = vld [vmem:[#allocation2 + $0x10] sm:$0xff]
        %v3349 = vld [vmem:[#allocation2 + $0x18] sm:$0xff]
        %v3350 = vld [vmem:[#allocation2 + $0x28] sm:$0xff]
        %v3351 = vld [vmem:[#allocation2 + $0x30] sm:$0xff]
        %v3352 = vld [vmem:[#allocation2 + $0x38] sm:$0xff]
        %vm3353 = vmand %vm3215, %vm3013
        %vm3354 = vmand %vm3216, %vm3014
        %v3355 = vsel %vm3353, 1, 0
        %v3356 = vsel %vm3354, 1, 0
        %vm3357 = vcmp.eq.s32.totalorder %v3355, 1
        %vm3358 = vcmp.eq.s32.totalorder %v3356, 1
        %vm3359 = vmpackc.low %vm3358, %vm3357
        %v3360 = vsel %vm3359, 65537, 0
        %v3361 = vlaneseq
        %v3362 = vshrl.u32 %v3361, 7
        %v3363 = vsub.s32 0, %v3362
        %v3364 = vrot.slane %v3360, %v3363
        %v3365 = vlaneseq
        %v3366 = vshrl.u32 %v3365, 7
        %v3367 = vsub.s32 4, %v3366
        %v3368 = vrot.slane %v3360, %v3367
        %3369 = vrot.lane.b32.xlu0 %v3364, 51
        %v3370 = vpop.permute.xlu0 %3369
        %3371 = vrot.lane.b32.xlu0 %v3368, 51
        %v3372 = vpop.permute.xlu0 %3371
        %v3373 = vsel %vm2928, %v3370, %v3372
        %vm3374 = vcmp.ne.s16.totalorder %v3370, 0
        %vm3375 = vcmp.ne.s16.totalorder %v3373, 0
        %vm3376 = vcmp.ne.s16.totalorder %v3372, 0
        %v3377 = vsel %vm3374, %v3347, 0
        %v3378 = vsel %vm3375, %v3348, 0
        %v3379 = vsel %vm3376, %v3349, 0
        %v3380 = vsel %vm3374, %v3350, 0
        %v3381 = vsel %vm3375, %v3351, 0
        %v3382 = vsel %vm3376, %v3352, 0
        %3389 = vrot.lane.b32.xlu0 %v3377, 77
        %v3390 = vpop.permute.xlu0 %3389
        %3391 = vrot.lane.b32.xlu0 %v3378, 77
        %v3392 = vpop.permute.xlu0 %3391
        %3393 = vrot.lane.b32.xlu0 %v3379, 77
        %v3394 = vpop.permute.xlu0 %3393
        %3395 = vrot.lane.b32.xlu0 %v3380, 77
        %v3396 = vpop.permute.xlu0 %3395
        %3397 = vrot.lane.b32.xlu0 %v3381, 77
        %v3398 = vpop.permute.xlu0 %3397
        %3399 = vrot.lane.b32.xlu0 %v3382, 77
        %v3400 = vpop.permute.xlu0 %3399
        %v3401 = vsel %vm2899, %v3390, %v3392
        %v3402 = vsel %vm2899, %v3392, %v3394
        %v3403 = vsel %vm2899, %v3396, %v3398
        %v3404 = vsel %vm2899, %v3398, %v3400
        %3409 = vst [vmem:[#allocation3 + $0x100] sm:$0xff] %v3401
        %3410 = vst [vmem:[#allocation3 + $0x108] sm:$0xff] %v3402
        %3411 = vst [vmem:[#allocation3 + $0x110] sm:$0xff] %v3403
        %3412 = vst [vmem:[#allocation3 + $0x118] sm:$0xff] %v3404
        %v3413 = vld [vmem:[#allocation3] sm:$0xff]
        %v3414 = vld [vmem:[#allocation3 + $0x8] sm:$0xff]
        %v3415 = vld [vmem:[#allocation3 + $0x10] sm:$0xff]
        %v3416 = vld [vmem:[#allocation3 + $0x18] sm:$0xff]
        %v3417 = vld [vmem:[#allocation3 + $0x20] sm:$0xff]
        %v3418 = vld [vmem:[#allocation3 + $0x28] sm:$0xff]
        %v3419 = vld [vmem:[#allocation3 + $0x30] sm:$0xff]
        %v3420 = vld [vmem:[#allocation3 + $0x38] sm:$0xff]
        %v3421 = vld [vmem:[#allocation3 + $0x40] sm:$0xff]
        %v3422 = vld [vmem:[#allocation3 + $0x48] sm:$0xff]
        %v3423 = vld [vmem:[#allocation3 + $0x50] sm:$0xff]
        %v3424 = vld [vmem:[#allocation3 + $0x58] sm:$0xff]
        %v3425 = vld [vmem:[#allocation3 + $0x60] sm:$0xff]
        %v3426 = vld [vmem:[#allocation3 + $0x68] sm:$0xff]
        %v3427 = vld [vmem:[#allocation3 + $0x70] sm:$0xff]
        %v3428 = vld [vmem:[#allocation3 + $0x78] sm:$0xff]
        %v3429 = vld [vmem:[#allocation3 + $0x80] sm:$0xff]
        %v3430 = vld [vmem:[#allocation3 + $0x88] sm:$0xff]
        %v3431 = vld [vmem:[#allocation3 + $0x90] sm:$0xff]
        %v3432 = vld [vmem:[#allocation3 + $0x98] sm:$0xff]
        %v3433 = vld [vmem:[#allocation3 + $0xa0] sm:$0xff]
        %v3434 = vld [vmem:[#allocation3 + $0xa8] sm:$0xff]
        %v3435 = vld [vmem:[#allocation3 + $0xb0] sm:$0xff]
        %v3436 = vld [vmem:[#allocation3 + $0xb8] sm:$0xff]
        %v3437 = vld [vmem:[#allocation3 + $0xc0] sm:$0xff]
        %v3438 = vld [vmem:[#allocation3 + $0xc8] sm:$0xff]
        %v3439 = vld [vmem:[#allocation3 + $0xd0] sm:$0xff]
        %v3440 = vld [vmem:[#allocation3 + $0xd8] sm:$0xff]
        %v3441 = vld [vmem:[#allocation3 + $0xe0] sm:$0xff]
        %v3442 = vld [vmem:[#allocation3 + $0xe8] sm:$0xff]
        %v3443 = vld [vmem:[#allocation3 + $0xf0] sm:$0xff]
        %v3444 = vld [vmem:[#allocation3 + $0xf8] sm:$0xff]
        %v3445 = vld [vmem:[#allocation3 + $0x100] sm:$0xff]
        %v3446 = vld [vmem:[#allocation3 + $0x108] sm:$0xff]
        %v3447 = vld [vmem:[#allocation3 + $0x110] sm:$0xff]
        %v3448 = vld [vmem:[#allocation3 + $0x118] sm:$0xff]
        %3449 = vmatprep.subr.bf16.mxu0 %v3414
        %3450 = vmatpush1.bf16.msra.mxu0 %v3413
        %3451 = vmatprep.subr.bf16.mxu0 %v3416
        %3452 = vmatpush1.bf16.msra.mxu0 %v3415
        %3453 = vmatprep.subr.bf16.mxu0 %v3418
        %3454 = vmatpush1.bf16.msra.mxu0 %v3417
        %3455 = vmatprep.subr.bf16.mxu0 %v3420
        %3456 = vmatpush1.bf16.msra.mxu0 %v3419
        %3457 = vmatprep.subr.bf16.mxu0 %v3422
        %3458 = vmatpush1.bf16.msra.mxu0 %v3421
        %3459 = vmatprep.subr.bf16.mxu0 %v3424
        %3460 = vmatpush1.bf16.msra.mxu0 %v3423
        %3461 = vmatprep.subr.bf16.mxu0 %v3426
        %3462 = vmatpush1.bf16.msra.mxu0 %v3425
        %3463 = vmatprep.subr.bf16.mxu0 %v3428
        %3464 = vmatpush1.bf16.msra.mxu0 %v3427
        %3465 = vmatprep.subr.bf16.mxu0 %v3430
        %3466 = vmatpush1.bf16.msra.mxu0 %v3429
        %3467 = vmatprep.subr.bf16.mxu0 %v3432
        %3468 = vmatpush1.bf16.msra.mxu0 %v3431
        %3469 = vmatprep.subr.bf16.mxu0 %v3434
        %3470 = vmatpush1.bf16.msra.mxu0 %v3433
        %3471 = vmatprep.subr.bf16.mxu0 %v3436
        %3472 = vmatpush1.bf16.msra.mxu0 %v3435
        %3473 = vmatprep.subr.bf16.mxu0 %v3438
        %3474 = vmatpush1.bf16.msra.mxu0 %v3437
        %3475 = vmatprep.subr.bf16.mxu0 %v3440
        %3476 = vmatpush1.bf16.msra.mxu0 %v3439
        %3477 = vmatprep.subr.bf16.mxu0 %v3442
        %3478 = vmatpush1.bf16.msra.mxu0 %v3441
        %3479 = vmatprep.subr.bf16.mxu0 %v3444
        %3480 = vmatpush1.bf16.msra.mxu0 %v3443
        %3481 = vmatprep.mubr.bf16.mxu0 %v1363
        %3482 = vmatmul.mubr.bf16.gmra.mrb[0].mxu0 %v1362
        %v3483 = vpop.f32.mrb[0].mxu0
        %v3484 = vadd.f32 %v1285, %v3483
        %v3485 = vpop.f32.mrb[0].mxu0
        %v3486 = vadd.f32 %v1285, %v3485
        %v3487 = vpop.f32.mrb[0].mxu0
        %v3488 = vadd.f32 %v1290, %v3487
        %v3489 = vpop.f32.mrb[0].mxu0
        %v3490 = vadd.f32 %v1290, %v3489
        %3491 = vmatprep.mubr.bf16.mxu0 %v1366
        %3492 = vmatmul.mubr.bf16.gmra.mrb[0].mxu0 %v1365
        %v3493 = vpop.f32.mrb[0].mxu0
        %v3494 = vadd.f32 %v1295, %v3493
        %v3495 = vpop.f32.mrb[0].mxu0
        %v3496 = vadd.f32 %v1295, %v3495
        %v3497 = vpop.f32.mrb[0].mxu0
        %v3498 = vadd.f32 %v1300, %v3497
        %v3499 = vpop.f32.mrb[0].mxu0
        %v3500 = vadd.f32 %v1300, %v3499
        %3501 = vmatprep.mubr.bf16.mxu0 %v1369
        %3502 = vmatmul.mubr.bf16.gmra.mrb[0].mxu0 %v1368
        %v3503 = vpop.f32.mrb[0].mxu0
        %v3504 = vadd.f32 %v1305, %v3503
        %v3505 = vpop.f32.mrb[0].mxu0
        %v3506 = vadd.f32 %v1305, %v3505
        %v3507 = vpop.f32.mrb[0].mxu0
        %v3508 = vadd.f32 %v1310, %v3507
        %v3509 = vpop.f32.mrb[0].mxu0
        %v3510 = vadd.f32 %v1310, %v3509
        %3511 = vmatprep.mubr.bf16.mxu0 %v1372
        %3512 = vmatmul.mubr.bf16.gmra.mrb[0].mxu0 %v1371
        %v3513 = vpop.f32.mrb[0].mxu0
        %v3514 = vadd.f32 %v1315, %v3513
        %v3515 = vpop.f32.mrb[0].mxu0
        %v3516 = vadd.f32 %v1315, %v3515
        %v3517 = vpop.f32.mrb[0].mxu0
        %v3518 = vadd.f32 %v1320, %v3517
        %v3519 = vpop.f32.mrb[0].mxu0
        %v3520 = vadd.f32 %v1320, %v3519
        %3521 = vdwg.mxu0
        %3522 = vmatprep.subr.bf16.mxu0 %v3446
        %3523 = vmatpush1.bf16.msra.mxu0 %v3445
        %3524 = vmatprep.subr.bf16.mxu0 %v3448
        %3525 = vmatpush1.bf16.msra.mxu0 %v3447
        %3526 = vmatprep.subr.bf16.mxu0 0
        %3527 = vmatpush1.bf16.msra.mxu0 0
        %3528 = vmatprep.subr.bf16.mxu0 0
        %3529 = vmatpush1.bf16.msra.mxu0 0
        %3530 = vmatprep.subr.bf16.mxu0 0
        %3531 = vmatpush1.bf16.msra.mxu0 0
        %3532 = vmatprep.subr.bf16.mxu0 0
        %3533 = vmatpush1.bf16.msra.mxu0 0
        %3534 = vmatprep.subr.bf16.mxu0 0
        %3535 = vmatpush1.bf16.msra.mxu0 0
        %3536 = vmatprep.subr.bf16.mxu0 0
        %3537 = vmatpush1.bf16.msra.mxu0 0
        %3538 = vmatprep.subr.bf16.mxu0 0
        %3539 = vmatpush1.bf16.msra.mxu0 0
        %3540 = vmatprep.subr.bf16.mxu0 0
        %3541 = vmatpush1.bf16.msra.mxu0 0
        %3542 = vmatprep.subr.bf16.mxu0 0
        %3543 = vmatpush1.bf16.msra.mxu0 0
        %3544 = vmatprep.subr.bf16.mxu0 0
        %3545 = vmatpush1.bf16.msra.mxu0 0
        %3546 = vmatprep.subr.bf16.mxu0 0
        %3547 = vmatpush1.bf16.msra.mxu0 0
        %3548 = vmatprep.subr.bf16.mxu0 0
        %3549 = vmatpush1.bf16.msra.mxu0 0
        %3550 = vmatprep.subr.bf16.mxu0 0
        %3551 = vmatpush1.bf16.msra.mxu0 0
        %3552 = vmatprep.subr.bf16.mxu0 0
        %3553 = vmatpush1.bf16.msra.mxu0 0
        %3554 = vmatprep.mubr.bf16.mxu0 0
        %3555 = vmatmul.mubr.bf16.gmra.mrb[0].mxu0 %v1384
        %v3556 = vpop.f32.mrb[0].mxu0
        %v3557 = vadd.f32 %v3484, %v3556
        %v3558 = vpop.f32.mrb[0].mxu0
        %v3559 = vadd.f32 %v3486, %v3558
        %v3560 = vpop.f32.mrb[0].mxu0
        %v3561 = vadd.f32 %v3488, %v3560
        %v3562 = vpop.f32.mrb[0].mxu0
        %v3563 = vadd.f32 %v3490, %v3562
        %3564 = vmatprep.mubr.bf16.mxu0 0
        %3565 = vmatmul.mubr.bf16.gmra.mrb[0].mxu0 %v1387
        %v3566 = vpop.f32.mrb[0].mxu0
        %v3567 = vadd.f32 %v3494, %v3566
        %v3568 = vpop.f32.mrb[0].mxu0
        %v3569 = vadd.f32 %v3496, %v3568
        %v3570 = vpop.f32.mrb[0].mxu0
        %v3571 = vadd.f32 %v3498, %v3570
        %v3572 = vpop.f32.mrb[0].mxu0
        %v3573 = vadd.f32 %v3500, %v3572
        %3574 = vmatprep.mubr.bf16.mxu0 0
        %3575 = vmatmul.mubr.bf16.gmra.mrb[0].mxu0 %v1390
        %v3576 = vpop.f32.mrb[0].mxu0
        %v3577 = vadd.f32 %v3504, %v3576
        %v3578 = vpop.f32.mrb[0].mxu0
        %v3579 = vadd.f32 %v3506, %v3578
        %v3580 = vpop.f32.mrb[0].mxu0
        %v3581 = vadd.f32 %v3508, %v3580
        %v3582 = vpop.f32.mrb[0].mxu0
        %v3583 = vadd.f32 %v3510, %v3582
        %3584 = vmatprep.mubr.bf16.mxu0 0
        %3585 = vmatmul.mubr.bf16.gmra.mrb[0].mxu0 %v1393
        %v3586 = vpop.f32.mrb[0].mxu0
        %v3587 = vadd.f32 %v3514, %v3586
        %v3588 = vpop.f32.mrb[0].mxu0
        %v3589 = vadd.f32 %v3516, %v3588
        %v3590 = vpop.f32.mrb[0].mxu0
        %v3591 = vadd.f32 %v3518, %v3590
        %v3592 = vpop.f32.mrb[0].mxu0
        %v3593 = vadd.f32 %v3520, %v3592
        %3594 = vdwg.mxu0
        %v3595 = vld [vmem:[%s391] sm:$0xff]
        %v3596 = vld [vmem:[%s391 + $0x8] sm:$0xff]
        %v3597 = vld [vmem:[%s391 + $0x10] sm:$0xff]
        %v3598 = vld [vmem:[%s391 + $0x18] sm:$0xff]
        %v3599 = vld [vmem:[%s391 + $0x20] sm:$0xff]
        %v3600 = vld [vmem:[%s391 + $0x28] sm:$0xff]
        %v3601 = vld [vmem:[%s391 + $0x30] sm:$0xff]
        %v3602 = vld [vmem:[%s391 + $0x38] sm:$0xff]
        %v3603 = vld [vmem:[%s391 + $0x40] sm:$0xff]
        %v3604 = vld [vmem:[%s391 + $0x48] sm:$0xff]
        %v3605 = vld [vmem:[%s391 + $0x50] sm:$0xff]
        %v3606 = vld [vmem:[%s391 + $0x58] sm:$0xff]
        %v3607 = vld [vmem:[%s391 + $0x60] sm:$0xff]
        %v3608 = vld [vmem:[%s391 + $0x68] sm:$0xff]
        %v3609 = vld [vmem:[%s391 + $0x70] sm:$0xff]
        %v3610 = vld [vmem:[%s391 + $0x78] sm:$0xff]
        %v3611 = vadd.f32 %v3557, %v3595
        %v3612 = vadd.f32 %v3559, %v3596
        %v3613 = vadd.f32 %v3561, %v3597
        %v3614 = vadd.f32 %v3563, %v3598
        %v3615 = vadd.f32 %v3567, %v3599
        %v3616 = vadd.f32 %v3569, %v3600
        %v3617 = vadd.f32 %v3571, %v3601
        %v3618 = vadd.f32 %v3573, %v3602
        %v3619 = vadd.f32 %v3577, %v3603
        %v3620 = vadd.f32 %v3579, %v3604
        %v3621 = vadd.f32 %v3581, %v3605
        %v3622 = vadd.f32 %v3583, %v3606
        %v3623 = vadd.f32 %v3587, %v3607
        %v3624 = vadd.f32 %v3589, %v3608
        %v3625 = vadd.f32 %v3591, %v3609
        %v3626 = vadd.f32 %v3593, %v3610
        %v3627 = vxor.u32 %v3611, 2147483648
        %v3628 = vxor.u32 %v3612, 2147483648
        %v3629 = vxor.u32 %v3613, 2147483648
        %v3630 = vxor.u32 %v3614, 2147483648
        %v3631 = vxor.u32 %v3615, 2147483648
        %v3632 = vxor.u32 %v3616, 2147483648
        %v3633 = vxor.u32 %v3617, 2147483648
        %v3634 = vxor.u32 %v3618, 2147483648
        %v3635 = vxor.u32 %v3619, 2147483648
        %v3636 = vxor.u32 %v3620, 2147483648
        %v3637 = vxor.u32 %v3621, 2147483648
        %v3638 = vxor.u32 %v3622, 2147483648
        %v3639 = vxor.u32 %v3623, 2147483648
        %v3640 = vxor.u32 %v3624, 2147483648
        %v3641 = vxor.u32 %v3625, 2147483648
        %v3642 = vxor.u32 %v3626, 2147483648
        %v3643 = vmul.f32 %v3627, 1.442695
        %v3644 = vpow.pop %v3643
        %v3645 = vmul.f32 %v3628, 1.442695
        %v3646 = vpow.pop %v3645
        %v3647 = vmul.f32 %v3629, 1.442695
        %v3648 = vpow.pop %v3647
        %v3649 = vmul.f32 %v3630, 1.442695
        %v3650 = vpow.pop %v3649
        %v3651 = vmul.f32 %v3631, 1.442695
        %v3652 = vpow.pop %v3651
        %v3653 = vmul.f32 %v3632, 1.442695
        %v3654 = vpow.pop %v3653
        %v3655 = vmul.f32 %v3633, 1.442695
        %v3656 = vpow.pop %v3655
        %v3657 = vmul.f32 %v3634, 1.442695
        %v3658 = vpow.pop %v3657
        %v3659 = vmul.f32 %v3635, 1.442695
        %v3660 = vpow.pop %v3659
        %v3661 = vmul.f32 %v3636, 1.442695
        %v3662 = vpow.pop %v3661
        %v3663 = vmul.f32 %v3637, 1.442695
        %v3664 = vpow.pop %v3663
        %v3665 = vmul.f32 %v3638, 1.442695
        %v3666 = vpow.pop %v3665
        %v3667 = vmul.f32 %v3639, 1.442695
        %v3668 = vpow.pop %v3667
        %v3669 = vmul.f32 %v3640, 1.442695
        %v3670 = vpow.pop %v3669
        %v3671 = vmul.f32 %v3641, 1.442695
        %v3672 = vpow.pop %v3671
        %v3673 = vmul.f32 %v3642, 1.442695
        %v3674 = vpow.pop %v3673
        %v3675 = vadd.f32 %v3644, 1.0
        %v3676 = vadd.f32 %v3646, 1.0
        %v3677 = vadd.f32 %v3648, 1.0
        %v3678 = vadd.f32 %v3650, 1.0
        %v3679 = vadd.f32 %v3652, 1.0
        %v3680 = vadd.f32 %v3654, 1.0
        %v3681 = vadd.f32 %v3656, 1.0
        %v3682 = vadd.f32 %v3658, 1.0
        %v3683 = vadd.f32 %v3660, 1.0
        %v3684 = vadd.f32 %v3662, 1.0
        %v3685 = vadd.f32 %v3664, 1.0
        %v3686 = vadd.f32 %v3666, 1.0
        %v3687 = vadd.f32 %v3668, 1.0
        %v3688 = vadd.f32 %v3670, 1.0
        %v3689 = vadd.f32 %v3672, 1.0
        %v3690 = vadd.f32 %v3674, 1.0
        %v3691 = vrcp.pop %v3675
        %v3692 = vmul.f32 1.0, %v3691
        %v3693 = vrcp.pop %v3676
        %v3694 = vmul.f32 1.0, %v3693
        %v3695 = vrcp.pop %v3677
        %v3696 = vmul.f32 1.0, %v3695
        %v3697 = vrcp.pop %v3678
        %v3698 = vmul.f32 1.0, %v3697
        %v3699 = vrcp.pop %v3679
        %v3700 = vmul.f32 1.0, %v3699
        %v3701 = vrcp.pop %v3680
        %v3702 = vmul.f32 1.0, %v3701
        %v3703 = vrcp.pop %v3681
        %v3704 = vmul.f32 1.0, %v3703
        %v3705 = vrcp.pop %v3682
        %v3706 = vmul.f32 1.0, %v3705
        %v3707 = vrcp.pop %v3683
        %v3708 = vmul.f32 1.0, %v3707
        %v3709 = vrcp.pop %v3684
        %v3710 = vmul.f32 1.0, %v3709
        %v3711 = vrcp.pop %v3685
        %v3712 = vmul.f32 1.0, %v3711
        %v3713 = vrcp.pop %v3686
        %v3714 = vmul.f32 1.0, %v3713
        %v3715 = vrcp.pop %v3687
        %v3716 = vmul.f32 1.0, %v3715
        %v3717 = vrcp.pop %v3688
        %v3718 = vmul.f32 1.0, %v3717
        %v3719 = vrcp.pop %v3689
        %v3720 = vmul.f32 1.0, %v3719
        %v3721 = vrcp.pop %v3690
        %v3722 = vmul.f32 1.0, %v3721
        %v3723 = vmul.f32 %v3611, %v3692
        %v3724 = vmul.f32 %v3612, %v3694
        %v3725 = vmul.f32 %v3613, %v3696
        %v3726 = vmul.f32 %v3614, %v3698
        %v3727 = vmul.f32 %v3615, %v3700
        %v3728 = vmul.f32 %v3616, %v3702
        %v3729 = vmul.f32 %v3617, %v3704
        %v3730 = vmul.f32 %v3618, %v3706
        %v3731 = vmul.f32 %v3619, %v3708
        %v3732 = vmul.f32 %v3620, %v3710
        %v3733 = vmul.f32 %v3621, %v3712
        %v3734 = vmul.f32 %v3622, %v3714
        %v3735 = vmul.f32 %v3623, %v3716
        %v3736 = vmul.f32 %v3624, %v3718
        %v3737 = vmul.f32 %v3625, %v3720
        %v3738 = vmul.f32 %v3626, %v3722
        %3739 = vst [vmem:[%s445] sm:$0xff] %v3723
        %3740 = vst [vmem:[%s445 + $0x8] sm:$0xff] %v3724
        %3741 = vst [vmem:[%s445 + $0x10] sm:$0xff] %v3725
        %3742 = vst [vmem:[%s445 + $0x18] sm:$0xff] %v3726
        %3743 = vst [vmem:[%s445 + $0x20] sm:$0xff] %v3727
        %3744 = vst [vmem:[%s445 + $0x28] sm:$0xff] %v3728
        %3745 = vst [vmem:[%s445 + $0x30] sm:$0xff] %v3729
        %3746 = vst [vmem:[%s445 + $0x38] sm:$0xff] %v3730
        %3747 = vst [vmem:[%s445 + $0x40] sm:$0xff] %v3731
        %3748 = vst [vmem:[%s445 + $0x48] sm:$0xff] %v3732
        %3749 = vst [vmem:[%s445 + $0x50] sm:$0xff] %v3733
        %3750 = vst [vmem:[%s445 + $0x58] sm:$0xff] %v3734
        %3751 = vst [vmem:[%s445 + $0x60] sm:$0xff] %v3735
        %3752 = vst [vmem:[%s445 + $0x68] sm:$0xff] %v3736
        %3753 = vst [vmem:[%s445 + $0x70] sm:$0xff] %v3737
        %3754 = vst [vmem:[%s445 + $0x78] sm:$0xff] %v3738
        %s3755 = sand.u32 %s203, 1
        %s3756 = scalar_lea.sflag [#allocation6], %s3755
        %s3757 = sand.u32 %s203, 1
        %s3758 = smul.addr %s3757, 128
        %s3759 = scalar_lea.vmem [#allocation10], %s3758
        %s3760 = sand.u32 %s33, 1
        %s3761 = scalar_lea.sflag [#allocation12], %s3760
        %s3762 = sand.u32 %s229, 1
        %s3763 = smul.addr %s3762, 128
        %s3764 = scalar_lea.vmem [#allocation11], %s3763
        %s3765 = sand.u32 %s33, 1
        %s3766 = scalar_lea.sflag [#allocation12], %s3765
        %s3767 = sand.u32 %s255, 1
        %s3768 = smul.addr %s3767, 128
        %s3769 = scalar_lea.vmem [#allocation13], %s3768
        // Predicated region
        $region61: #{tpu_custom_call.1} parent=47 // pred_check
          %p3770 = pneg %p213
        $region62: #{tpu_custom_call.1} parent=47 // pred_check_branch
          %3772 = sbr.rel (%p3770) target = $region64
        $region63: #{tpu_custom_call.1} parent=47 // pred_region
          %s3773 = smul.u32 2, %s33
          %s3775 = ssub.s32 2048, 2048
          %3776 = vsyncadd %s3756, %s3775
          %s3777 = smul.addr %s3773, 128
          %s3778 = scalar_lea.hbm %s7, %s3777
          %s3779 = sshll.u32 %s3759, 4
          %s3780 = int_to_ptr.vmem [resolvable:$true] %s3779
          %3785 = dma.vmem_to_hbm [thread:$0]  %s3780, 2048, %s3778, %s3756, 256, 1024, 16
        $region64: #{tpu_custom_call.1} parent=47 // pred_fallthru
          _
        // Predicated region
        $region65: #{tpu_custom_call.1} parent=47 // pred_check
          %p3786 = pneg %p239
        $region66: #{tpu_custom_call.1} parent=47 // pred_check_branch
          %3788 = sbr.rel (%p3786) target = $region68
        $region67: #{tpu_custom_call.1} parent=47 // pred_region
          %s3789 = smul.u32 2, %s33
          %s3791 = ssub.s32 2048, 2048
          %3792 = vsyncadd %s3761, %s3791
          %s3793 = smul.addr %s3789, 128
          %s3794 = scalar_lea.hbm %s8, %s3793
          %s3795 = sshll.u32 %s3764, 4
          %s3796 = int_to_ptr.vmem [resolvable:$true] %s3795
          %3801 = dma.vmem_to_hbm [thread:$0]  %s3796, 2048, %s3794, %s3761, 256, 1024, 16
        $region68: #{tpu_custom_call.1} parent=47 // pred_fallthru
          _
        // Predicated region
        $region69: #{tpu_custom_call.1} parent=47 // pred_check
          %p3802 = pneg %p265
        $region70: #{tpu_custom_call.1} parent=47 // pred_check_branch
          %3804 = sbr.rel (%p3802) target = $region72
        $region71: #{tpu_custom_call.1} parent=47 // pred_region
          %s3805 = smul.u32 2, %s33
          %s3807 = ssub.s32 2048, 2048
          %3808 = vsyncadd %s3766, %s3807
          %s3809 = smul.addr %s3805, 128
          %s3810 = scalar_lea.hbm %s9, %s3809
          %s3811 = sshll.u32 %s3769, 4
          %s3812 = int_to_ptr.vmem [resolvable:$true] %s3811
          %3817 = dma.vmem_to_hbm [thread:$0]  %s3812, 2048, %s3810, %s3766, 256, 1024, 16
        $region72: #{tpu_custom_call.1} parent=47 // pred_fallthru
          _
      $region48: #{tpu_custom_call.1} parent=5 // pred_fallthru
        _
      %p3818 = scmp.le.s32.totalorder 2, %s28
      // Predicated region
      $region73: #{tpu_custom_call.1} parent=5 // pred_check
        %p3819 = pneg %p3818
      $region74: #{tpu_custom_call.1} parent=5 // pred_check_branch
        %3821 = sbr.rel (%p3819) target = $region76
      $region75: #{tpu_custom_call.1} parent=5 // pred_region
        %s3822 = ssub.s32 %s28, 2
        // Predicated region
        $region77: #{tpu_custom_call.1} parent=75 // pred_check
          %p3823 = pneg %p219
        $region78: #{tpu_custom_call.1} parent=75 // pred_check_branch
          %3825 = sbr.rel (%p3823) target = $region80
        $region79: #{tpu_custom_call.1} parent=75 // pred_region
          %s3826 = sand.u32 %s204, 1
          %s3827 = scalar_lea.sflag [#allocation6], %s3826
          %s3828 = sand.u32 %s204, 1
          %s3829 = smul.addr %s3828, 128
          %s3830 = scalar_lea.vmem [#allocation10], %s3829
          %3831 = dma.done %s3827, 2048
        $region80: #{tpu_custom_call.1} parent=75 // pred_fallthru
          _
        // Predicated region
        $region81: #{tpu_custom_call.1} parent=75 // pred_check
          %p3832 = pneg %p245
        $region82: #{tpu_custom_call.1} parent=75 // pred_check_branch
          %3834 = sbr.rel (%p3832) target = $region84
        $region83: #{tpu_custom_call.1} parent=75 // pred_region
          %s3835 = sand.u32 %s34, 1
          %s3836 = scalar_lea.sflag [#allocation12], %s3835
          %s3837 = sand.u32 %s230, 1
          %s3838 = smul.addr %s3837, 128
          %s3839 = scalar_lea.vmem [#allocation11], %s3838
          %3840 = dma.done %s3836, 2048
        $region84: #{tpu_custom_call.1} parent=75 // pred_fallthru
          _
        // Predicated region
        $region85: #{tpu_custom_call.1} parent=75 // pred_check
          %p3841 = pneg %p271
        $region86: #{tpu_custom_call.1} parent=75 // pred_check_branch
          %3843 = sbr.rel (%p3841) target = $region88
        $region87: #{tpu_custom_call.1} parent=75 // pred_region
          %s3844 = sand.u32 %s34, 1
          %s3845 = scalar_lea.sflag [#allocation12], %s3844
          %s3846 = sand.u32 %s256, 1
          %s3847 = smul.addr %s3846, 128
          %s3848 = scalar_lea.vmem [#allocation13], %s3847
          %3849 = dma.done %s3845, 2048
        $region88: #{tpu_custom_call.1} parent=75 // pred_fallthru
          _
      $region76: #{tpu_custom_call.1} parent=5 // pred_fallthru
        _
    $region6: #{tpu_custom_call.1} parent=1 // loop_footer
      %s32 = sadd.s32 1, %s28
    $region7: #{tpu_custom_call.1} parent=1 // loop_footer_branch
      %27 = sbr.rel target = $region3
    $region8: #{tpu_custom_call.1} parent=1 // loop_exit
      _
    %3850 = vsyncpa [#allocation5], 1
    %s3851 = scalar_lea.sflag [#allocation5], 1
    %3852 = vsyncpa %s3851, 1
    %3853 = vsyncpa [#allocation8], 1
    %s3854 = scalar_lea.sflag [#allocation8], 1
    %3855 = vsyncpa %s3854, 1
    %3856 = vsyncpa [#allocation6], 1
    %s3857 = scalar_lea.sflag [#allocation6], 1
    %3858 = vsyncpa %s3857, 1
    %3859 = vsyncpa [#allocation12], 1
    %s3860 = scalar_lea.sflag [#allocation12], 1
    %3861 = vsyncpa %s3860, 1

</llo_original>
